<compile_context>
chip_gen: v5e
topology: v5e:2x2
jax: 0.10.0
libtpu: 0.0.40
codegen_flags: <defaults>
</compile_context>

<pallas_src>
import functools

import jax
import jax.numpy as jnp
from jax import lax
from jax.experimental import pallas as pl
from jax.experimental.pallas import tpu as pltpu

LANE = 128    # head output padded to a full lane width (unmasked vst)
GROUP = 8     # images packed per grid step -> one (8, 128) output tile

# bf16 operands are the v6e/v7x MXU-peak switch (accumulation stays f32).
# Kept f32 here so the 1e-4 check against the f32 reference holds exactly.
COMPUTE_DTYPE = jnp.float32


# ----------------------------------------------------------------------------
# Fused kernel: per grid step, GROUP images ->
#   im2col (VMEM) -> one conv matmul -> bias+ReLU -> masked mean-pool (MXU)
#   -> linear head -> dense (GROUP, 128) logits tile.
# ----------------------------------------------------------------------------
def _fused_backbone_kernel(xp_ref, w_ref, bconv_ref, scale_ref, wfc_ref,
                           bfc_ref, o_ref, rhs_ref, poolT_ref,
                           *, G, C, Cmid, H, W, Wp, L):
    w_t = w_ref[...]          # (Cmid, 9*C)  normalization-folded conv weights
    b_col = bconv_ref[...]    # (Cmid, 1)    folded conv bias (broadcast on lanes)
    scale = scale_ref[...]    # (1, L)       1/(H*W) on real pixels, 0 on junk lanes

    for g in range(G):                       # static unroll over packed images
        xg = xp_ref[g]                       # (C, Hp*Wp) mean-padded, channels-first
        # im2col RHS: 9 contiguous lane windows of the flat padded image,
        # stacked along sublanes in a VMEM scratch -> (9*C, L).
        for k in range(9):
            dy, dx = k // 3, k % 3
            off = dy * Wp + dx
            rhs_ref[pl.ds(k * C, C), :] = xg[:, off:off + L]
        # One fused conv matmul per image (lane-dense result).
        y = jnp.dot(w_t, rhs_ref[...],
                    preferred_element_type=jnp.float32)       # (Cmid, L)
        y = jnp.maximum(y + b_col, 0.0)                        # bias + ReLU
        # Masked global-average pool as an MXU mat-vec; result is already a
        # (1, Cmid) row, so no transpose of the conv result is ever needed.
        row = lax.dot_general(scale, y, (((1,), (1,)), ((), ())),
                              preferred_element_type=jnp.float32)
        poolT_ref[pl.ds(g, 1), :] = row                        # (G, Cmid) rows

    # Linear head for the whole group: (G, Cmid) @ (Cmid, LANE) + bias.
    logits = jnp.dot(poolT_ref[...], wfc_ref[...],
                     preferred_element_type=jnp.float32) + bfc_ref[...]
    o_ref[...] = logits.astype(o_ref.dtype)                    # dense (G, 128) store


def fused_backbone(xp, w_t, b_col, pool_scale, wfc, bfc, *, H, W):
    N_pad, C, HpWp = xp.shape
    Cmid = w_t.shape[0]
    Wp = W + 2
    L = (H - 1) * Wp + W            # window length; keeps every tap slice in-bounds
    G = GROUP
    assert N_pad % G == 0
    kernel = functools.partial(_fused_backbone_kernel, G=G, C=C, Cmid=Cmid,
                               H=H, W=W, Wp=Wp, L=L)
    return pl.pallas_call(
        kernel,
        out_shape=jax.ShapeDtypeStruct((N_pad, LANE), jnp.float32),
        grid_spec=pltpu.PrefetchScalarGridSpec(
            num_scalar_prefetch=0,
            grid=(N_pad // G,),
            in_specs=[
                pl.BlockSpec((G, C, HpWp), lambda b: (b, 0, 0)),   # images
                pl.BlockSpec((Cmid, 9 * C), lambda b: (0, 0)),     # conv weights
                pl.BlockSpec((Cmid, 1), lambda b: (0, 0)),         # conv bias
                pl.BlockSpec((1, L), lambda b: (0, 0)),            # pool mask/scale
                pl.BlockSpec((Cmid, LANE), lambda b: (0, 0)),      # head weights
                pl.BlockSpec((1, LANE), lambda b: (0, 0)),         # head bias
            ],
            out_specs=pl.BlockSpec((G, LANE), lambda b: (b, 0)),
            scratch_shapes=[
                pltpu.VMEM((9 * C, L), xp.dtype),     # im2col RHS
                pltpu.VMEM((G, Cmid), jnp.float32),   # pooled rows
            ],
        ),
        compiler_params=pltpu.CompilerParams(
            dimension_semantics=("parallel",)),
    )(xp, w_t, b_col, pool_scale, wfc, bfc)


# ----------------------------------------------------------------------------
# Backbone wrapper (eval mode):  backbone(eval_transform(x))
# ----------------------------------------------------------------------------
@jax.jit
def backbone_forward(x_nchw, params):
    mean, std, w_hwio, b_conv, w_fc, b_fc = (
        params["mean"], params["std"], params["w_conv"],
        params["b_conv"], params["w_fc"], params["b_fc"],
    )
    N, C, H, W = x_nchw.shape
    Hp, Wp = H + 2, W + 2
    Cmid = w_hwio.shape[-1]
    Cout = w_fc.shape[-1]
    G = GROUP
    N_pad = ((N + G - 1) // G) * G
    L = (H - 1) * Wp + W

    mean_c = mean.reshape(C)
    inv_std = 1.0 / std.reshape(C)

    # --- fold eval_transform (affine per-channel norm) into the conv ---
    #   conv((x-mean)/std) + b  ==  conv(x) @ (w/std) + (b - sum w*mean/std)
    w_scaled = w_hwio * inv_std[None, None, :, None]            # (3,3,C,Cmid)
    w_fold_t = jnp.transpose(w_scaled.reshape(9 * C, Cmid))     # (Cmid, 9*C)
    b_fold = b_conv.reshape(Cmid) - jnp.sum(
        w_hwio * (mean_c * inv_std)[None, None, :, None], axis=(0, 1, 2))
    b_fold_col = b_fold.reshape(Cmid, 1)

    # Channels-first mean-padded canvas (single fused pad, no NHWC transpose);
    # mean padding + folded weights == zero padding of the normalized tensor.
    canvas = jnp.broadcast_to(mean_c.reshape(1, C, 1, 1), (N_pad, C, Hp, Wp))
    canvas = canvas.astype(x_nchw.dtype)
    xp = lax.dynamic_update_slice(canvas, x_nchw, (0, 0, 1, 1))
    xp = xp.reshape(N_pad, C, Hp * Wp).astype(COMPUTE_DTYPE)

    # Pooling vector: 1/(H*W) on real pixels, 0 on the (Wp - W) junk lanes of
    # each flattened conv window; folds the average into the pooling mat-vec.
    col = jnp.arange(L, dtype=jnp.int32) % Wp
    pool_scale = jnp.where(col < W, 1.0 / (H * W), 0.0).reshape(1, L)
    pool_scale = pool_scale.astype(jnp.float32)

    # Lane-dense head weights: Cout padded to 128 lanes.
    wfc_pad = jnp.zeros((Cmid, LANE), jnp.float32).at[:, :Cout].set(w_fc)
    bfc_pad = jnp.zeros((1, LANE), jnp.float32).at[:, :Cout].set(
        b_fc.reshape(1, Cout))

    out = fused_backbone(xp, w_fold_t.astype(COMPUTE_DTYPE), b_fold_col,
                         pool_scale, wfc_pad, bfc_pad, H=H, W=W)
    return out[:N, :Cout]


def reference_forward(x_nchw, params):
    """Pure-JAX reference mirroring the PyTorch forward (eval mode)."""
    mean, std, w_hwio, b_conv, w_fc, b_fc = (
        params["mean"], params["std"], params["w_conv"],
        params["b_conv"], params["w_fc"], params["b_fc"],
    )
    x = jnp.transpose(x_nchw, (0, 2, 3, 1))                  # NHWC
    xn = (x - mean[0]) / std[0]                              # eval_transform
    y = lax.conv_general_dilated(
        xn, w_hwio, window_strides=(1, 1), padding="SAME",
        dimension_numbers=("NHWC", "HWIO", "NHWC"),
    )
    y = jnp.maximum(y + b_conv[0], 0.0)                      # conv + ReLU
    pooled = y.mean(axis=(1, 2))                             # global avg pool
    return pooled @ w_fc + b_fc[0]                           # linear head


if __name__ == "__main__":
    # Small shapes implied by the forward: image batch, NCHW.
    N, C, H, W = 2, 4, 16, 16
    Cmid, Cout = 16, 8

    key = jax.random.PRNGKey(0)
    kx, kw1, kb1, kw2, kb2 = jax.random.split(key, 5)

    x = jax.random.normal(kx, (N, C, H, W), dtype=jnp.float32)

    params = {
        # eval_transform parameters (per-channel normalization)
        "mean": jnp.array([[0.1, 0.2, 0.3, 0.4]], dtype=jnp.float32),   # (1, C)
        "std": jnp.array([[0.5, 0.6, 0.7, 0.8]], dtype=jnp.float32),    # (1, C)
        # conv weight in HWIO layout (3, 3, C, Cmid)
        "w_conv": 0.1 * jax.random.normal(kw1, (3, 3, C, Cmid), jnp.float32),
        "b_conv": 0.01 * jax.random.normal(kb1, (1, Cmid), jnp.float32),
        # linear head (Cmid -> Cout)
        "w_fc": 0.1 * jax.random.normal(kw2, (Cmid, Cout), jnp.float32),
        "b_fc": 0.01 * jax.random.normal(kb2, (1, Cout), jnp.float32),
    }

    out = jax.block_until_ready(backbone_forward(x, params))
    ref = jax.block_until_ready(reference_forward(x, params))

    assert out.shape == (N, Cout), out.shape
    assert jnp.allclose(out, ref, atol=1e-4, rtol=1e-4), (
        float(jnp.max(jnp.abs(out - ref)))
    )
    # TODO(synk): torch.jit.script of the transforms and the training-mode
    # branch (train_transform) are host-side control flow with no Pallas
    # analogue; jax.jit on the eval-mode wrapper serves the same purpose.
    print("KERNEL_OK")
</pallas_src>

<mosaic_0001>
module attributes {stable_mosaic.version = 11 : i64} {
  func.func @_fused_backbone_kernel(%arg0: i32, %arg1: memref<8x4x324xf32, #tpu.memory_space<vmem>>, %arg2: memref<16x36xf32, #tpu.memory_space<vmem>>, %arg3: memref<16x1xf32, #tpu.memory_space<vmem>>, %arg4: memref<1x286xf32, #tpu.memory_space<vmem>>, %arg5: memref<16x128xf32, #tpu.memory_space<vmem>>, %arg6: memref<1x128xf32, #tpu.memory_space<vmem>>, %arg7: memref<8x128xf32, #tpu.memory_space<vmem>>, %arg8: memref<36x286xf32, #tpu.memory_space<vmem>>, %arg9: memref<8x16xf32, #tpu.memory_space<vmem>>) attributes {dimension_semantics = [#tpu.dimension_semantics<parallel>], iteration_bounds = array<i64: 1>, scalar_prefetch = 0 : i64, scratch_operands = 2 : i64, tpu.core_type = #tpu.core_type<tc>, window_params = [{transform_indices = @transform_0, window_bounds = array<i64: 8, 4, 324>}, {pipeline_mode = #tpu.pipeline_mode<synchronous>, transform_indices = @transform_1, window_bounds = array<i64: 16, 36>}, {pipeline_mode = #tpu.pipeline_mode<synchronous>, transform_indices = @transform_2, window_bounds = array<i64: 16, 1>}, {pipeline_mode = #tpu.pipeline_mode<synchronous>, transform_indices = @transform_3, window_bounds = array<i64: 1, 286>}, {pipeline_mode = #tpu.pipeline_mode<synchronous>, transform_indices = @transform_4, window_bounds = array<i64: 16, 128>}, {pipeline_mode = #tpu.pipeline_mode<synchronous>, transform_indices = @transform_5, window_bounds = array<i64: 1, 128>}, {transform_indices = @transform_6, window_bounds = array<i64: 8, 128>}]} {
    %c0 = arith.constant 0 : index
    %c0_0 = arith.constant 0 : index
    %0 = vector.load %arg2[%c0, %c0_0] : memref<16x36xf32, #tpu.memory_space<vmem>>, vector<16x36xf32>
    %c0_1 = arith.constant 0 : index
    %c0_2 = arith.constant 0 : index
    %1 = vector.load %arg3[%c0_1, %c0_2] : memref<16x1xf32, #tpu.memory_space<vmem>>, vector<16x1xf32>
    %c0_3 = arith.constant 0 : index
    %c0_4 = arith.constant 0 : index
    %2 = vector.load %arg4[%c0_3, %c0_4] : memref<1x286xf32, #tpu.memory_space<vmem>>, vector<1x286xf32>
    %c0_5 = arith.constant 0 : index
    %c0_6 = arith.constant 0 : index
    %c0_7 = arith.constant 0 : index
    %3 = vector.load %arg1[%c0_5, %c0_6, %c0_7] : memref<8x4x324xf32, #tpu.memory_space<vmem>>, vector<1x4x324xf32>
    %4 = vector.shape_cast %3 : vector<1x4x324xf32> to vector<4x324xf32>
    %5 = vector.extract_strided_slice %4 {offsets = [0, 0], sizes = [4, 286], strides = [1, 1]} : vector<4x324xf32> to vector<4x286xf32>
    %c0_8 = arith.constant 0 : index
    %c0_9 = arith.constant 0 : index
    %6 = vector.load %arg8[%c0_8, %c0_9] : memref<36x286xf32, #tpu.memory_space<vmem>>, vector<4x286xf32>
    tpu.vector_store %arg8[%c0_8, %c0_9], %5 {strides = array<i32>} : memref<36x286xf32, #tpu.memory_space<vmem>>, vector<4x286xf32>,
    %7 = vector.extract_strided_slice %4 {offsets = [0, 1], sizes = [4, 286], strides = [1, 1]} : vector<4x324xf32> to vector<4x286xf32>
    %c4 = arith.constant 4 : index
    %c0_10 = arith.constant 0 : index
    %8 = vector.load %arg8[%c4, %c0_10] : memref<36x286xf32, #tpu.memory_space<vmem>>, vector<4x286xf32>
    tpu.vector_store %arg8[%c4, %c0_10], %7 {strides = array<i32>} : memref<36x286xf32, #tpu.memory_space<vmem>>, vector<4x286xf32>,
    %9 = vector.extract_strided_slice %4 {offsets = [0, 2], sizes = [4, 286], strides = [1, 1]} : vector<4x324xf32> to vector<4x286xf32>
    %c8 = arith.constant 8 : index
    %c0_11 = arith.constant 0 : index
    %10 = vector.load %arg8[%c8, %c0_11] : memref<36x286xf32, #tpu.memory_space<vmem>>, vector<4x286xf32>
    tpu.vector_store %arg8[%c8, %c0_11], %9 {strides = array<i32>} : memref<36x286xf32, #tpu.memory_space<vmem>>, vector<4x286xf32>,
    %11 = vector.extract_strided_slice %4 {offsets = [0, 18], sizes = [4, 286], strides = [1, 1]} : vector<4x324xf32> to vector<4x286xf32>
    %c12 = arith.constant 12 : index
    %c0_12 = arith.constant 0 : index
    %12 = vector.load %arg8[%c12, %c0_12] : memref<36x286xf32, #tpu.memory_space<vmem>>, vector<4x286xf32>
    tpu.vector_store %arg8[%c12, %c0_12], %11 {strides = array<i32>} : memref<36x286xf32, #tpu.memory_space<vmem>>, vector<4x286xf32>,
    %13 = vector.extract_strided_slice %4 {offsets = [0, 19], sizes = [4, 286], strides = [1, 1]} : vector<4x324xf32> to vector<4x286xf32>
    %c16 = arith.constant 16 : index
    %c0_13 = arith.constant 0 : index
    %14 = vector.load %arg8[%c16, %c0_13] : memref<36x286xf32, #tpu.memory_space<vmem>>, vector<4x286xf32>
    tpu.vector_store %arg8[%c16, %c0_13], %13 {strides = array<i32>} : memref<36x286xf32, #tpu.memory_space<vmem>>, vector<4x286xf32>,
    %15 = vector.extract_strided_slice %4 {offsets = [0, 20], sizes = [4, 286], strides = [1, 1]} : vector<4x324xf32> to vector<4x286xf32>
    %c20 = arith.constant 20 : index
    %c0_14 = arith.constant 0 : index
    %16 = vector.load %arg8[%c20, %c0_14] : memref<36x286xf32, #tpu.memory_space<vmem>>, vector<4x286xf32>
    tpu.vector_store %arg8[%c20, %c0_14], %15 {strides = array<i32>} : memref<36x286xf32, #tpu.memory_space<vmem>>, vector<4x286xf32>,
    %17 = vector.extract_strided_slice %4 {offsets = [0, 36], sizes = [4, 286], strides = [1, 1]} : vector<4x324xf32> to vector<4x286xf32>
    %c24 = arith.constant 24 : index
    %c0_15 = arith.constant 0 : index
    %18 = vector.load %arg8[%c24, %c0_15] : memref<36x286xf32, #tpu.memory_space<vmem>>, vector<4x286xf32>
    tpu.vector_store %arg8[%c24, %c0_15], %17 {strides = array<i32>} : memref<36x286xf32, #tpu.memory_space<vmem>>, vector<4x286xf32>,
    %19 = vector.extract_strided_slice %4 {offsets = [0, 37], sizes = [4, 286], strides = [1, 1]} : vector<4x324xf32> to vector<4x286xf32>
    %c28 = arith.constant 28 : index
    %c0_16 = arith.constant 0 : index
    %20 = vector.load %arg8[%c28, %c0_16] : memref<36x286xf32, #tpu.memory_space<vmem>>, vector<4x286xf32>
    tpu.vector_store %arg8[%c28, %c0_16], %19 {strides = array<i32>} : memref<36x286xf32, #tpu.memory_space<vmem>>, vector<4x286xf32>,
    %21 = vector.extract_strided_slice %4 {offsets = [0, 38], sizes = [4, 286], strides = [1, 1]} : vector<4x324xf32> to vector<4x286xf32>
    %c32 = arith.constant 32 : index
    %c0_17 = arith.constant 0 : index
    %22 = vector.load %arg8[%c32, %c0_17] : memref<36x286xf32, #tpu.memory_space<vmem>>, vector<4x286xf32>
    tpu.vector_store %arg8[%c32, %c0_17], %21 {strides = array<i32>} : memref<36x286xf32, #tpu.memory_space<vmem>>, vector<4x286xf32>,
    %c0_18 = arith.constant 0 : index
    %c0_19 = arith.constant 0 : index
    %23 = vector.load %arg8[%c0_18, %c0_19] : memref<36x286xf32, #tpu.memory_space<vmem>>, vector<36x286xf32>
    %cst = arith.constant dense<0.000000e+00> : vector<16x286xf32>
    %24 = tpu.matmul %0, %23, %cst {dimension_numbers = #tpu.dot_dimension_numbers<[1], [0], [0], [1], [0, 0, 1, 1], [], []>} : vector<16x36xf32>, vector<36x286xf32>, vector<16x286xf32> -> vector<16x286xf32>
    %25 = vector.broadcast %1 : vector<16x1xf32> to vector<16x286xf32>
    %26 = arith.addf %24, %25 : vector<16x286xf32>
    %cst_20 = arith.constant 0.000000e+00 : f32
    %27 = vector.broadcast %cst_20 : f32 to vector<16x286xf32>
    %28 = arith.maximumf %26, %27 : vector<16x286xf32>
    %cst_21 = arith.constant dense<0.000000e+00> : vector<1x16xf32>
    %29 = tpu.matmul %2, %28, %cst_21 {dimension_numbers = #tpu.dot_dimension_numbers<[1], [1], [0], [0], [0, 0, 1, 0], [], []>} : vector<1x286xf32>, vector<16x286xf32>, vector<1x16xf32> -> vector<1x16xf32>
    %c0_22 = arith.constant 0 : index
    %c0_23 = arith.constant 0 : index
    %30 = vector.load %arg9[%c0_22, %c0_23] : memref<8x16xf32, #tpu.memory_space<vmem>>, vector<1x16xf32>
    tpu.vector_store %arg9[%c0_22, %c0_23], %29 {strides = array<i32>} : memref<8x16xf32, #tpu.memory_space<vmem>>, vector<1x16xf32>,
    %c1 = arith.constant 1 : index
    %c0_24 = arith.constant 0 : index
    %c0_25 = arith.constant 0 : index
    %31 = vector.load %arg1[%c1, %c0_24, %c0_25] : memref<8x4x324xf32, #tpu.memory_space<vmem>>, vector<1x4x324xf32>
    %32 = vector.shape_cast %31 : vector<1x4x324xf32> to vector<4x324xf32>
    %33 = vector.extract_strided_slice %32 {offsets = [0, 0], sizes = [4, 286], strides = [1, 1]} : vector<4x324xf32> to vector<4x286xf32>
    %c0_26 = arith.constant 0 : index
    %c0_27 = arith.constant 0 : index
    %34 = vector.load %arg8[%c0_26, %c0_27] : memref<36x286xf32, #tpu.memory_space<vmem>>, vector<4x286xf32>
    tpu.vector_store %arg8[%c0_26, %c0_27], %33 {strides = array<i32>} : memref<36x286xf32, #tpu.memory_space<vmem>>, vector<4x286xf32>,
    %35 = vector.extract_strided_slice %32 {offsets = [0, 1], sizes = [4, 286], strides = [1, 1]} : vector<4x324xf32> to vector<4x286xf32>
    %c4_28 = arith.constant 4 : index
    %c0_29 = arith.constant 0 : index
    %36 = vector.load %arg8[%c4_28, %c0_29] : memref<36x286xf32, #tpu.memory_space<vmem>>, vector<4x286xf32>
    tpu.vector_store %arg8[%c4_28, %c0_29], %35 {strides = array<i32>} : memref<36x286xf32, #tpu.memory_space<vmem>>, vector<4x286xf32>,
    %37 = vector.extract_strided_slice %32 {offsets = [0, 2], sizes = [4, 286], strides = [1, 1]} : vector<4x324xf32> to vector<4x286xf32>
    %c8_30 = arith.constant 8 : index
    %c0_31 = arith.constant 0 : index
    %38 = vector.load %arg8[%c8_30, %c0_31] : memref<36x286xf32, #tpu.memory_space<vmem>>, vector<4x286xf32>
    tpu.vector_store %arg8[%c8_30, %c0_31], %37 {strides = array<i32>} : memref<36x286xf32, #tpu.memory_space<vmem>>, vector<4x286xf32>,
    %39 = vector.extract_strided_slice %32 {offsets = [0, 18], sizes = [4, 286], strides = [1, 1]} : vector<4x324xf32> to vector<4x286xf32>
    %c12_32 = arith.constant 12 : index
    %c0_33 = arith.constant 0 : index
    %40 = vector.load %arg8[%c12_32, %c0_33] : memref<36x286xf32, #tpu.memory_space<vmem>>, vector<4x286xf32>
    tpu.vector_store %arg8[%c12_32, %c0_33], %39 {strides = array<i32>} : memref<36x286xf32, #tpu.memory_space<vmem>>, vector<4x286xf32>,
    %41 = vector.extract_strided_slice %32 {offsets = [0, 19], sizes = [4, 286], strides = [1, 1]} : vector<4x324xf32> to vector<4x286xf32>
    %c16_34 = arith.constant 16 : index
    %c0_35 = arith.constant 0 : index
    %42 = vector.load %arg8[%c16_34, %c0_35] : memref<36x286xf32, #tpu.memory_space<vmem>>, vector<4x286xf32>
    tpu.vector_store %arg8[%c16_34, %c0_35], %41 {strides = array<i32>} : memref<36x286xf32, #tpu.memory_space<vmem>>, vector<4x286xf32>,
    %43 = vector.extract_strided_slice %32 {offsets = [0, 20], sizes = [4, 286], strides = [1, 1]} : vector<4x324xf32> to vector<4x286xf32>
    %c20_36 = arith.constant 20 : index
    %c0_37 = arith.constant 0 : index
    %44 = vector.load %arg8[%c20_36, %c0_37] : memref<36x286xf32, #tpu.memory_space<vmem>>, vector<4x286xf32>
    tpu.vector_store %arg8[%c20_36, %c0_37], %43 {strides = array<i32>} : memref<36x286xf32, #tpu.memory_space<vmem>>, vector<4x286xf32>,
    %45 = vector.extract_strided_slice %32 {offsets = [0, 36], sizes = [4, 286], strides = [1, 1]} : vector<4x324xf32> to vector<4x286xf32>
    %c24_38 = arith.constant 24 : index
    %c0_39 = arith.constant 0 : index
    %46 = vector.load %arg8[%c24_38, %c0_39] : memref<36x286xf32, #tpu.memory_space<vmem>>, vector<4x286xf32>
    tpu.vector_store %arg8[%c24_38, %c0_39], %45 {strides = array<i32>} : memref<36x286xf32, #tpu.memory_space<vmem>>, vector<4x286xf32>,
    %47 = vector.extract_strided_slice %32 {offsets = [0, 37], sizes = [4, 286], strides = [1, 1]} : vector<4x324xf32> to vector<4x286xf32>
    %c28_40 = arith.constant 28 : index
    %c0_41 = arith.constant 0 : index
    %48 = vector.load %arg8[%c28_40, %c0_41] : memref<36x286xf32, #tpu.memory_space<vmem>>, vector<4x286xf32>
    tpu.vector_store %arg8[%c28_40, %c0_41], %47 {strides = array<i32>} : memref<36x286xf32, #tpu.memory_space<vmem>>, vector<4x286xf32>,
    %49 = vector.extract_strided_slice %32 {offsets = [0, 38], sizes = [4, 286], strides = [1, 1]} : vector<4x324xf32> to vector<4x286xf32>
    %c32_42 = arith.constant 32 : index
    %c0_43 = arith.constant 0 : index
    %50 = vector.load %arg8[%c32_42, %c0_43] : memref<36x286xf32, #tpu.memory_space<vmem>>, vector<4x286xf32>
    tpu.vector_store %arg8[%c32_42, %c0_43], %49 {strides = array<i32>} : memref<36x286xf32, #tpu.memory_space<vmem>>, vector<4x286xf32>,
    %c0_44 = arith.constant 0 : index
    %c0_45 = arith.constant 0 : index
    %51 = vector.load %arg8[%c0_44, %c0_45] : memref<36x286xf32, #tpu.memory_space<vmem>>, vector<36x286xf32>
    %cst_46 = arith.constant dense<0.000000e+00> : vector<16x286xf32>
    %52 = tpu.matmul %0, %51, %cst_46 {dimension_numbers = #tpu.dot_dimension_numbers<[1], [0], [0], [1], [0, 0, 1, 1], [], []>} : vector<16x36xf32>, vector<36x286xf32>, vector<16x286xf32> -> vector<16x286xf32>
    %53 = vector.broadcast %1 : vector<16x1xf32> to vector<16x286xf32>
    %54 = arith.addf %52, %53 : vector<16x286xf32>
    %cst_47 = arith.constant 0.000000e+00 : f32
    %55 = vector.broadcast %cst_47 : f32 to vector<16x286xf32>
    %56 = arith.maximumf %54, %55 : vector<16x286xf32>
    %cst_48 = arith.constant dense<0.000000e+00> : vector<1x16xf32>
    %57 = tpu.matmul %2, %56, %cst_48 {dimension_numbers = #tpu.dot_dimension_numbers<[1], [1], [0], [0], [0, 0, 1, 0], [], []>} : vector<1x286xf32>, vector<16x286xf32>, vector<1x16xf32> -> vector<1x16xf32>
    %c1_49 = arith.constant 1 : index
    %c0_50 = arith.constant 0 : index
    %58 = vector.load %arg9[%c1_49, %c0_50] : memref<8x16xf32, #tpu.memory_space<vmem>>, vector<1x16xf32>
    tpu.vector_store %arg9[%c1_49, %c0_50], %57 {strides = array<i32>} : memref<8x16xf32, #tpu.memory_space<vmem>>, vector<1x16xf32>,
    %c2 = arith.constant 2 : index
    %c0_51 = arith.constant 0 : index
    %c0_52 = arith.constant 0 : index
    %59 = vector.load %arg1[%c2, %c0_51, %c0_52] : memref<8x4x324xf32, #tpu.memory_space<vmem>>, vector<1x4x324xf32>
    %60 = vector.shape_cast %59 : vector<1x4x324xf32> to vector<4x324xf32>
    %61 = vector.extract_strided_slice %60 {offsets = [0, 0], sizes = [4, 286], strides = [1, 1]} : vector<4x324xf32> to vector<4x286xf32>
    %c0_53 = arith.constant 0 : index
    %c0_54 = arith.constant 0 : index
    %62 = vector.load %arg8[%c0_53, %c0_54] : memref<36x286xf32, #tpu.memory_space<vmem>>, vector<4x286xf32>
    tpu.vector_store %arg8[%c0_53, %c0_54], %61 {strides = array<i32>} : memref<36x286xf32, #tpu.memory_space<vmem>>, vector<4x286xf32>,
    %63 = vector.extract_strided_slice %60 {offsets = [0, 1], sizes = [4, 286], strides = [1, 1]} : vector<4x324xf32> to vector<4x286xf32>
    %c4_55 = arith.constant 4 : index
    %c0_56 = arith.constant 0 : index
    %64 = vector.load %arg8[%c4_55, %c0_56] : memref<36x286xf32, #tpu.memory_space<vmem>>, vector<4x286xf32>
    tpu.vector_store %arg8[%c4_55, %c0_56], %63 {strides = array<i32>} : memref<36x286xf32, #tpu.memory_space<vmem>>, vector<4x286xf32>,
    %65 = vector.extract_strided_slice %60 {offsets = [0, 2], sizes = [4, 286], strides = [1, 1]} : vector<4x324xf32> to vector<4x286xf32>
    %c8_57 = arith.constant 8 : index
    %c0_58 = arith.constant 0 : index
    %66 = vector.load %arg8[%c8_57, %c0_58] : memref<36x286xf32, #tpu.memory_space<vmem>>, vector<4x286xf32>
    tpu.vector_store %arg8[%c8_57, %c0_58], %65 {strides = array<i32>} : memref<36x286xf32, #tpu.memory_space<vmem>>, vector<4x286xf32>,
    %67 = vector.extract_strided_slice %60 {offsets = [0, 18], sizes = [4, 286], strides = [1, 1]} : vector<4x324xf32> to vector<4x286xf32>
    %c12_59 = arith.constant 12 : index
    %c0_60 = arith.constant 0 : index
    %68 = vector.load %arg8[%c12_59, %c0_60] : memref<36x286xf32, #tpu.memory_space<vmem>>, vector<4x286xf32>
    tpu.vector_store %arg8[%c12_59, %c0_60], %67 {strides = array<i32>} : memref<36x286xf32, #tpu.memory_space<vmem>>, vector<4x286xf32>,
    %69 = vector.extract_strided_slice %60 {offsets = [0, 19], sizes = [4, 286], strides = [1, 1]} : vector<4x324xf32> to vector<4x286xf32>
    %c16_61 = arith.constant 16 : index
    %c0_62 = arith.constant 0 : index
    %70 = vector.load %arg8[%c16_61, %c0_62] : memref<36x286xf32, #tpu.memory_space<vmem>>, vector<4x286xf32>
    tpu.vector_store %arg8[%c16_61, %c0_62], %69 {strides = array<i32>} : memref<36x286xf32, #tpu.memory_space<vmem>>, vector<4x286xf32>,
    %71 = vector.extract_strided_slice %60 {offsets = [0, 20], sizes = [4, 286], strides = [1, 1]} : vector<4x324xf32> to vector<4x286xf32>
    %c20_63 = arith.constant 20 : index
    %c0_64 = arith.constant 0 : index
    %72 = vector.load %arg8[%c20_63, %c0_64] : memref<36x286xf32, #tpu.memory_space<vmem>>, vector<4x286xf32>
    tpu.vector_store %arg8[%c20_63, %c0_64], %71 {strides = array<i32>} : memref<36x286xf32, #tpu.memory_space<vmem>>, vector<4x286xf32>,
    %73 = vector.extract_strided_slice %60 {offsets = [0, 36], sizes = [4, 286], strides = [1, 1]} : vector<4x324xf32> to vector<4x286xf32>
    %c24_65 = arith.constant 24 : index
    %c0_66 = arith.constant 0 : index
    %74 = vector.load %arg8[%c24_65, %c0_66] : memref<36x286xf32, #tpu.memory_space<vmem>>, vector<4x286xf32>
    tpu.vector_store %arg8[%c24_65, %c0_66], %73 {strides = array<i32>} : memref<36x286xf32, #tpu.memory_space<vmem>>, vector<4x286xf32>,
    %75 = vector.extract_strided_slice %60 {offsets = [0, 37], sizes = [4, 286], strides = [1, 1]} : vector<4x324xf32> to vector<4x286xf32>
    %c28_67 = arith.constant 28 : index
    %c0_68 = arith.constant 0 : index
    %76 = vector.load %arg8[%c28_67, %c0_68] : memref<36x286xf32, #tpu.memory_space<vmem>>, vector<4x286xf32>
    tpu.vector_store %arg8[%c28_67, %c0_68], %75 {strides = array<i32>} : memref<36x286xf32, #tpu.memory_space<vmem>>, vector<4x286xf32>,
    %77 = vector.extract_strided_slice %60 {offsets = [0, 38], sizes = [4, 286], strides = [1, 1]} : vector<4x324xf32> to vector<4x286xf32>
    %c32_69 = arith.constant 32 : index
    %c0_70 = arith.constant 0 : index
    %78 = vector.load %arg8[%c32_69, %c0_70] : memref<36x286xf32, #tpu.memory_space<vmem>>, vector<4x286xf32>
    tpu.vector_store %arg8[%c32_69, %c0_70], %77 {strides = array<i32>} : memref<36x286xf32, #tpu.memory_space<vmem>>, vector<4x286xf32>,
    %c0_71 = arith.constant 0 : index
    %c0_72 = arith.constant 0 : index
    %79 = vector.load %arg8[%c0_71, %c0_72] : memref<36x286xf32, #tpu.memory_space<vmem>>, vector<36x286xf32>
    %cst_73 = arith.constant dense<0.000000e+00> : vector<16x286xf32>
    %80 = tpu.matmul %0, %79, %cst_73 {dimension_numbers = #tpu.dot_dimension_numbers<[1], [0], [0], [1], [0, 0, 1, 1], [], []>} : vector<16x36xf32>, vector<36x286xf32>, vector<16x286xf32> -> vector<16x286xf32>
    %81 = vector.broadcast %1 : vector<16x1xf32> to vector<16x286xf32>
    %82 = arith.addf %80, %81 : vector<16x286xf32>
    %cst_74 = arith.constant 0.000000e+00 : f32
    %83 = vector.broadcast %cst_74 : f32 to vector<16x286xf32>
    %84 = arith.maximumf %82, %83 : vector<16x286xf32>
    %cst_75 = arith.constant dense<0.000000e+00> : vector<1x16xf32>
    %85 = tpu.matmul %2, %84, %cst_75 {dimension_numbers = #tpu.dot_dimension_numbers<[1], [1], [0], [0], [0, 0, 1, 0], [], []>} : vector<1x286xf32>, vector<16x286xf32>, vector<1x16xf32> -> vector<1x16xf32>
    %c2_76 = arith.constant 2 : index
    %c0_77 = arith.constant 0 : index
    %86 = vector.load %arg9[%c2_76, %c0_77] : memref<8x16xf32, #tpu.memory_space<vmem>>, vector<1x16xf32>
    tpu.vector_store %arg9[%c2_76, %c0_77], %85 {strides = array<i32>} : memref<8x16xf32, #tpu.memory_space<vmem>>, vector<1x16xf32>,
    %c3 = arith.constant 3 : index
    %c0_78 = arith.constant 0 : index
    %c0_79 = arith.constant 0 : index
    %87 = vector.load %arg1[%c3, %c0_78, %c0_79] : memref<8x4x324xf32, #tpu.memory_space<vmem>>, vector<1x4x324xf32>
    %88 = vector.shape_cast %87 : vector<1x4x324xf32> to vector<4x324xf32>
    %89 = vector.extract_strided_slice %88 {offsets = [0, 0], sizes = [4, 286], strides = [1, 1]} : vector<4x324xf32> to vector<4x286xf32>
    %c0_80 = arith.constant 0 : index
    %c0_81 = arith.constant 0 : index
    %90 = vector.load %arg8[%c0_80, %c0_81] : memref<36x286xf32, #tpu.memory_space<vmem>>, vector<4x286xf32>
    tpu.vector_store %arg8[%c0_80, %c0_81], %89 {strides = array<i32>} : memref<36x286xf32, #tpu.memory_space<vmem>>, vector<4x286xf32>,
    %91 = vector.extract_strided_slice %88 {offsets = [0, 1], sizes = [4, 286], strides = [1, 1]} : vector<4x324xf32> to vector<4x286xf32>
    %c4_82 = arith.constant 4 : index
    %c0_83 = arith.constant 0 : index
    %92 = vector.load %arg8[%c4_82, %c0_83] : memref<36x286xf32, #tpu.memory_space<vmem>>, vector<4x286xf32>
    tpu.vector_store %arg8[%c4_82, %c0_83], %91 {strides = array<i32>} : memref<36x286xf32, #tpu.memory_space<vmem>>, vector<4x286xf32>,
    %93 = vector.extract_strided_slice %88 {offsets = [0, 2], sizes = [4, 286], strides = [1, 1]} : vector<4x324xf32> to vector<4x286xf32>
    %c8_84 = arith.constant 8 : index
    %c0_85 = arith.constant 0 : index
    %94 = vector.load %arg8[%c8_84, %c0_85] : memref<36x286xf32, #tpu.memory_space<vmem>>, vector<4x286xf32>
    tpu.vector_store %arg8[%c8_84, %c0_85], %93 {strides = array<i32>} : memref<36x286xf32, #tpu.memory_space<vmem>>, vector<4x286xf32>,
    %95 = vector.extract_strided_slice %88 {offsets = [0, 18], sizes = [4, 286], strides = [1, 1]} : vector<4x324xf32> to vector<4x286xf32>
    %c12_86 = arith.constant 12 : index
    %c0_87 = arith.constant 0 : index
    %96 = vector.load %arg8[%c12_86, %c0_87] : memref<36x286xf32, #tpu.memory_space<vmem>>, vector<4x286xf32>
    tpu.vector_store %arg8[%c12_86, %c0_87], %95 {strides = array<i32>} : memref<36x286xf32, #tpu.memory_space<vmem>>, vector<4x286xf32>,
    %97 = vector.extract_strided_slice %88 {offsets = [0, 19], sizes = [4, 286], strides = [1, 1]} : vector<4x324xf32> to vector<4x286xf32>
    %c16_88 = arith.constant 16 : index
    %c0_89 = arith.constant 0 : index
    %98 = vector.load %arg8[%c16_88, %c0_89] : memref<36x286xf32, #tpu.memory_space<vmem>>, vector<4x286xf32>
    tpu.vector_store %arg8[%c16_88, %c0_89], %97 {strides = array<i32>} : memref<36x286xf32, #tpu.memory_space<vmem>>, vector<4x286xf32>,
    %99 = vector.extract_strided_slice %88 {offsets = [0, 20], sizes = [4, 286], strides = [1, 1]} : vector<4x324xf32> to vector<4x286xf32>
    %c20_90 = arith.constant 20 : index
    %c0_91 = arith.constant 0 : index
    %100 = vector.load %arg8[%c20_90, %c0_91] : memref<36x286xf32, #tpu.memory_space<vmem>>, vector<4x286xf32>
    tpu.vector_store %arg8[%c20_90, %c0_91], %99 {strides = array<i32>} : memref<36x286xf32, #tpu.memory_space<vmem>>, vector<4x286xf32>,
    %101 = vector.extract_strided_slice %88 {offsets = [0, 36], sizes = [4, 286], strides = [1, 1]} : vector<4x324xf32> to vector<4x286xf32>
    %c24_92 = arith.constant 24 : index
    %c0_93 = arith.constant 0 : index
    %102 = vector.load %arg8[%c24_92, %c0_93] : memref<36x286xf32, #tpu.memory_space<vmem>>, vector<4x286xf32>
    tpu.vector_store %arg8[%c24_92, %c0_93], %101 {strides = array<i32>} : memref<36x286xf32, #tpu.memory_space<vmem>>, vector<4x286xf32>,
    %103 = vector.extract_strided_slice %88 {offsets = [0, 37], sizes = [4, 286], strides = [1, 1]} : vector<4x324xf32> to vector<4x286xf32>
    %c28_94 = arith.constant 28 : index
    %c0_95 = arith.constant 0 : index
    %104 = vector.load %arg8[%c28_94, %c0_95] : memref<36x286xf32, #tpu.memory_space<vmem>>, vector<4x286xf32>
    tpu.vector_store %arg8[%c28_94, %c0_95], %103 {strides = array<i32>} : memref<36x286xf32, #tpu.memory_space<vmem>>, vector<4x286xf32>,
    %105 = vector.extract_strided_slice %88 {offsets = [0, 38], sizes = [4, 286], strides = [1, 1]} : vector<4x324xf32> to vector<4x286xf32>
    %c32_96 = arith.constant 32 : index
    %c0_97 = arith.constant 0 : index
    %106 = vector.load %arg8[%c32_96, %c0_97] : memref<36x286xf32, #tpu.memory_space<vmem>>, vector<4x286xf32>
    tpu.vector_store %arg8[%c32_96, %c0_97], %105 {strides = array<i32>} : memref<36x286xf32, #tpu.memory_space<vmem>>, vector<4x286xf32>,
    %c0_98 = arith.constant 0 : index
    %c0_99 = arith.constant 0 : index
    %107 = vector.load %arg8[%c0_98, %c0_99] : memref<36x286xf32, #tpu.memory_space<vmem>>, vector<36x286xf32>
    %cst_100 = arith.constant dense<0.000000e+00> : vector<16x286xf32>
    %108 = tpu.matmul %0, %107, %cst_100 {dimension_numbers = #tpu.dot_dimension_numbers<[1], [0], [0], [1], [0, 0, 1, 1], [], []>} : vector<16x36xf32>, vector<36x286xf32>, vector<16x286xf32> -> vector<16x286xf32>
    %109 = vector.broadcast %1 : vector<16x1xf32> to vector<16x286xf32>
    %110 = arith.addf %108, %109 : vector<16x286xf32>
    %cst_101 = arith.constant 0.000000e+00 : f32
    %111 = vector.broadcast %cst_101 : f32 to vector<16x286xf32>
    %112 = arith.maximumf %110, %111 : vector<16x286xf32>
    %cst_102 = arith.constant dense<0.000000e+00> : vector<1x16xf32>
    %113 = tpu.matmul %2, %112, %cst_102 {dimension_numbers = #tpu.dot_dimension_numbers<[1], [1], [0], [0], [0, 0, 1, 0], [], []>} : vector<1x286xf32>, vector<16x286xf32>, vector<1x16xf32> -> vector<1x16xf32>
    %c3_103 = arith.constant 3 : index
    %c0_104 = arith.constant 0 : index
    %114 = vector.load %arg9[%c3_103, %c0_104] : memref<8x16xf32, #tpu.memory_space<vmem>>, vector<1x16xf32>
    tpu.vector_store %arg9[%c3_103, %c0_104], %113 {strides = array<i32>} : memref<8x16xf32, #tpu.memory_space<vmem>>, vector<1x16xf32>,
    %c4_105 = arith.constant 4 : index
    %c0_106 = arith.constant 0 : index
    %c0_107 = arith.constant 0 : index
    %115 = vector.load %arg1[%c4_105, %c0_106, %c0_107] : memref<8x4x324xf32, #tpu.memory_space<vmem>>, vector<1x4x324xf32>
    %116 = vector.shape_cast %115 : vector<1x4x324xf32> to vector<4x324xf32>
    %117 = vector.extract_strided_slice %116 {offsets = [0, 0], sizes = [4, 286], strides = [1, 1]} : vector<4x324xf32> to vector<4x286xf32>
    %c0_108 = arith.constant 0 : index
    %c0_109 = arith.constant 0 : index
    %118 = vector.load %arg8[%c0_108, %c0_109] : memref<36x286xf32, #tpu.memory_space<vmem>>, vector<4x286xf32>
    tpu.vector_store %arg8[%c0_108, %c0_109], %117 {strides = array<i32>} : memref<36x286xf32, #tpu.memory_space<vmem>>, vector<4x286xf32>,
    %119 = vector.extract_strided_slice %116 {offsets = [0, 1], sizes = [4, 286], strides = [1, 1]} : vector<4x324xf32> to vector<4x286xf32>
    %c4_110 = arith.constant 4 : index
    %c0_111 = arith.constant 0 : index
    %120 = vector.load %arg8[%c4_110, %c0_111] : memref<36x286xf32, #tpu.memory_space<vmem>>, vector<4x286xf32>
    tpu.vector_store %arg8[%c4_110, %c0_111], %119 {strides = array<i32>} : memref<36x286xf32, #tpu.memory_space<vmem>>, vector<4x286xf32>,
    %121 = vector.extract_strided_slice %116 {offsets = [0, 2], sizes = [4, 286], strides = [1, 1]} : vector<4x324xf32> to vector<4x286xf32>
    %c8_112 = arith.constant 8 : index
    %c0_113 = arith.constant 0 : index
    %122 = vector.load %arg8[%c8_112, %c0_113] : memref<36x286xf32, #tpu.memory_space<vmem>>, vector<4x286xf32>
    tpu.vector_store %arg8[%c8_112, %c0_113], %121 {strides = array<i32>} : memref<36x286xf32, #tpu.memory_space<vmem>>, vector<4x286xf32>,
    %123 = vector.extract_strided_slice %116 {offsets = [0, 18], sizes = [4, 286], strides = [1, 1]} : vector<4x324xf32> to vector<4x286xf32>
    %c12_114 = arith.constant 12 : index
    %c0_115 = arith.constant 0 : index
    %124 = vector.load %arg8[%c12_114, %c0_115] : memref<36x286xf32, #tpu.memory_space<vmem>>, vector<4x286xf32>
    tpu.vector_store %arg8[%c12_114, %c0_115], %123 {strides = array<i32>} : memref<36x286xf32, #tpu.memory_space<vmem>>, vector<4x286xf32>,
    %125 = vector.extract_strided_slice %116 {offsets = [0, 19], sizes = [4, 286], strides = [1, 1]} : vector<4x324xf32> to vector<4x286xf32>
    %c16_116 = arith.constant 16 : index
    %c0_117 = arith.constant 0 : index
    %126 = vector.load %arg8[%c16_116, %c0_117] : memref<36x286xf32, #tpu.memory_space<vmem>>, vector<4x286xf32>
    tpu.vector_store %arg8[%c16_116, %c0_117], %125 {strides = array<i32>} : memref<36x286xf32, #tpu.memory_space<vmem>>, vector<4x286xf32>,
    %127 = vector.extract_strided_slice %116 {offsets = [0, 20], sizes = [4, 286], strides = [1, 1]} : vector<4x324xf32> to vector<4x286xf32>
    %c20_118 = arith.constant 20 : index
    %c0_119 = arith.constant 0 : index
    %128 = vector.load %arg8[%c20_118, %c0_119] : memref<36x286xf32, #tpu.memory_space<vmem>>, vector<4x286xf32>
    tpu.vector_store %arg8[%c20_118, %c0_119], %127 {strides = array<i32>} : memref<36x286xf32, #tpu.memory_space<vmem>>, vector<4x286xf32>,
    %129 = vector.extract_strided_slice %116 {offsets = [0, 36], sizes = [4, 286], strides = [1, 1]} : vector<4x324xf32> to vector<4x286xf32>
    %c24_120 = arith.constant 24 : index
    %c0_121 = arith.constant 0 : index
    %130 = vector.load %arg8[%c24_120, %c0_121] : memref<36x286xf32, #tpu.memory_space<vmem>>, vector<4x286xf32>
    tpu.vector_store %arg8[%c24_120, %c0_121], %129 {strides = array<i32>} : memref<36x286xf32, #tpu.memory_space<vmem>>, vector<4x286xf32>,
    %131 = vector.extract_strided_slice %116 {offsets = [0, 37], sizes = [4, 286], strides = [1, 1]} : vector<4x324xf32> to vector<4x286xf32>
    %c28_122 = arith.constant 28 : index
    %c0_123 = arith.constant 0 : index
    %132 = vector.load %arg8[%c28_122, %c0_123] : memref<36x286xf32, #tpu.memory_space<vmem>>, vector<4x286xf32>
    tpu.vector_store %arg8[%c28_122, %c0_123], %131 {strides = array<i32>} : memref<36x286xf32, #tpu.memory_space<vmem>>, vector<4x286xf32>,
    %133 = vector.extract_strided_slice %116 {offsets = [0, 38], sizes = [4, 286], strides = [1, 1]} : vector<4x324xf32> to vector<4x286xf32>
    %c32_124 = arith.constant 32 : index
    %c0_125 = arith.constant 0 : index
    %134 = vector.load %arg8[%c32_124, %c0_125] : memref<36x286xf32, #tpu.memory_space<vmem>>, vector<4x286xf32>
    tpu.vector_store %arg8[%c32_124, %c0_125], %133 {strides = array<i32>} : memref<36x286xf32, #tpu.memory_space<vmem>>, vector<4x286xf32>,
    %c0_126 = arith.constant 0 : index
    %c0_127 = arith.constant 0 : index
    %135 = vector.load %arg8[%c0_126, %c0_127] : memref<36x286xf32, #tpu.memory_space<vmem>>, vector<36x286xf32>
    %cst_128 = arith.constant dense<0.000000e+00> : vector<16x286xf32>
    %136 = tpu.matmul %0, %135, %cst_128 {dimension_numbers = #tpu.dot_dimension_numbers<[1], [0], [0], [1], [0, 0, 1, 1], [], []>} : vector<16x36xf32>, vector<36x286xf32>, vector<16x286xf32> -> vector<16x286xf32>
    %137 = vector.broadcast %1 : vector<16x1xf32> to vector<16x286xf32>
    %138 = arith.addf %136, %137 : vector<16x286xf32>
    %cst_129 = arith.constant 0.000000e+00 : f32
    %139 = vector.broadcast %cst_129 : f32 to vector<16x286xf32>
    %140 = arith.maximumf %138, %139 : vector<16x286xf32>
    %cst_130 = arith.constant dense<0.000000e+00> : vector<1x16xf32>
    %141 = tpu.matmul %2, %140, %cst_130 {dimension_numbers = #tpu.dot_dimension_numbers<[1], [1], [0], [0], [0, 0, 1, 0], [], []>} : vector<1x286xf32>, vector<16x286xf32>, vector<1x16xf32> -> vector<1x16xf32>
    %c4_131 = arith.constant 4 : index
    %c0_132 = arith.constant 0 : index
    %142 = vector.load %arg9[%c4_131, %c0_132] : memref<8x16xf32, #tpu.memory_space<vmem>>, vector<1x16xf32>
    tpu.vector_store %arg9[%c4_131, %c0_132], %141 {strides = array<i32>} : memref<8x16xf32, #tpu.memory_space<vmem>>, vector<1x16xf32>,
    %c5 = arith.constant 5 : index
    %c0_133 = arith.constant 0 : index
    %c0_134 = arith.constant 0 : index
    %143 = vector.load %arg1[%c5, %c0_133, %c0_134] : memref<8x4x324xf32, #tpu.memory_space<vmem>>, vector<1x4x324xf32>
    %144 = vector.shape_cast %143 : vector<1x4x324xf32> to vector<4x324xf32>
    %145 = vector.extract_strided_slice %144 {offsets = [0, 0], sizes = [4, 286], strides = [1, 1]} : vector<4x324xf32> to vector<4x286xf32>
    %c0_135 = arith.constant 0 : index
    %c0_136 = arith.constant 0 : index
    %146 = vector.load %arg8[%c0_135, %c0_136] : memref<36x286xf32, #tpu.memory_space<vmem>>, vector<4x286xf32>
    tpu.vector_store %arg8[%c0_135, %c0_136], %145 {strides = array<i32>} : memref<36x286xf32, #tpu.memory_space<vmem>>, vector<4x286xf32>,
    %147 = vector.extract_strided_slice %144 {offsets = [0, 1], sizes = [4, 286], strides = [1, 1]} : vector<4x324xf32> to vector<4x286xf32>
    %c4_137 = arith.constant 4 : index
    %c0_138 = arith.constant 0 : index
    %148 = vector.load %arg8[%c4_137, %c0_138] : memref<36x286xf32, #tpu.memory_space<vmem>>, vector<4x286xf32>
    tpu.vector_store %arg8[%c4_137, %c0_138], %147 {strides = array<i32>} : memref<36x286xf32, #tpu.memory_space<vmem>>, vector<4x286xf32>,
    %149 = vector.extract_strided_slice %144 {offsets = [0, 2], sizes = [4, 286], strides = [1, 1]} : vector<4x324xf32> to vector<4x286xf32>
    %c8_139 = arith.constant 8 : index
    %c0_140 = arith.constant 0 : index
    %150 = vector.load %arg8[%c8_139, %c0_140] : memref<36x286xf32, #tpu.memory_space<vmem>>, vector<4x286xf32>
    tpu.vector_store %arg8[%c8_139, %c0_140], %149 {strides = array<i32>} : memref<36x286xf32, #tpu.memory_space<vmem>>, vector<4x286xf32>,
    %151 = vector.extract_strided_slice %144 {offsets = [0, 18], sizes = [4, 286], strides = [1, 1]} : vector<4x324xf32> to vector<4x286xf32>
    %c12_141 = arith.constant 12 : index
    %c0_142 = arith.constant 0 : index
    %152 = vector.load %arg8[%c12_141, %c0_142] : memref<36x286xf32, #tpu.memory_space<vmem>>, vector<4x286xf32>
    tpu.vector_store %arg8[%c12_141, %c0_142], %151 {strides = array<i32>} : memref<36x286xf32, #tpu.memory_space<vmem>>, vector<4x286xf32>,
    %153 = vector.extract_strided_slice %144 {offsets = [0, 19], sizes = [4, 286], strides = [1, 1]} : vector<4x324xf32> to vector<4x286xf32>
    %c16_143 = arith.constant 16 : index
    %c0_144 = arith.constant 0 : index
    %154 = vector.load %arg8[%c16_143, %c0_144] : memref<36x286xf32, #tpu.memory_space<vmem>>, vector<4x286xf32>
    tpu.vector_store %arg8[%c16_143, %c0_144], %153 {strides = array<i32>} : memref<36x286xf32, #tpu.memory_space<vmem>>, vector<4x286xf32>,
    %155 = vector.extract_strided_slice %144 {offsets = [0, 20], sizes = [4, 286], strides = [1, 1]} : vector<4x324xf32> to vector<4x286xf32>
    %c20_145 = arith.constant 20 : index
    %c0_146 = arith.constant 0 : index
    %156 = vector.load %arg8[%c20_145, %c0_146] : memref<36x286xf32, #tpu.memory_space<vmem>>, vector<4x286xf32>
    tpu.vector_store %arg8[%c20_145, %c0_146], %155 {strides = array<i32>} : memref<36x286xf32, #tpu.memory_space<vmem>>, vector<4x286xf32>,
    %157 = vector.extract_strided_slice %144 {offsets = [0, 36], sizes = [4, 286], strides = [1, 1]} : vector<4x324xf32> to vector<4x286xf32>
    %c24_147 = arith.constant 24 : index
    %c0_148 = arith.constant 0 : index
    %158 = vector.load %arg8[%c24_147, %c0_148] : memref<36x286xf32, #tpu.memory_space<vmem>>, vector<4x286xf32>
    tpu.vector_store %arg8[%c24_147, %c0_148], %157 {strides = array<i32>} : memref<36x286xf32, #tpu.memory_space<vmem>>, vector<4x286xf32>,
    %159 = vector.extract_strided_slice %144 {offsets = [0, 37], sizes = [4, 286], strides = [1, 1]} : vector<4x324xf32> to vector<4x286xf32>
    %c28_149 = arith.constant 28 : index
    %c0_150 = arith.constant 0 : index
    %160 = vector.load %arg8[%c28_149, %c0_150] : memref<36x286xf32, #tpu.memory_space<vmem>>, vector<4x286xf32>
    tpu.vector_store %arg8[%c28_149, %c0_150], %159 {strides = array<i32>} : memref<36x286xf32, #tpu.memory_space<vmem>>, vector<4x286xf32>,
    %161 = vector.extract_strided_slice %144 {offsets = [0, 38], sizes = [4, 286], strides = [1, 1]} : vector<4x324xf32> to vector<4x286xf32>
    %c32_151 = arith.constant 32 : index
    %c0_152 = arith.constant 0 : index
    %162 = vector.load %arg8[%c32_151, %c0_152] : memref<36x286xf32, #tpu.memory_space<vmem>>, vector<4x286xf32>
    tpu.vector_store %arg8[%c32_151, %c0_152], %161 {strides = array<i32>} : memref<36x286xf32, #tpu.memory_space<vmem>>, vector<4x286xf32>,
    %c0_153 = arith.constant 0 : index
    %c0_154 = arith.constant 0 : index
    %163 = vector.load %arg8[%c0_153, %c0_154] : memref<36x286xf32, #tpu.memory_space<vmem>>, vector<36x286xf32>
    %cst_155 = arith.constant dense<0.000000e+00> : vector<16x286xf32>
    %164 = tpu.matmul %0, %163, %cst_155 {dimension_numbers = #tpu.dot_dimension_numbers<[1], [0], [0], [1], [0, 0, 1, 1], [], []>} : vector<16x36xf32>, vector<36x286xf32>, vector<16x286xf32> -> vector<16x286xf32>
    %165 = vector.broadcast %1 : vector<16x1xf32> to vector<16x286xf32>
    %166 = arith.addf %164, %165 : vector<16x286xf32>
    %cst_156 = arith.constant 0.000000e+00 : f32
    %167 = vector.broadcast %cst_156 : f32 to vector<16x286xf32>
    %168 = arith.maximumf %166, %167 : vector<16x286xf32>
    %cst_157 = arith.constant dense<0.000000e+00> : vector<1x16xf32>
    %169 = tpu.matmul %2, %168, %cst_157 {dimension_numbers = #tpu.dot_dimension_numbers<[1], [1], [0], [0], [0, 0, 1, 0], [], []>} : vector<1x286xf32>, vector<16x286xf32>, vector<1x16xf32> -> vector<1x16xf32>
    %c5_158 = arith.constant 5 : index
    %c0_159 = arith.constant 0 : index
    %170 = vector.load %arg9[%c5_158, %c0_159] : memref<8x16xf32, #tpu.memory_space<vmem>>, vector<1x16xf32>
    tpu.vector_store %arg9[%c5_158, %c0_159], %169 {strides = array<i32>} : memref<8x16xf32, #tpu.memory_space<vmem>>, vector<1x16xf32>,
    %c6 = arith.constant 6 : index
    %c0_160 = arith.constant 0 : index
    %c0_161 = arith.constant 0 : index
    %171 = vector.load %arg1[%c6, %c0_160, %c0_161] : memref<8x4x324xf32, #tpu.memory_space<vmem>>, vector<1x4x324xf32>
    %172 = vector.shape_cast %171 : vector<1x4x324xf32> to vector<4x324xf32>
    %173 = vector.extract_strided_slice %172 {offsets = [0, 0], sizes = [4, 286], strides = [1, 1]} : vector<4x324xf32> to vector<4x286xf32>
    %c0_162 = arith.constant 0 : index
    %c0_163 = arith.constant 0 : index
    %174 = vector.load %arg8[%c0_162, %c0_163] : memref<36x286xf32, #tpu.memory_space<vmem>>, vector<4x286xf32>
    tpu.vector_store %arg8[%c0_162, %c0_163], %173 {strides = array<i32>} : memref<36x286xf32, #tpu.memory_space<vmem>>, vector<4x286xf32>,
    %175 = vector.extract_strided_slice %172 {offsets = [0, 1], sizes = [4, 286], strides = [1, 1]} : vector<4x324xf32> to vector<4x286xf32>
    %c4_164 = arith.constant 4 : index
    %c0_165 = arith.constant 0 : index
    %176 = vector.load %arg8[%c4_164, %c0_165] : memref<36x286xf32, #tpu.memory_space<vmem>>, vector<4x286xf32>
    tpu.vector_store %arg8[%c4_164, %c0_165], %175 {strides = array<i32>} : memref<36x286xf32, #tpu.memory_space<vmem>>, vector<4x286xf32>,
    %177 = vector.extract_strided_slice %172 {offsets = [0, 2], sizes = [4, 286], strides = [1, 1]} : vector<4x324xf32> to vector<4x286xf32>
    %c8_166 = arith.constant 8 : index
    %c0_167 = arith.constant 0 : index
    %178 = vector.load %arg8[%c8_166, %c0_167] : memref<36x286xf32, #tpu.memory_space<vmem>>, vector<4x286xf32>
    tpu.vector_store %arg8[%c8_166, %c0_167], %177 {strides = array<i32>} : memref<36x286xf32, #tpu.memory_space<vmem>>, vector<4x286xf32>,
    %179 = vector.extract_strided_slice %172 {offsets = [0, 18], sizes = [4, 286], strides = [1, 1]} : vector<4x324xf32> to vector<4x286xf32>
    %c12_168 = arith.constant 12 : index
    %c0_169 = arith.constant 0 : index
    %180 = vector.load %arg8[%c12_168, %c0_169] : memref<36x286xf32, #tpu.memory_space<vmem>>, vector<4x286xf32>
    tpu.vector_store %arg8[%c12_168, %c0_169], %179 {strides = array<i32>} : memref<36x286xf32, #tpu.memory_space<vmem>>, vector<4x286xf32>,
    %181 = vector.extract_strided_slice %172 {offsets = [0, 19], sizes = [4, 286], strides = [1, 1]} : vector<4x324xf32> to vector<4x286xf32>
    %c16_170 = arith.constant 16 : index
    %c0_171 = arith.constant 0 : index
    %182 = vector.load %arg8[%c16_170, %c0_171] : memref<36x286xf32, #tpu.memory_space<vmem>>, vector<4x286xf32>
    tpu.vector_store %arg8[%c16_170, %c0_171], %181 {strides = array<i32>} : memref<36x286xf32, #tpu.memory_space<vmem>>, vector<4x286xf32>,
    %183 = vector.extract_strided_slice %172 {offsets = [0, 20], sizes = [4, 286], strides = [1, 1]} : vector<4x324xf32> to vector<4x286xf32>
    %c20_172 = arith.constant 20 : index
    %c0_173 = arith.constant 0 : index
    %184 = vector.load %arg8[%c20_172, %c0_173] : memref<36x286xf32, #tpu.memory_space<vmem>>, vector<4x286xf32>
    tpu.vector_store %arg8[%c20_172, %c0_173], %183 {strides = array<i32>} : memref<36x286xf32, #tpu.memory_space<vmem>>, vector<4x286xf32>,
    %185 = vector.extract_strided_slice %172 {offsets = [0, 36], sizes = [4, 286], strides = [1, 1]} : vector<4x324xf32> to vector<4x286xf32>
    %c24_174 = arith.constant 24 : index
    %c0_175 = arith.constant 0 : index
    %186 = vector.load %arg8[%c24_174, %c0_175] : memref<36x286xf32, #tpu.memory_space<vmem>>, vector<4x286xf32>
    tpu.vector_store %arg8[%c24_174, %c0_175], %185 {strides = array<i32>} : memref<36x286xf32, #tpu.memory_space<vmem>>, vector<4x286xf32>,
    %187 = vector.extract_strided_slice %172 {offsets = [0, 37], sizes = [4, 286], strides = [1, 1]} : vector<4x324xf32> to vector<4x286xf32>
    %c28_176 = arith.constant 28 : index
    %c0_177 = arith.constant 0 : index
    %188 = vector.load %arg8[%c28_176, %c0_177] : memref<36x286xf32, #tpu.memory_space<vmem>>, vector<4x286xf32>
    tpu.vector_store %arg8[%c28_176, %c0_177], %187 {strides = array<i32>} : memref<36x286xf32, #tpu.memory_space<vmem>>, vector<4x286xf32>,
    %189 = vector.extract_strided_slice %172 {offsets = [0, 38], sizes = [4, 286], strides = [1, 1]} : vector<4x324xf32> to vector<4x286xf32>
    %c32_178 = arith.constant 32 : index
    %c0_179 = arith.constant 0 : index
    %190 = vector.load %arg8[%c32_178, %c0_179] : memref<36x286xf32, #tpu.memory_space<vmem>>, vector<4x286xf32>
    tpu.vector_store %arg8[%c32_178, %c0_179], %189 {strides = array<i32>} : memref<36x286xf32, #tpu.memory_space<vmem>>, vector<4x286xf32>,
    %c0_180 = arith.constant 0 : index
    %c0_181 = arith.constant 0 : index
    %191 = vector.load %arg8[%c0_180, %c0_181] : memref<36x286xf32, #tpu.memory_space<vmem>>, vector<36x286xf32>
    %cst_182 = arith.constant dense<0.000000e+00> : vector<16x286xf32>
    %192 = tpu.matmul %0, %191, %cst_182 {dimension_numbers = #tpu.dot_dimension_numbers<[1], [0], [0], [1], [0, 0, 1, 1], [], []>} : vector<16x36xf32>, vector<36x286xf32>, vector<16x286xf32> -> vector<16x286xf32>
    %193 = vector.broadcast %1 : vector<16x1xf32> to vector<16x286xf32>
    %194 = arith.addf %192, %193 : vector<16x286xf32>
    %cst_183 = arith.constant 0.000000e+00 : f32
    %195 = vector.broadcast %cst_183 : f32 to vector<16x286xf32>
    %196 = arith.maximumf %194, %195 : vector<16x286xf32>
    %cst_184 = arith.constant dense<0.000000e+00> : vector<1x16xf32>
    %197 = tpu.matmul %2, %196, %cst_184 {dimension_numbers = #tpu.dot_dimension_numbers<[1], [1], [0], [0], [0, 0, 1, 0], [], []>} : vector<1x286xf32>, vector<16x286xf32>, vector<1x16xf32> -> vector<1x16xf32>
    %c6_185 = arith.constant 6 : index
    %c0_186 = arith.constant 0 : index
    %198 = vector.load %arg9[%c6_185, %c0_186] : memref<8x16xf32, #tpu.memory_space<vmem>>, vector<1x16xf32>
    tpu.vector_store %arg9[%c6_185, %c0_186], %197 {strides = array<i32>} : memref<8x16xf32, #tpu.memory_space<vmem>>, vector<1x16xf32>,
    %c7 = arith.constant 7 : index
    %c0_187 = arith.constant 0 : index
    %c0_188 = arith.constant 0 : index
    %199 = vector.load %arg1[%c7, %c0_187, %c0_188] : memref<8x4x324xf32, #tpu.memory_space<vmem>>, vector<1x4x324xf32>
    %200 = vector.shape_cast %199 : vector<1x4x324xf32> to vector<4x324xf32>
    %201 = vector.extract_strided_slice %200 {offsets = [0, 0], sizes = [4, 286], strides = [1, 1]} : vector<4x324xf32> to vector<4x286xf32>
    %c0_189 = arith.constant 0 : index
    %c0_190 = arith.constant 0 : index
    %202 = vector.load %arg8[%c0_189, %c0_190] : memref<36x286xf32, #tpu.memory_space<vmem>>, vector<4x286xf32>
    tpu.vector_store %arg8[%c0_189, %c0_190], %201 {strides = array<i32>} : memref<36x286xf32, #tpu.memory_space<vmem>>, vector<4x286xf32>,
    %203 = vector.extract_strided_slice %200 {offsets = [0, 1], sizes = [4, 286], strides = [1, 1]} : vector<4x324xf32> to vector<4x286xf32>
    %c4_191 = arith.constant 4 : index
    %c0_192 = arith.constant 0 : index
    %204 = vector.load %arg8[%c4_191, %c0_192] : memref<36x286xf32, #tpu.memory_space<vmem>>, vector<4x286xf32>
    tpu.vector_store %arg8[%c4_191, %c0_192], %203 {strides = array<i32>} : memref<36x286xf32, #tpu.memory_space<vmem>>, vector<4x286xf32>,
    %205 = vector.extract_strided_slice %200 {offsets = [0, 2], sizes = [4, 286], strides = [1, 1]} : vector<4x324xf32> to vector<4x286xf32>
    %c8_193 = arith.constant 8 : index
    %c0_194 = arith.constant 0 : index
    %206 = vector.load %arg8[%c8_193, %c0_194] : memref<36x286xf32, #tpu.memory_space<vmem>>, vector<4x286xf32>
    tpu.vector_store %arg8[%c8_193, %c0_194], %205 {strides = array<i32>} : memref<36x286xf32, #tpu.memory_space<vmem>>, vector<4x286xf32>,
    %207 = vector.extract_strided_slice %200 {offsets = [0, 18], sizes = [4, 286], strides = [1, 1]} : vector<4x324xf32> to vector<4x286xf32>
    %c12_195 = arith.constant 12 : index
    %c0_196 = arith.constant 0 : index
    %208 = vector.load %arg8[%c12_195, %c0_196] : memref<36x286xf32, #tpu.memory_space<vmem>>, vector<4x286xf32>
    tpu.vector_store %arg8[%c12_195, %c0_196], %207 {strides = array<i32>} : memref<36x286xf32, #tpu.memory_space<vmem>>, vector<4x286xf32>,
    %209 = vector.extract_strided_slice %200 {offsets = [0, 19], sizes = [4, 286], strides = [1, 1]} : vector<4x324xf32> to vector<4x286xf32>
    %c16_197 = arith.constant 16 : index
    %c0_198 = arith.constant 0 : index
    %210 = vector.load %arg8[%c16_197, %c0_198] : memref<36x286xf32, #tpu.memory_space<vmem>>, vector<4x286xf32>
    tpu.vector_store %arg8[%c16_197, %c0_198], %209 {strides = array<i32>} : memref<36x286xf32, #tpu.memory_space<vmem>>, vector<4x286xf32>,
    %211 = vector.extract_strided_slice %200 {offsets = [0, 20], sizes = [4, 286], strides = [1, 1]} : vector<4x324xf32> to vector<4x286xf32>
    %c20_199 = arith.constant 20 : index
    %c0_200 = arith.constant 0 : index
    %212 = vector.load %arg8[%c20_199, %c0_200] : memref<36x286xf32, #tpu.memory_space<vmem>>, vector<4x286xf32>
    tpu.vector_store %arg8[%c20_199, %c0_200], %211 {strides = array<i32>} : memref<36x286xf32, #tpu.memory_space<vmem>>, vector<4x286xf32>,
    %213 = vector.extract_strided_slice %200 {offsets = [0, 36], sizes = [4, 286], strides = [1, 1]} : vector<4x324xf32> to vector<4x286xf32>
    %c24_201 = arith.constant 24 : index
    %c0_202 = arith.constant 0 : index
    %214 = vector.load %arg8[%c24_201, %c0_202] : memref<36x286xf32, #tpu.memory_space<vmem>>, vector<4x286xf32>
    tpu.vector_store %arg8[%c24_201, %c0_202], %213 {strides = array<i32>} : memref<36x286xf32, #tpu.memory_space<vmem>>, vector<4x286xf32>,
    %215 = vector.extract_strided_slice %200 {offsets = [0, 37], sizes = [4, 286], strides = [1, 1]} : vector<4x324xf32> to vector<4x286xf32>
    %c28_203 = arith.constant 28 : index
    %c0_204 = arith.constant 0 : index
    %216 = vector.load %arg8[%c28_203, %c0_204] : memref<36x286xf32, #tpu.memory_space<vmem>>, vector<4x286xf32>
    tpu.vector_store %arg8[%c28_203, %c0_204], %215 {strides = array<i32>} : memref<36x286xf32, #tpu.memory_space<vmem>>, vector<4x286xf32>,
    %217 = vector.extract_strided_slice %200 {offsets = [0, 38], sizes = [4, 286], strides = [1, 1]} : vector<4x324xf32> to vector<4x286xf32>
    %c32_205 = arith.constant 32 : index
    %c0_206 = arith.constant 0 : index
    %218 = vector.load %arg8[%c32_205, %c0_206] : memref<36x286xf32, #tpu.memory_space<vmem>>, vector<4x286xf32>
    tpu.vector_store %arg8[%c32_205, %c0_206], %217 {strides = array<i32>} : memref<36x286xf32, #tpu.memory_space<vmem>>, vector<4x286xf32>,
    %c0_207 = arith.constant 0 : index
    %c0_208 = arith.constant 0 : index
    %219 = vector.load %arg8[%c0_207, %c0_208] : memref<36x286xf32, #tpu.memory_space<vmem>>, vector<36x286xf32>
    %cst_209 = arith.constant dense<0.000000e+00> : vector<16x286xf32>
    %220 = tpu.matmul %0, %219, %cst_209 {dimension_numbers = #tpu.dot_dimension_numbers<[1], [0], [0], [1], [0, 0, 1, 1], [], []>} : vector<16x36xf32>, vector<36x286xf32>, vector<16x286xf32> -> vector<16x286xf32>
    %221 = vector.broadcast %1 : vector<16x1xf32> to vector<16x286xf32>
    %222 = arith.addf %220, %221 : vector<16x286xf32>
    %cst_210 = arith.constant 0.000000e+00 : f32
    %223 = vector.broadcast %cst_210 : f32 to vector<16x286xf32>
    %224 = arith.maximumf %222, %223 : vector<16x286xf32>
    %cst_211 = arith.constant dense<0.000000e+00> : vector<1x16xf32>
    %225 = tpu.matmul %2, %224, %cst_211 {dimension_numbers = #tpu.dot_dimension_numbers<[1], [1], [0], [0], [0, 0, 1, 0], [], []>} : vector<1x286xf32>, vector<16x286xf32>, vector<1x16xf32> -> vector<1x16xf32>
    %c7_212 = arith.constant 7 : index
    %c0_213 = arith.constant 0 : index
    %226 = vector.load %arg9[%c7_212, %c0_213] : memref<8x16xf32, #tpu.memory_space<vmem>>, vector<1x16xf32>
    tpu.vector_store %arg9[%c7_212, %c0_213], %225 {strides = array<i32>} : memref<8x16xf32, #tpu.memory_space<vmem>>, vector<1x16xf32>,
    %c0_214 = arith.constant 0 : index
    %c0_215 = arith.constant 0 : index
    %227 = vector.load %arg9[%c0_214, %c0_215] : memref<8x16xf32, #tpu.memory_space<vmem>>, vector<8x16xf32>
    %c0_216 = arith.constant 0 : index
    %c0_217 = arith.constant 0 : index
    %228 = vector.load %arg5[%c0_216, %c0_217] : memref<16x128xf32, #tpu.memory_space<vmem>>, vector<16x128xf32>
    %cst_218 = arith.constant dense<0.000000e+00> : vector<8x128xf32>
    %229 = tpu.matmul %227, %228, %cst_218 {dimension_numbers = #tpu.dot_dimension_numbers<[1], [0], [0], [1], [0, 0, 1, 1], [], []>} : vector<8x16xf32>, vector<16x128xf32>, vector<8x128xf32> -> vector<8x128xf32>
    %c0_219 = arith.constant 0 : index
    %c0_220 = arith.constant 0 : index
    %230 = vector.load %arg6[%c0_219, %c0_220] : memref<1x128xf32, #tpu.memory_space<vmem>>, vector<1x128xf32>
    %231 = vector.broadcast %230 : vector<1x128xf32> to vector<8x128xf32>
    %232 = arith.addf %229, %231 : vector<8x128xf32>
    %c0_221 = arith.constant 0 : index
    %c0_222 = arith.constant 0 : index
    %233 = vector.load %arg7[%c0_221, %c0_222] : memref<8x128xf32, #tpu.memory_space<vmem>>, vector<8x128xf32>
    tpu.vector_store %arg7[%c0_221, %c0_222], %232 {strides = array<i32>} : memref<8x128xf32, #tpu.memory_space<vmem>>, vector<8x128xf32>,
    return
  }
  func.func @transform_0(%arg0: i32) -> (i32, i32, i32) {
    %c0_i32 = arith.constant 0 : i32
    %c0_i32_0 = arith.constant 0 : i32
    %c0_i32_1 = arith.constant 0 : i32
    return %arg0, %c0_i32, %c0_i32_0 : i32, i32, i32
  }
  func.func @transform_1(%arg0: i32) -> (i32, i32) {
    %c0_i32 = arith.constant 0 : i32
    %c0_i32_0 = arith.constant 0 : i32
    %c0_i32_1 = arith.constant 0 : i32
    return %c0_i32, %c0_i32_0 : i32, i32
  }
  func.func @transform_2(%arg0: i32) -> (i32, i32) {
    %c0_i32 = arith.constant 0 : i32
    %c0_i32_0 = arith.constant 0 : i32
    %c0_i32_1 = arith.constant 0 : i32
    return %c0_i32, %c0_i32_0 : i32, i32
  }
  func.func @transform_3(%arg0: i32) -> (i32, i32) {
    %c0_i32 = arith.constant 0 : i32
    %c0_i32_0 = arith.constant 0 : i32
    %c0_i32_1 = arith.constant 0 : i32
    return %c0_i32, %c0_i32_0 : i32, i32
  }
  func.func @transform_4(%arg0: i32) -> (i32, i32) {
    %c0_i32 = arith.constant 0 : i32
    %c0_i32_0 = arith.constant 0 : i32
    %c0_i32_1 = arith.constant 0 : i32
    return %c0_i32, %c0_i32_0 : i32, i32
  }
  func.func @transform_5(%arg0: i32) -> (i32, i32) {
    %c0_i32 = arith.constant 0 : i32
    %c0_i32_0 = arith.constant 0 : i32
    %c0_i32_1 = arith.constant 0 : i32
    return %c0_i32, %c0_i32_0 : i32, i32
  }
  func.func @transform_6(%arg0: i32) -> (i32, i32) {
    %c0_i32 = arith.constant 0 : i32
    %c0_i32_0 = arith.constant 0 : i32
    return %arg0, %c0_i32 : i32, i32
  }
}

</mosaic_0001>

<llo_original>
// kernel: backbone_forward.1
$region0: #{backbone_forward.1}
  #allocation0 [shape = 'u32[]', space=smem, size = 0x4, offset = 0x4, fixed_abs, tag = 'smem constant byte address 0x4 - core index']
  #allocation1 [shape = 'u32[72,128]{1,0:T(1,128)}', space=vmem, size = 0x9000, scoped, tag = 'internal scratch']
  #allocation2 [shape = 'f32[36,286]{1,0:T(8,128)}', space=vmem, size = 0xf000, scoped, tag = 'scratch operand']
  #allocation3 [shape = 'f32[8,16]{1,0:T(8,128)}', space=vmem, size = 0x1000, scoped, tag = 'scratch operand']
  %s0 = inlined_call_operand.vmem [shape: f32[8,4,324], index: 0, kind: input, shape index: {}]
  %s1 = inlined_call_operand.vmem [shape: f32[16,36], index: 1, kind: input, shape index: {}]
  %s2 = inlined_call_operand.vmem [shape: f32[16,1], index: 2, kind: input, shape index: {}]
  %s3 = inlined_call_operand.vmem [shape: f32[1,286], index: 3, kind: input, shape index: {}]
  %s4 = inlined_call_operand.vmem [shape: f32[16,128], index: 4, kind: input, shape index: {}]
  %s5 = inlined_call_operand.vmem [shape: f32[1,128], index: 5, kind: input, shape index: {}]
  %s6 = inlined_call_operand.vmem [shape: f32[8,128], index: 6, kind: output, shape index: {}]
  %s7 = sld [smem:[#allocation0]]
  $region34: #{backbone_forward.1} parent=0
    _
  %s9 = ssub.s32 1, %s7
  %s10 = scalar_select 0, %s9, %s7
  // Predicated region
  $region2: #{backbone_forward.1} parent=0 // pred_check
    _
  $region3: #{backbone_forward.1} parent=0 // pred_check_branch
    %12 = sbr.rel (0) target = $region5
  $region4: #{backbone_forward.1} parent=0 // pred_region
    _
  $region5: #{backbone_forward.1} parent=0 // pred_fallthru
    _
  // Predicated region
  $region6: #{backbone_forward.1} parent=0 // pred_check
    _
  $region7: #{backbone_forward.1} parent=0 // pred_check_branch
    %14 = sbr.rel (0) target = $region9
  $region8: #{backbone_forward.1} parent=0 // pred_region
    _
  $region9: #{backbone_forward.1} parent=0 // pred_fallthru
    _
  // Predicated region
  $region10: #{backbone_forward.1} parent=0 // pred_check
    _
  $region11: #{backbone_forward.1} parent=0 // pred_check_branch
    %16 = sbr.rel (0) target = $region13
  $region12: #{backbone_forward.1} parent=0 // pred_region
    _
  $region13: #{backbone_forward.1} parent=0 // pred_fallthru
    _
  // Predicated region
  $region14: #{backbone_forward.1} parent=0 // pred_check
    _
  $region15: #{backbone_forward.1} parent=0 // pred_check_branch
    %18 = sbr.rel (0) target = $region17
  $region16: #{backbone_forward.1} parent=0 // pred_region
    _
  $region17: #{backbone_forward.1} parent=0 // pred_fallthru
    _
  // Predicated region
  $region18: #{backbone_forward.1} parent=0 // pred_check
    _
  $region19: #{backbone_forward.1} parent=0 // pred_check_branch
    %20 = sbr.rel (0) target = $region21
  $region20: #{backbone_forward.1} parent=0 // pred_region
    _
  $region21: #{backbone_forward.1} parent=0 // pred_fallthru
    _
  // Predicated region
  $region22: #{backbone_forward.1} parent=0 // pred_check
    _
  $region23: #{backbone_forward.1} parent=0 // pred_check_branch
    %22 = sbr.rel (0) target = $region25
  $region24: #{backbone_forward.1} parent=0 // pred_region
    _
  $region25: #{backbone_forward.1} parent=0 // pred_fallthru
    _
  %v23 = vld [vmem:[%s1] sm:$0xff]
  %v24 = vld [vmem:[%s1 + $0x8] sm:$0xff]
  %v25 = vld [vmem:[%s2] sm:$0xff]
  %v26 = vld [vmem:[%s2 + $0x8] sm:$0xff]
  %v27 = vld [vmem:[%s3] sm:$0x7]
  %v28 = vld [vmem:[%s0] sm:$0xff]
  %v29 = vld [vmem:[%s0 + $0x8] sm:$0xf]
  %32 = vst [vmem:[#allocation1] ss:$2 sm:$0xff] %v28
  %s33 = scalar_lea.vmem [#allocation1], 16
  %34 = vst [vmem:[%s33] ss:$2 sm:$0xff] %v29
  %v35 = vld.sshfl [vmem:[#allocation1] sm:$0xff pattern:$0x75316420]
  %v36 = vld.sshfl [vmem:[#allocation1 + $0x8] sm:$0xff pattern:$0x75316420]
  %v37 = vld.sshfl [vmem:[#allocation1 + $0x10] sm:$0xff pattern:$0x75316420]
  %41 = vst [vmem:[#allocation2] sm:$0xf] %v35
  %42 = vst [vmem:[#allocation2 + $0x8] sm:$0xf] %v36
  %vm43 = vcmask 240640
  %44 = vst.msk [vmem:[#allocation2 + $0x10] sm:$0xf] %vm43, %v37
  %s45 = scalar_lea.vmem [#allocation1], 1
  %46 = vst [vmem:[%s45] ss:$2 sm:$0xff] %v28
  %s47 = scalar_lea.vmem [#allocation1], 17
  %48 = vst [vmem:[%s47] ss:$2 sm:$0xff] %v29
  %v49 = vld.sshfl [vmem:[#allocation1] sm:$0xff pattern:$0x75316420]
  %v50 = vld.sshfl [vmem:[#allocation1 + $0x8] sm:$0xff pattern:$0x75316420]
  %v51 = vld.sshfl [vmem:[#allocation1 + $0x10] sm:$0xff pattern:$0x75316420]
  %52 = vrot.lane.b32.xlu0 %v49, 127
  %v53 = vpop.permute.xlu0 %52
  %54 = vrot.lane.b32.xlu0 %v50, 127
  %v55 = vpop.permute.xlu0 %54
  %56 = vrot.lane.b32.xlu0 %v51, 127
  %v57 = vpop.permute.xlu0 %56
  %vm58 = vcmask 1039360
  %v59 = vsel %vm58, %v53, %v55
  %v60 = vsel %vm58, %v55, %v57
  %64 = vst [vmem:[#allocation2] sm:$0xf0] %v59
  %65 = vst [vmem:[#allocation2 + $0x8] sm:$0xf0] %v60
  %vm66 = vcmask 244740
  %67 = vst.msk [vmem:[#allocation2 + $0x10] sm:$0xf0] %vm66, %v57
  %68 = vst [vmem:[#allocation1] ss:$2 sm:$0xff] %v28
  %s69 = scalar_lea.vmem [#allocation1], 16
  %70 = vst [vmem:[%s69] ss:$2 sm:$0xff] %v29
  %v71 = vld.sshfl [vmem:[#allocation1] sm:$0xff pattern:$0x75316420]
  %v72 = vld.sshfl [vmem:[#allocation1 + $0x8] sm:$0xff pattern:$0x75316420]
  %v73 = vld.sshfl [vmem:[#allocation1 + $0x10] sm:$0xff pattern:$0x75316420]
  %74 = vrot.lane.b32.xlu0 %v71, 126
  %v75 = vpop.permute.xlu0 %74
  %76 = vrot.lane.b32.xlu0 %v72, 126
  %v77 = vpop.permute.xlu0 %76
  %78 = vrot.lane.b32.xlu0 %v73, 126
  %v79 = vpop.permute.xlu0 %78
  %vm80 = vcmask 1031168
  %v81 = vsel %vm80, %v75, %v77
  %v82 = vsel %vm80, %v77, %v79
  %86 = vst [vmem:[#allocation2 + $0x18] sm:$0xf] %v81
  %87 = vst [vmem:[#allocation2 + $0x20] sm:$0xf] %v82
  %88 = vst.msk [vmem:[#allocation2 + $0x28] sm:$0xf] %vm43, %v79
  %s89 = scalar_lea.vmem [#allocation1], 1
  %90 = vst [vmem:[%s89] ss:$2 sm:$0xff] %v28
  %s91 = scalar_lea.vmem [#allocation1], 17
  %92 = vst [vmem:[%s91] ss:$2 sm:$0xff] %v29
  %v93 = vld.sshfl [vmem:[#allocation1] sm:$0xff pattern:$0x75316420]
  %v94 = vld.sshfl [vmem:[#allocation1 + $0x8] sm:$0xff pattern:$0x75316420]
  %v95 = vld.sshfl [vmem:[#allocation1 + $0x10] sm:$0xff pattern:$0x75316420]
  %96 = vrot.lane.b32.xlu0 %v93, 110
  %v97 = vpop.permute.xlu0 %96
  %98 = vrot.lane.b32.xlu0 %v94, 110
  %v99 = vpop.permute.xlu0 %98
  %100 = vrot.lane.b32.xlu0 %v95, 110
  %v101 = vpop.permute.xlu0 %100
  %vm102 = vcmask 900096
  %v103 = vsel %vm102, %v97, %v99
  %v104 = vsel %vm102, %v99, %v101
  %108 = vst [vmem:[#allocation2 + $0x18] sm:$0xf0] %v103
  %109 = vst [vmem:[#allocation2 + $0x20] sm:$0xf0] %v104
  %110 = vst.msk [vmem:[#allocation2 + $0x28] sm:$0xf0] %vm66, %v101
  %111 = vst [vmem:[#allocation1] ss:$2 sm:$0xff] %v28
  %s112 = scalar_lea.vmem [#allocation1], 16
  %113 = vst [vmem:[%s112] ss:$2 sm:$0xff] %v29
  %v114 = vld.sshfl [vmem:[#allocation1] sm:$0xff pattern:$0x75316420]
  %v115 = vld.sshfl [vmem:[#allocation1 + $0x8] sm:$0xff pattern:$0x75316420]
  %v116 = vld.sshfl [vmem:[#allocation1 + $0x10] sm:$0xff pattern:$0x75316420]
  %117 = vrot.lane.b32.xlu0 %v114, 109
  %v118 = vpop.permute.xlu0 %117
  %119 = vrot.lane.b32.xlu0 %v115, 109
  %v120 = vpop.permute.xlu0 %119
  %121 = vrot.lane.b32.xlu0 %v116, 109
  %v122 = vpop.permute.xlu0 %121
  %vm123 = vcmask 891904
  %v124 = vsel %vm123, %v118, %v120
  %v125 = vsel %vm123, %v120, %v122
  %129 = vst [vmem:[#allocation2 + $0x30] sm:$0xf] %v124
  %130 = vst [vmem:[#allocation2 + $0x38] sm:$0xf] %v125
  %131 = vst.msk [vmem:[#allocation2 + $0x40] sm:$0xf] %vm43, %v122
  %s132 = scalar_lea.vmem [#allocation1], 1
  %133 = vst [vmem:[%s132] ss:$2 sm:$0xff] %v28
  %s134 = scalar_lea.vmem [#allocation1], 17
  %135 = vst [vmem:[%s134] ss:$2 sm:$0xff] %v29
  %v136 = vld.sshfl [vmem:[#allocation1] sm:$0xff pattern:$0x75316420]
  %v137 = vld.sshfl [vmem:[#allocation1 + $0x8] sm:$0xff pattern:$0x75316420]
  %v138 = vld.sshfl [vmem:[#allocation1 + $0x10] sm:$0xff pattern:$0x75316420]
  %139 = vrot.lane.b32.xlu0 %v136, 108
  %v140 = vpop.permute.xlu0 %139
  %141 = vrot.lane.b32.xlu0 %v137, 108
  %v142 = vpop.permute.xlu0 %141
  %143 = vrot.lane.b32.xlu0 %v138, 108
  %v144 = vpop.permute.xlu0 %143
  %vm145 = vcmask 883712
  %v146 = vsel %vm145, %v140, %v142
  %v147 = vsel %vm145, %v142, %v144
  %151 = vst [vmem:[#allocation2 + $0x30] sm:$0xf0] %v146
  %152 = vst [vmem:[#allocation2 + $0x38] sm:$0xf0] %v147
  %153 = vst.msk [vmem:[#allocation2 + $0x40] sm:$0xf0] %vm66, %v144
  %154 = vst [vmem:[#allocation1] ss:$2 sm:$0xff] %v28
  %s155 = scalar_lea.vmem [#allocation1], 16
  %156 = vst [vmem:[%s155] ss:$2 sm:$0xff] %v29
  %v157 = vld.sshfl [vmem:[#allocation1] sm:$0xff pattern:$0x75316420]
  %v158 = vld.sshfl [vmem:[#allocation1 + $0x8] sm:$0xff pattern:$0x75316420]
  %v159 = vld.sshfl [vmem:[#allocation1 + $0x10] sm:$0xff pattern:$0x75316420]
  %160 = vrot.lane.b32.xlu0 %v157, 92
  %v161 = vpop.permute.xlu0 %160
  %162 = vrot.lane.b32.xlu0 %v158, 92
  %v163 = vpop.permute.xlu0 %162
  %164 = vrot.lane.b32.xlu0 %v159, 92
  %v165 = vpop.permute.xlu0 %164
  %vm166 = vcmask 752640
  %v167 = vsel %vm166, %v161, %v163
  %v168 = vsel %vm166, %v163, %v165
  %172 = vst [vmem:[#allocation2 + $0x48] sm:$0xf] %v167
  %173 = vst [vmem:[#allocation2 + $0x50] sm:$0xf] %v168
  %174 = vst.msk [vmem:[#allocation2 + $0x58] sm:$0xf] %vm43, %v165
  %s175 = scalar_lea.vmem [#allocation1], 1
  %176 = vst [vmem:[%s175] ss:$2 sm:$0xff] %v28
  %s177 = scalar_lea.vmem [#allocation1], 17
  %178 = vst [vmem:[%s177] ss:$2 sm:$0xff] %v29
  %v179 = vld.sshfl [vmem:[#allocation1] sm:$0xff pattern:$0x75316420]
  %v180 = vld.sshfl [vmem:[#allocation1 + $0x8] sm:$0xff pattern:$0x75316420]
  %v181 = vld.sshfl [vmem:[#allocation1 + $0x10] sm:$0xff pattern:$0x75316420]
  %182 = vrot.lane.b32.xlu0 %v179, 91
  %v183 = vpop.permute.xlu0 %182
  %184 = vrot.lane.b32.xlu0 %v180, 91
  %v185 = vpop.permute.xlu0 %184
  %186 = vrot.lane.b32.xlu0 %v181, 91
  %v187 = vpop.permute.xlu0 %186
  %vm188 = vcmask 744448
  %v189 = vsel %vm188, %v183, %v185
  %v190 = vsel %vm188, %v185, %v187
  %194 = vst [vmem:[#allocation2 + $0x48] sm:$0xf0] %v189
  %195 = vst [vmem:[#allocation2 + $0x50] sm:$0xf0] %v190
  %196 = vst.msk [vmem:[#allocation2 + $0x58] sm:$0xf0] %vm66, %v187
  %197 = vst [vmem:[#allocation1] ss:$2 sm:$0xff] %v28
  %s198 = scalar_lea.vmem [#allocation1], 16
  %199 = vst [vmem:[%s198] ss:$2 sm:$0xff] %v29
  %v200 = vld.sshfl [vmem:[#allocation1] sm:$0xff pattern:$0x75316420]
  %v201 = vld.sshfl [vmem:[#allocation1 + $0x8] sm:$0xff pattern:$0x75316420]
  %v202 = vld.sshfl [vmem:[#allocation1 + $0x10] sm:$0xff pattern:$0x75316420]
  %203 = vrot.lane.b32.xlu0 %v200, 90
  %v204 = vpop.permute.xlu0 %203
  %205 = vrot.lane.b32.xlu0 %v201, 90
  %v206 = vpop.permute.xlu0 %205
  %207 = vrot.lane.b32.xlu0 %v202, 90
  %v208 = vpop.permute.xlu0 %207
  %vm209 = vcmask 736256
  %v210 = vsel %vm209, %v204, %v206
  %v211 = vsel %vm209, %v206, %v208
  %215 = vst [vmem:[#allocation2 + $0x60] sm:$0xf] %v210
  %216 = vst [vmem:[#allocation2 + $0x68] sm:$0xf] %v211
  %217 = vst.msk [vmem:[#allocation2 + $0x70] sm:$0xf] %vm43, %v208
  %v218 = vld [vmem:[#allocation2] sm:$0xff]
  %v219 = vld [vmem:[#allocation2 + $0x8] sm:$0xff]
  %v220 = vld [vmem:[#allocation2 + $0x10] sm:$0xff]
  %v221 = vld [vmem:[#allocation2 + $0x18] sm:$0xff]
  %v222 = vld [vmem:[#allocation2 + $0x20] sm:$0xff]
  %v223 = vld [vmem:[#allocation2 + $0x28] sm:$0xff]
  %v224 = vld [vmem:[#allocation2 + $0x30] sm:$0xff]
  %v225 = vld [vmem:[#allocation2 + $0x38] sm:$0xff]
  %v226 = vld [vmem:[#allocation2 + $0x40] sm:$0xff]
  %v227 = vld [vmem:[#allocation2 + $0x48] sm:$0xff]
  %v228 = vld [vmem:[#allocation2 + $0x50] sm:$0xff]
  %v229 = vld [vmem:[#allocation2 + $0x58] sm:$0xff]
  %v230 = vld [vmem:[#allocation2 + $0x60] sm:$0xf]
  %v231 = vld [vmem:[#allocation2 + $0x68] sm:$0xf]
  %v232 = vld [vmem:[#allocation2 + $0x70] sm:$0xf]
  %234 = vset.pattern.permute.xlu0 0
  %235 = vperm.xlu0 %234, %v25
  %v236 = vpop.permute.xlu0 %235
  %239 = vset.pattern.permute.xlu0 0
  %240 = vperm.xlu0 %239, %v26
  %v241 = vpop.permute.xlu0 %240
  %vm243 = vcmask 293888
  %v245 = vsel %vm243, %v23, 0
  %v248 = vsel %vm243, %v24, 0
  %vm250 = vcmask 1043456
  %v252 = vsel %vm250, %v230, 0
  %v255 = vsel %vm250, %v231, 0
  %v258 = vsel %vm250, %v232, 0
  %260 = vmatpush.msra.mxu0 0.0
  %261 = vmatpush.msra.mxu0 0.0
  %262 = vmatpush.msra.mxu0 0.0
  %263 = vmatpush.msra.mxu0 0.0
  %264 = vmatpush.msra.mxu0 0.0
  %265 = vmatpush.msra.mxu0 0.0
  %266 = vmatpush.msra.mxu0 0.0
  %267 = vmatpush.msra.mxu0 0.0
  %268 = vmatpush.msra.mxu0 0.0
  %269 = vmatpush.msra.mxu0 0.0
  %270 = vmatpush.msra.mxu0 0.0
  %271 = vmatpush.msra.mxu0 %v252
  %272 = vmatpush.msra.mxu0 %v227
  %273 = vmatpush.msra.mxu0 %v224
  %274 = vmatpush.msra.mxu0 %v221
  %275 = vmatpush.msra.mxu0 %v218
  %276 = vmatmul.f32.gmra.mxu0 %v245
  %v277 = vpop.f32.mrf.mxu0
  %v278 = vadd.f32 %v236, %v277
  %279 = vmatmul.f32.gmra.mxu0 %v248
  %v280 = vpop.f32.mrf.mxu0
  %v281 = vadd.f32 %v241, %v280
  %282 = vdwg.mxu0
  %283 = vmatpush.msra.mxu0 0.0
  %284 = vmatpush.msra.mxu0 0.0
  %285 = vmatpush.msra.mxu0 0.0
  %286 = vmatpush.msra.mxu0 0.0
  %287 = vmatpush.msra.mxu0 0.0
  %288 = vmatpush.msra.mxu0 0.0
  %289 = vmatpush.msra.mxu0 0.0
  %290 = vmatpush.msra.mxu0 0.0
  %291 = vmatpush.msra.mxu0 0.0
  %292 = vmatpush.msra.mxu0 0.0
  %293 = vmatpush.msra.mxu0 0.0
  %294 = vmatpush.msra.mxu0 %v255
  %295 = vmatpush.msra.mxu0 %v228
  %296 = vmatpush.msra.mxu0 %v225
  %297 = vmatpush.msra.mxu0 %v222
  %298 = vmatpush.msra.mxu0 %v219
  %299 = vmatmul.f32.gmra.mxu0 %v245
  %v300 = vpop.f32.mrf.mxu0
  %v301 = vadd.f32 %v236, %v300
  %302 = vmatmul.f32.gmra.mxu0 %v248
  %v303 = vpop.f32.mrf.mxu0
  %v304 = vadd.f32 %v241, %v303
  %305 = vdwg.mxu0
  %306 = vmatpush.msra.mxu0 0.0
  %307 = vmatpush.msra.mxu0 0.0
  %308 = vmatpush.msra.mxu0 0.0
  %309 = vmatpush.msra.mxu0 0.0
  %310 = vmatpush.msra.mxu0 0.0
  %311 = vmatpush.msra.mxu0 0.0
  %312 = vmatpush.msra.mxu0 0.0
  %313 = vmatpush.msra.mxu0 0.0
  %314 = vmatpush.msra.mxu0 0.0
  %315 = vmatpush.msra.mxu0 0.0
  %316 = vmatpush.msra.mxu0 0.0
  %317 = vmatpush.msra.mxu0 %v258
  %318 = vmatpush.msra.mxu0 %v229
  %319 = vmatpush.msra.mxu0 %v226
  %320 = vmatpush.msra.mxu0 %v223
  %321 = vmatpush.msra.mxu0 %v220
  %322 = vmatmul.f32.gmra.mxu0 %v245
  %v323 = vpop.f32.mrf.mxu0
  %v324 = vadd.f32 %v236, %v323
  %325 = vmatmul.f32.gmra.mxu0 %v248
  %v326 = vpop.f32.mrf.mxu0
  %v327 = vadd.f32 %v241, %v326
  %328 = vdwg.mxu0
  %v329 = vmax.f32 %v278, 0.0
  %v330 = vmax.f32 %v301, 0.0
  %v331 = vmax.f32 %v324, 0.0
  %v332 = vmax.f32 %v281, 0.0
  %v333 = vmax.f32 %v304, 0.0
  %v334 = vmax.f32 %v327, 0.0
  %v336 = vperm.slane %v27, 0
  %v337 = vperm.slane %v27, 1
  %v338 = vperm.slane %v27, 2
  %vm341 = vcmask 244736
  %v342 = vsel %vm341, %v338, 0
  %v345 = vsel %vm341, %v331, 0
  %v348 = vsel %vm341, %v334, 0
  %350 = vmatpush.xpose.msra.mxu0 0.0
  %351 = vmatpush.xpose.msra.mxu0 0.0
  %352 = vmatpush.xpose.msra.mxu0 0.0
  %353 = vmatpush.xpose.msra.mxu0 0.0
  %354 = vmatpush.xpose.msra.mxu0 0.0
  %355 = vmatpush.xpose.msra.mxu0 0.0
  %356 = vmatpush.xpose.msra.mxu0 0.0
  %357 = vmatpush.xpose.msra.mxu0 0.0
  %358 = vmatpush.xpose.msra.mxu0 0.0
  %359 = vmatpush.xpose.msra.mxu0 0.0
  %360 = vmatpush.xpose.msra.mxu0 0.0
  %361 = vmatpush.xpose.msra.mxu0 0.0
  %362 = vmatpush.xpose.msra.mxu0 0.0
  %363 = vmatpush.xpose.msra.mxu0 0.0
  %364 = vmatpush.xpose.msra.mxu0 %v332
  %365 = vmatpush.xpose.msra.mxu0 %v329
  %366 = vmatmul.f32.gmra.mxu0 %v336
  %v367 = vpop.f32.mrf.mxu0
  %v368 = vadd.f32 0.0, %v367
  %369 = vdwg.mxu0
  %370 = vmatpush.xpose.msra.mxu0 0.0
  %371 = vmatpush.xpose.msra.mxu0 0.0
  %372 = vmatpush.xpose.msra.mxu0 0.0
  %373 = vmatpush.xpose.msra.mxu0 0.0
  %374 = vmatpush.xpose.msra.mxu0 0.0
  %375 = vmatpush.xpose.msra.mxu0 0.0
  %376 = vmatpush.xpose.msra.mxu0 0.0
  %377 = vmatpush.xpose.msra.mxu0 0.0
  %378 = vmatpush.xpose.msra.mxu0 0.0
  %379 = vmatpush.xpose.msra.mxu0 0.0
  %380 = vmatpush.xpose.msra.mxu0 0.0
  %381 = vmatpush.xpose.msra.mxu0 0.0
  %382 = vmatpush.xpose.msra.mxu0 0.0
  %383 = vmatpush.xpose.msra.mxu0 0.0
  %384 = vmatpush.xpose.msra.mxu0 %v333
  %385 = vmatpush.xpose.msra.mxu0 %v330
  %386 = vmatmul.f32.gmra.mxu0 %v337
  %v387 = vpop.f32.mrf.mxu0
  %v388 = vadd.f32 %v368, %v387
  %389 = vdwg.mxu0
  %390 = vmatpush.xpose.msra.mxu0 0.0
  %391 = vmatpush.xpose.msra.mxu0 0.0
  %392 = vmatpush.xpose.msra.mxu0 0.0
  %393 = vmatpush.xpose.msra.mxu0 0.0
  %394 = vmatpush.xpose.msra.mxu0 0.0
  %395 = vmatpush.xpose.msra.mxu0 0.0
  %396 = vmatpush.xpose.msra.mxu0 0.0
  %397 = vmatpush.xpose.msra.mxu0 0.0
  %398 = vmatpush.xpose.msra.mxu0 0.0
  %399 = vmatpush.xpose.msra.mxu0 0.0
  %400 = vmatpush.xpose.msra.mxu0 0.0
  %401 = vmatpush.xpose.msra.mxu0 0.0
  %402 = vmatpush.xpose.msra.mxu0 0.0
  %403 = vmatpush.xpose.msra.mxu0 0.0
  %404 = vmatpush.xpose.msra.mxu0 %v348
  %405 = vmatpush.xpose.msra.mxu0 %v345
  %406 = vmatmul.f32.gmra.mxu0 %v342
  %v407 = vpop.f32.mrf.mxu0
  %v408 = vadd.f32 %v388, %v407
  %409 = vdwg.mxu0
  %vm410 = vcmask 122880
  %411 = vst.msk [vmem:[#allocation3] sm:$0x1] %vm410, %v408
  %s412 = scalar_lea.vmem %s0, 12
  %v413 = vld [vmem:[%s412] sm:$0xff]
  %v414 = vld [vmem:[%s412 + $0x8] sm:$0xf]
  %417 = vst [vmem:[#allocation1] ss:$2 sm:$0xff] %v413
  %s418 = scalar_lea.vmem [#allocation1], 16
  %419 = vst [vmem:[%s418] ss:$2 sm:$0xff] %v414
  %v420 = vld.sshfl [vmem:[#allocation1] sm:$0xff pattern:$0x75316420]
  %v421 = vld.sshfl [vmem:[#allocation1 + $0x8] sm:$0xff pattern:$0x75316420]
  %v422 = vld.sshfl [vmem:[#allocation1 + $0x10] sm:$0xff pattern:$0x75316420]
  %426 = vst [vmem:[#allocation2] sm:$0xf] %v420
  %427 = vst [vmem:[#allocation2 + $0x8] sm:$0xf] %v421
  %428 = vst.msk [vmem:[#allocation2 + $0x10] sm:$0xf] %vm43, %v422
  %s429 = scalar_lea.vmem [#allocation1], 1
  %430 = vst [vmem:[%s429] ss:$2 sm:$0xff] %v413
  %s431 = scalar_lea.vmem [#allocation1], 17
  %432 = vst [vmem:[%s431] ss:$2 sm:$0xff] %v414
  %v433 = vld.sshfl [vmem:[#allocation1] sm:$0xff pattern:$0x75316420]
  %v434 = vld.sshfl [vmem:[#allocation1 + $0x8] sm:$0xff pattern:$0x75316420]
  %v435 = vld.sshfl [vmem:[#allocation1 + $0x10] sm:$0xff pattern:$0x75316420]
  %436 = vrot.lane.b32.xlu0 %v433, 127
  %v437 = vpop.permute.xlu0 %436
  %438 = vrot.lane.b32.xlu0 %v434, 127
  %v439 = vpop.permute.xlu0 %438
  %440 = vrot.lane.b32.xlu0 %v435, 127
  %v441 = vpop.permute.xlu0 %440
  %v442 = vsel %vm58, %v437, %v439
  %v443 = vsel %vm58, %v439, %v441
  %447 = vst [vmem:[#allocation2] sm:$0xf0] %v442
  %448 = vst [vmem:[#allocation2 + $0x8] sm:$0xf0] %v443
  %449 = vst.msk [vmem:[#allocation2 + $0x10] sm:$0xf0] %vm66, %v441
  %450 = vst [vmem:[#allocation1] ss:$2 sm:$0xff] %v413
  %s451 = scalar_lea.vmem [#allocation1], 16
  %452 = vst [vmem:[%s451] ss:$2 sm:$0xff] %v414
  %v453 = vld.sshfl [vmem:[#allocation1] sm:$0xff pattern:$0x75316420]
  %v454 = vld.sshfl [vmem:[#allocation1 + $0x8] sm:$0xff pattern:$0x75316420]
  %v455 = vld.sshfl [vmem:[#allocation1 + $0x10] sm:$0xff pattern:$0x75316420]
  %456 = vrot.lane.b32.xlu0 %v453, 126
  %v457 = vpop.permute.xlu0 %456
  %458 = vrot.lane.b32.xlu0 %v454, 126
  %v459 = vpop.permute.xlu0 %458
  %460 = vrot.lane.b32.xlu0 %v455, 126
  %v461 = vpop.permute.xlu0 %460
  %v462 = vsel %vm80, %v457, %v459
  %v463 = vsel %vm80, %v459, %v461
  %467 = vst [vmem:[#allocation2 + $0x18] sm:$0xf] %v462
  %468 = vst [vmem:[#allocation2 + $0x20] sm:$0xf] %v463
  %469 = vst.msk [vmem:[#allocation2 + $0x28] sm:$0xf] %vm43, %v461
  %s470 = scalar_lea.vmem [#allocation1], 1
  %471 = vst [vmem:[%s470] ss:$2 sm:$0xff] %v413
  %s472 = scalar_lea.vmem [#allocation1], 17
  %473 = vst [vmem:[%s472] ss:$2 sm:$0xff] %v414
  %v474 = vld.sshfl [vmem:[#allocation1] sm:$0xff pattern:$0x75316420]
  %v475 = vld.sshfl [vmem:[#allocation1 + $0x8] sm:$0xff pattern:$0x75316420]
  %v476 = vld.sshfl [vmem:[#allocation1 + $0x10] sm:$0xff pattern:$0x75316420]
  %477 = vrot.lane.b32.xlu0 %v474, 110
  %v478 = vpop.permute.xlu0 %477
  %479 = vrot.lane.b32.xlu0 %v475, 110
  %v480 = vpop.permute.xlu0 %479
  %481 = vrot.lane.b32.xlu0 %v476, 110
  %v482 = vpop.permute.xlu0 %481
  %v483 = vsel %vm102, %v478, %v480
  %v484 = vsel %vm102, %v480, %v482
  %488 = vst [vmem:[#allocation2 + $0x18] sm:$0xf0] %v483
  %489 = vst [vmem:[#allocation2 + $0x20] sm:$0xf0] %v484
  %490 = vst.msk [vmem:[#allocation2 + $0x28] sm:$0xf0] %vm66, %v482
  %491 = vst [vmem:[#allocation1] ss:$2 sm:$0xff] %v413
  %s492 = scalar_lea.vmem [#allocation1], 16
  %493 = vst [vmem:[%s492] ss:$2 sm:$0xff] %v414
  %v494 = vld.sshfl [vmem:[#allocation1] sm:$0xff pattern:$0x75316420]
  %v495 = vld.sshfl [vmem:[#allocation1 + $0x8] sm:$0xff pattern:$0x75316420]
  %v496 = vld.sshfl [vmem:[#allocation1 + $0x10] sm:$0xff pattern:$0x75316420]
  %497 = vrot.lane.b32.xlu0 %v494, 109
  %v498 = vpop.permute.xlu0 %497
  %499 = vrot.lane.b32.xlu0 %v495, 109
  %v500 = vpop.permute.xlu0 %499
  %501 = vrot.lane.b32.xlu0 %v496, 109
  %v502 = vpop.permute.xlu0 %501
  %v503 = vsel %vm123, %v498, %v500
  %v504 = vsel %vm123, %v500, %v502
  %508 = vst [vmem:[#allocation2 + $0x30] sm:$0xf] %v503
  %509 = vst [vmem:[#allocation2 + $0x38] sm:$0xf] %v504
  %510 = vst.msk [vmem:[#allocation2 + $0x40] sm:$0xf] %vm43, %v502
  %s511 = scalar_lea.vmem [#allocation1], 1
  %512 = vst [vmem:[%s511] ss:$2 sm:$0xff] %v413
  %s513 = scalar_lea.vmem [#allocation1], 17
  %514 = vst [vmem:[%s513] ss:$2 sm:$0xff] %v414
  %v515 = vld.sshfl [vmem:[#allocation1] sm:$0xff pattern:$0x75316420]
  %v516 = vld.sshfl [vmem:[#allocation1 + $0x8] sm:$0xff pattern:$0x75316420]
  %v517 = vld.sshfl [vmem:[#allocation1 + $0x10] sm:$0xff pattern:$0x75316420]
  %518 = vrot.lane.b32.xlu0 %v515, 108
  %v519 = vpop.permute.xlu0 %518
  %520 = vrot.lane.b32.xlu0 %v516, 108
  %v521 = vpop.permute.xlu0 %520
  %522 = vrot.lane.b32.xlu0 %v517, 108
  %v523 = vpop.permute.xlu0 %522
  %v524 = vsel %vm145, %v519, %v521
  %v525 = vsel %vm145, %v521, %v523
  %529 = vst [vmem:[#allocation2 + $0x30] sm:$0xf0] %v524
  %530 = vst [vmem:[#allocation2 + $0x38] sm:$0xf0] %v525
  %531 = vst.msk [vmem:[#allocation2 + $0x40] sm:$0xf0] %vm66, %v523
  %532 = vst [vmem:[#allocation1] ss:$2 sm:$0xff] %v413
  %s533 = scalar_lea.vmem [#allocation1], 16
  %534 = vst [vmem:[%s533] ss:$2 sm:$0xff] %v414
  %v535 = vld.sshfl [vmem:[#allocation1] sm:$0xff pattern:$0x75316420]
  %v536 = vld.sshfl [vmem:[#allocation1 + $0x8] sm:$0xff pattern:$0x75316420]
  %v537 = vld.sshfl [vmem:[#allocation1 + $0x10] sm:$0xff pattern:$0x75316420]
  %538 = vrot.lane.b32.xlu0 %v535, 92
  %v539 = vpop.permute.xlu0 %538
  %540 = vrot.lane.b32.xlu0 %v536, 92
  %v541 = vpop.permute.xlu0 %540
  %542 = vrot.lane.b32.xlu0 %v537, 92
  %v543 = vpop.permute.xlu0 %542
  %v544 = vsel %vm166, %v539, %v541
  %v545 = vsel %vm166, %v541, %v543
  %549 = vst [vmem:[#allocation2 + $0x48] sm:$0xf] %v544
  %550 = vst [vmem:[#allocation2 + $0x50] sm:$0xf] %v545
  %551 = vst.msk [vmem:[#allocation2 + $0x58] sm:$0xf] %vm43, %v543
  %s552 = scalar_lea.vmem [#allocation1], 1
  %553 = vst [vmem:[%s552] ss:$2 sm:$0xff] %v413
  %s554 = scalar_lea.vmem [#allocation1], 17
  %555 = vst [vmem:[%s554] ss:$2 sm:$0xff] %v414
  %v556 = vld.sshfl [vmem:[#allocation1] sm:$0xff pattern:$0x75316420]
  %v557 = vld.sshfl [vmem:[#allocation1 + $0x8] sm:$0xff pattern:$0x75316420]
  %v558 = vld.sshfl [vmem:[#allocation1 + $0x10] sm:$0xff pattern:$0x75316420]
  %559 = vrot.lane.b32.xlu0 %v556, 91
  %v560 = vpop.permute.xlu0 %559
  %561 = vrot.lane.b32.xlu0 %v557, 91
  %v562 = vpop.permute.xlu0 %561
  %563 = vrot.lane.b32.xlu0 %v558, 91
  %v564 = vpop.permute.xlu0 %563
  %v565 = vsel %vm188, %v560, %v562
  %v566 = vsel %vm188, %v562, %v564
  %570 = vst [vmem:[#allocation2 + $0x48] sm:$0xf0] %v565
  %571 = vst [vmem:[#allocation2 + $0x50] sm:$0xf0] %v566
  %572 = vst.msk [vmem:[#allocation2 + $0x58] sm:$0xf0] %vm66, %v564
  %573 = vst [vmem:[#allocation1] ss:$2 sm:$0xff] %v413
  %s574 = scalar_lea.vmem [#allocation1], 16
  %575 = vst [vmem:[%s574] ss:$2 sm:$0xff] %v414
  %v576 = vld.sshfl [vmem:[#allocation1] sm:$0xff pattern:$0x75316420]
  %v577 = vld.sshfl [vmem:[#allocation1 + $0x8] sm:$0xff pattern:$0x75316420]
  %v578 = vld.sshfl [vmem:[#allocation1 + $0x10] sm:$0xff pattern:$0x75316420]
  %579 = vrot.lane.b32.xlu0 %v576, 90
  %v580 = vpop.permute.xlu0 %579
  %581 = vrot.lane.b32.xlu0 %v577, 90
  %v582 = vpop.permute.xlu0 %581
  %583 = vrot.lane.b32.xlu0 %v578, 90
  %v584 = vpop.permute.xlu0 %583
  %v585 = vsel %vm209, %v580, %v582
  %v586 = vsel %vm209, %v582, %v584
  %590 = vst [vmem:[#allocation2 + $0x60] sm:$0xf] %v585
  %591 = vst [vmem:[#allocation2 + $0x68] sm:$0xf] %v586
  %592 = vst.msk [vmem:[#allocation2 + $0x70] sm:$0xf] %vm43, %v584
  %v593 = vld [vmem:[#allocation2] sm:$0xff]
  %v594 = vld [vmem:[#allocation2 + $0x8] sm:$0xff]
  %v595 = vld [vmem:[#allocation2 + $0x10] sm:$0xff]
  %v596 = vld [vmem:[#allocation2 + $0x18] sm:$0xff]
  %v597 = vld [vmem:[#allocation2 + $0x20] sm:$0xff]
  %v598 = vld [vmem:[#allocation2 + $0x28] sm:$0xff]
  %v599 = vld [vmem:[#allocation2 + $0x30] sm:$0xff]
  %v600 = vld [vmem:[#allocation2 + $0x38] sm:$0xff]
  %v601 = vld [vmem:[#allocation2 + $0x40] sm:$0xff]
  %v602 = vld [vmem:[#allocation2 + $0x48] sm:$0xff]
  %v603 = vld [vmem:[#allocation2 + $0x50] sm:$0xff]
  %v604 = vld [vmem:[#allocation2 + $0x58] sm:$0xff]
  %v605 = vld [vmem:[#allocation2 + $0x60] sm:$0xf]
  %v606 = vld [vmem:[#allocation2 + $0x68] sm:$0xf]
  %v607 = vld [vmem:[#allocation2 + $0x70] sm:$0xf]
  %v609 = vsel %vm250, %v605, 0
  %v612 = vsel %vm250, %v606, 0
  %v615 = vsel %vm250, %v607, 0
  %617 = vmatpush.msra.mxu0 0.0
  %618 = vmatpush.msra.mxu0 0.0
  %619 = vmatpush.msra.mxu0 0.0
  %620 = vmatpush.msra.mxu0 0.0
  %621 = vmatpush.msra.mxu0 0.0
  %622 = vmatpush.msra.mxu0 0.0
  %623 = vmatpush.msra.mxu0 0.0
  %624 = vmatpush.msra.mxu0 0.0
  %625 = vmatpush.msra.mxu0 0.0
  %626 = vmatpush.msra.mxu0 0.0
  %627 = vmatpush.msra.mxu0 0.0
  %628 = vmatpush.msra.mxu0 %v609
  %629 = vmatpush.msra.mxu0 %v602
  %630 = vmatpush.msra.mxu0 %v599
  %631 = vmatpush.msra.mxu0 %v596
  %632 = vmatpush.msra.mxu0 %v593
  %633 = vmatmul.f32.gmra.mxu0 %v245
  %v634 = vpop.f32.mrf.mxu0
  %v635 = vadd.f32 %v236, %v634
  %636 = vmatmul.f32.gmra.mxu0 %v248
  %v637 = vpop.f32.mrf.mxu0
  %v638 = vadd.f32 %v241, %v637
  %639 = vdwg.mxu0
  %640 = vmatpush.msra.mxu0 0.0
  %641 = vmatpush.msra.mxu0 0.0
  %642 = vmatpush.msra.mxu0 0.0
  %643 = vmatpush.msra.mxu0 0.0
  %644 = vmatpush.msra.mxu0 0.0
  %645 = vmatpush.msra.mxu0 0.0
  %646 = vmatpush.msra.mxu0 0.0
  %647 = vmatpush.msra.mxu0 0.0
  %648 = vmatpush.msra.mxu0 0.0
  %649 = vmatpush.msra.mxu0 0.0
  %650 = vmatpush.msra.mxu0 0.0
  %651 = vmatpush.msra.mxu0 %v612
  %652 = vmatpush.msra.mxu0 %v603
  %653 = vmatpush.msra.mxu0 %v600
  %654 = vmatpush.msra.mxu0 %v597
  %655 = vmatpush.msra.mxu0 %v594
  %656 = vmatmul.f32.gmra.mxu0 %v245
  %v657 = vpop.f32.mrf.mxu0
  %v658 = vadd.f32 %v236, %v657
  %659 = vmatmul.f32.gmra.mxu0 %v248
  %v660 = vpop.f32.mrf.mxu0
  %v661 = vadd.f32 %v241, %v660
  %662 = vdwg.mxu0
  %663 = vmatpush.msra.mxu0 0.0
  %664 = vmatpush.msra.mxu0 0.0
  %665 = vmatpush.msra.mxu0 0.0
  %666 = vmatpush.msra.mxu0 0.0
  %667 = vmatpush.msra.mxu0 0.0
  %668 = vmatpush.msra.mxu0 0.0
  %669 = vmatpush.msra.mxu0 0.0
  %670 = vmatpush.msra.mxu0 0.0
  %671 = vmatpush.msra.mxu0 0.0
  %672 = vmatpush.msra.mxu0 0.0
  %673 = vmatpush.msra.mxu0 0.0
  %674 = vmatpush.msra.mxu0 %v615
  %675 = vmatpush.msra.mxu0 %v604
  %676 = vmatpush.msra.mxu0 %v601
  %677 = vmatpush.msra.mxu0 %v598
  %678 = vmatpush.msra.mxu0 %v595
  %679 = vmatmul.f32.gmra.mxu0 %v245
  %v680 = vpop.f32.mrf.mxu0
  %v681 = vadd.f32 %v236, %v680
  %682 = vmatmul.f32.gmra.mxu0 %v248
  %v683 = vpop.f32.mrf.mxu0
  %v684 = vadd.f32 %v241, %v683
  %685 = vdwg.mxu0
  %v686 = vmax.f32 %v635, 0.0
  %v687 = vmax.f32 %v658, 0.0
  %v688 = vmax.f32 %v681, 0.0
  %v689 = vmax.f32 %v638, 0.0
  %v690 = vmax.f32 %v661, 0.0
  %v691 = vmax.f32 %v684, 0.0
  %v693 = vsel %vm341, %v688, 0
  %v696 = vsel %vm341, %v691, 0
  %698 = vmatpush.xpose.msra.mxu0 0.0
  %699 = vmatpush.xpose.msra.mxu0 0.0
  %700 = vmatpush.xpose.msra.mxu0 0.0
  %701 = vmatpush.xpose.msra.mxu0 0.0
  %702 = vmatpush.xpose.msra.mxu0 0.0
  %703 = vmatpush.xpose.msra.mxu0 0.0
  %704 = vmatpush.xpose.msra.mxu0 0.0
  %705 = vmatpush.xpose.msra.mxu0 0.0
  %706 = vmatpush.xpose.msra.mxu0 0.0
  %707 = vmatpush.xpose.msra.mxu0 0.0
  %708 = vmatpush.xpose.msra.mxu0 0.0
  %709 = vmatpush.xpose.msra.mxu0 0.0
  %710 = vmatpush.xpose.msra.mxu0 0.0
  %711 = vmatpush.xpose.msra.mxu0 0.0
  %712 = vmatpush.xpose.msra.mxu0 %v689
  %713 = vmatpush.xpose.msra.mxu0 %v686
  %714 = vmatmul.f32.gmra.mxu0 %v336
  %v715 = vpop.f32.mrf.mxu0
  %v716 = vadd.f32 0.0, %v715
  %717 = vdwg.mxu0
  %718 = vmatpush.xpose.msra.mxu0 0.0
  %719 = vmatpush.xpose.msra.mxu0 0.0
  %720 = vmatpush.xpose.msra.mxu0 0.0
  %721 = vmatpush.xpose.msra.mxu0 0.0
  %722 = vmatpush.xpose.msra.mxu0 0.0
  %723 = vmatpush.xpose.msra.mxu0 0.0
  %724 = vmatpush.xpose.msra.mxu0 0.0
  %725 = vmatpush.xpose.msra.mxu0 0.0
  %726 = vmatpush.xpose.msra.mxu0 0.0
  %727 = vmatpush.xpose.msra.mxu0 0.0
  %728 = vmatpush.xpose.msra.mxu0 0.0
  %729 = vmatpush.xpose.msra.mxu0 0.0
  %730 = vmatpush.xpose.msra.mxu0 0.0
  %731 = vmatpush.xpose.msra.mxu0 0.0
  %732 = vmatpush.xpose.msra.mxu0 %v690
  %733 = vmatpush.xpose.msra.mxu0 %v687
  %734 = vmatmul.f32.gmra.mxu0 %v337
  %v735 = vpop.f32.mrf.mxu0
  %v736 = vadd.f32 %v716, %v735
  %737 = vdwg.mxu0
  %738 = vmatpush.xpose.msra.mxu0 0.0
  %739 = vmatpush.xpose.msra.mxu0 0.0
  %740 = vmatpush.xpose.msra.mxu0 0.0
  %741 = vmatpush.xpose.msra.mxu0 0.0
  %742 = vmatpush.xpose.msra.mxu0 0.0
  %743 = vmatpush.xpose.msra.mxu0 0.0
  %744 = vmatpush.xpose.msra.mxu0 0.0
  %745 = vmatpush.xpose.msra.mxu0 0.0
  %746 = vmatpush.xpose.msra.mxu0 0.0
  %747 = vmatpush.xpose.msra.mxu0 0.0
  %748 = vmatpush.xpose.msra.mxu0 0.0
  %749 = vmatpush.xpose.msra.mxu0 0.0
  %750 = vmatpush.xpose.msra.mxu0 0.0
  %751 = vmatpush.xpose.msra.mxu0 0.0
  %752 = vmatpush.xpose.msra.mxu0 %v696
  %753 = vmatpush.xpose.msra.mxu0 %v693
  %754 = vmatmul.f32.gmra.mxu0 %v342
  %v755 = vpop.f32.mrf.mxu0
  %v756 = vadd.f32 %v736, %v755
  %757 = vdwg.mxu0
  %758 = vst.msk [vmem:[#allocation3 + $0x1] sm:$0x1] %vm410, %v756
  %s759 = scalar_lea.vmem %s0, 24
  %v760 = vld [vmem:[%s759] sm:$0xff]
  %v761 = vld [vmem:[%s759 + $0x8] sm:$0xf]
  %764 = vst [vmem:[#allocation1] ss:$2 sm:$0xff] %v760
  %s765 = scalar_lea.vmem [#allocation1], 16
  %766 = vst [vmem:[%s765] ss:$2 sm:$0xff] %v761
  %v767 = vld.sshfl [vmem:[#allocation1] sm:$0xff pattern:$0x75316420]
  %v768 = vld.sshfl [vmem:[#allocation1 + $0x8] sm:$0xff pattern:$0x75316420]
  %v769 = vld.sshfl [vmem:[#allocation1 + $0x10] sm:$0xff pattern:$0x75316420]
  %773 = vst [vmem:[#allocation2] sm:$0xf] %v767
  %774 = vst [vmem:[#allocation2 + $0x8] sm:$0xf] %v768
  %775 = vst.msk [vmem:[#allocation2 + $0x10] sm:$0xf] %vm43, %v769
  %s776 = scalar_lea.vmem [#allocation1], 1
  %777 = vst [vmem:[%s776] ss:$2 sm:$0xff] %v760
  %s778 = scalar_lea.vmem [#allocation1], 17
  %779 = vst [vmem:[%s778] ss:$2 sm:$0xff] %v761
  %v780 = vld.sshfl [vmem:[#allocation1] sm:$0xff pattern:$0x75316420]
  %v781 = vld.sshfl [vmem:[#allocation1 + $0x8] sm:$0xff pattern:$0x75316420]
  %v782 = vld.sshfl [vmem:[#allocation1 + $0x10] sm:$0xff pattern:$0x75316420]
  %783 = vrot.lane.b32.xlu0 %v780, 127
  %v784 = vpop.permute.xlu0 %783
  %785 = vrot.lane.b32.xlu0 %v781, 127
  %v786 = vpop.permute.xlu0 %785
  %787 = vrot.lane.b32.xlu0 %v782, 127
  %v788 = vpop.permute.xlu0 %787
  %v789 = vsel %vm58, %v784, %v786
  %v790 = vsel %vm58, %v786, %v788
  %794 = vst [vmem:[#allocation2] sm:$0xf0] %v789
  %795 = vst [vmem:[#allocation2 + $0x8] sm:$0xf0] %v790
  %796 = vst.msk [vmem:[#allocation2 + $0x10] sm:$0xf0] %vm66, %v788
  %797 = vst [vmem:[#allocation1] ss:$2 sm:$0xff] %v760
  %s798 = scalar_lea.vmem [#allocation1], 16
  %799 = vst [vmem:[%s798] ss:$2 sm:$0xff] %v761
  %v800 = vld.sshfl [vmem:[#allocation1] sm:$0xff pattern:$0x75316420]
  %v801 = vld.sshfl [vmem:[#allocation1 + $0x8] sm:$0xff pattern:$0x75316420]
  %v802 = vld.sshfl [vmem:[#allocation1 + $0x10] sm:$0xff pattern:$0x75316420]
  %803 = vrot.lane.b32.xlu0 %v800, 126
  %v804 = vpop.permute.xlu0 %803
  %805 = vrot.lane.b32.xlu0 %v801, 126
  %v806 = vpop.permute.xlu0 %805
  %807 = vrot.lane.b32.xlu0 %v802, 126
  %v808 = vpop.permute.xlu0 %807
  %v809 = vsel %vm80, %v804, %v806
  %v810 = vsel %vm80, %v806, %v808
  %814 = vst [vmem:[#allocation2 + $0x18] sm:$0xf] %v809
  %815 = vst [vmem:[#allocation2 + $0x20] sm:$0xf] %v810
  %816 = vst.msk [vmem:[#allocation2 + $0x28] sm:$0xf] %vm43, %v808
  %s817 = scalar_lea.vmem [#allocation1], 1
  %818 = vst [vmem:[%s817] ss:$2 sm:$0xff] %v760
  %s819 = scalar_lea.vmem [#allocation1], 17
  %820 = vst [vmem:[%s819] ss:$2 sm:$0xff] %v761
  %v821 = vld.sshfl [vmem:[#allocation1] sm:$0xff pattern:$0x75316420]
  %v822 = vld.sshfl [vmem:[#allocation1 + $0x8] sm:$0xff pattern:$0x75316420]
  %v823 = vld.sshfl [vmem:[#allocation1 + $0x10] sm:$0xff pattern:$0x75316420]
  %824 = vrot.lane.b32.xlu0 %v821, 110
  %v825 = vpop.permute.xlu0 %824
  %826 = vrot.lane.b32.xlu0 %v822, 110
  %v827 = vpop.permute.xlu0 %826
  %828 = vrot.lane.b32.xlu0 %v823, 110
  %v829 = vpop.permute.xlu0 %828
  %v830 = vsel %vm102, %v825, %v827
  %v831 = vsel %vm102, %v827, %v829
  %835 = vst [vmem:[#allocation2 + $0x18] sm:$0xf0] %v830
  %836 = vst [vmem:[#allocation2 + $0x20] sm:$0xf0] %v831
  %837 = vst.msk [vmem:[#allocation2 + $0x28] sm:$0xf0] %vm66, %v829
  %838 = vst [vmem:[#allocation1] ss:$2 sm:$0xff] %v760
  %s839 = scalar_lea.vmem [#allocation1], 16
  %840 = vst [vmem:[%s839] ss:$2 sm:$0xff] %v761
  %v841 = vld.sshfl [vmem:[#allocation1] sm:$0xff pattern:$0x75316420]
  %v842 = vld.sshfl [vmem:[#allocation1 + $0x8] sm:$0xff pattern:$0x75316420]
  %v843 = vld.sshfl [vmem:[#allocation1 + $0x10] sm:$0xff pattern:$0x75316420]
  %844 = vrot.lane.b32.xlu0 %v841, 109
  %v845 = vpop.permute.xlu0 %844
  %846 = vrot.lane.b32.xlu0 %v842, 109
  %v847 = vpop.permute.xlu0 %846
  %848 = vrot.lane.b32.xlu0 %v843, 109
  %v849 = vpop.permute.xlu0 %848
  %v850 = vsel %vm123, %v845, %v847
  %v851 = vsel %vm123, %v847, %v849
  %855 = vst [vmem:[#allocation2 + $0x30] sm:$0xf] %v850
  %856 = vst [vmem:[#allocation2 + $0x38] sm:$0xf] %v851
  %857 = vst.msk [vmem:[#allocation2 + $0x40] sm:$0xf] %vm43, %v849
  %s858 = scalar_lea.vmem [#allocation1], 1
  %859 = vst [vmem:[%s858] ss:$2 sm:$0xff] %v760
  %s860 = scalar_lea.vmem [#allocation1], 17
  %861 = vst [vmem:[%s860] ss:$2 sm:$0xff] %v761
  %v862 = vld.sshfl [vmem:[#allocation1] sm:$0xff pattern:$0x75316420]
  %v863 = vld.sshfl [vmem:[#allocation1 + $0x8] sm:$0xff pattern:$0x75316420]
  %v864 = vld.sshfl [vmem:[#allocation1 + $0x10] sm:$0xff pattern:$0x75316420]
  %865 = vrot.lane.b32.xlu0 %v862, 108
  %v866 = vpop.permute.xlu0 %865
  %867 = vrot.lane.b32.xlu0 %v863, 108
  %v868 = vpop.permute.xlu0 %867
  %869 = vrot.lane.b32.xlu0 %v864, 108
  %v870 = vpop.permute.xlu0 %869
  %v871 = vsel %vm145, %v866, %v868
  %v872 = vsel %vm145, %v868, %v870
  %876 = vst [vmem:[#allocation2 + $0x30] sm:$0xf0] %v871
  %877 = vst [vmem:[#allocation2 + $0x38] sm:$0xf0] %v872
  %878 = vst.msk [vmem:[#allocation2 + $0x40] sm:$0xf0] %vm66, %v870
  %879 = vst [vmem:[#allocation1] ss:$2 sm:$0xff] %v760
  %s880 = scalar_lea.vmem [#allocation1], 16
  %881 = vst [vmem:[%s880] ss:$2 sm:$0xff] %v761
  %v882 = vld.sshfl [vmem:[#allocation1] sm:$0xff pattern:$0x75316420]
  %v883 = vld.sshfl [vmem:[#allocation1 + $0x8] sm:$0xff pattern:$0x75316420]
  %v884 = vld.sshfl [vmem:[#allocation1 + $0x10] sm:$0xff pattern:$0x75316420]
  %885 = vrot.lane.b32.xlu0 %v882, 92
  %v886 = vpop.permute.xlu0 %885
  %887 = vrot.lane.b32.xlu0 %v883, 92
  %v888 = vpop.permute.xlu0 %887
  %889 = vrot.lane.b32.xlu0 %v884, 92
  %v890 = vpop.permute.xlu0 %889
  %v891 = vsel %vm166, %v886, %v888
  %v892 = vsel %vm166, %v888, %v890
  %896 = vst [vmem:[#allocation2 + $0x48] sm:$0xf] %v891
  %897 = vst [vmem:[#allocation2 + $0x50] sm:$0xf] %v892
  %898 = vst.msk [vmem:[#allocation2 + $0x58] sm:$0xf] %vm43, %v890
  %s899 = scalar_lea.vmem [#allocation1], 1
  %900 = vst [vmem:[%s899] ss:$2 sm:$0xff] %v760
  %s901 = scalar_lea.vmem [#allocation1], 17
  %902 = vst [vmem:[%s901] ss:$2 sm:$0xff] %v761
  %v903 = vld.sshfl [vmem:[#allocation1] sm:$0xff pattern:$0x75316420]
  %v904 = vld.sshfl [vmem:[#allocation1 + $0x8] sm:$0xff pattern:$0x75316420]
  %v905 = vld.sshfl [vmem:[#allocation1 + $0x10] sm:$0xff pattern:$0x75316420]
  %906 = vrot.lane.b32.xlu0 %v903, 91
  %v907 = vpop.permute.xlu0 %906
  %908 = vrot.lane.b32.xlu0 %v904, 91
  %v909 = vpop.permute.xlu0 %908
  %910 = vrot.lane.b32.xlu0 %v905, 91
  %v911 = vpop.permute.xlu0 %910
  %v912 = vsel %vm188, %v907, %v909
  %v913 = vsel %vm188, %v909, %v911
  %917 = vst [vmem:[#allocation2 + $0x48] sm:$0xf0] %v912
  %918 = vst [vmem:[#allocation2 + $0x50] sm:$0xf0] %v913
  %919 = vst.msk [vmem:[#allocation2 + $0x58] sm:$0xf0] %vm66, %v911
  %920 = vst [vmem:[#allocation1] ss:$2 sm:$0xff] %v760
  %s921 = scalar_lea.vmem [#allocation1], 16
  %922 = vst [vmem:[%s921] ss:$2 sm:$0xff] %v761
  %v923 = vld.sshfl [vmem:[#allocation1] sm:$0xff pattern:$0x75316420]
  %v924 = vld.sshfl [vmem:[#allocation1 + $0x8] sm:$0xff pattern:$0x75316420]
  %v925 = vld.sshfl [vmem:[#allocation1 + $0x10] sm:$0xff pattern:$0x75316420]
  %926 = vrot.lane.b32.xlu0 %v923, 90
  %v927 = vpop.permute.xlu0 %926
  %928 = vrot.lane.b32.xlu0 %v924, 90
  %v929 = vpop.permute.xlu0 %928
  %930 = vrot.lane.b32.xlu0 %v925, 90
  %v931 = vpop.permute.xlu0 %930
  %v932 = vsel %vm209, %v927, %v929
  %v933 = vsel %vm209, %v929, %v931
  %937 = vst [vmem:[#allocation2 + $0x60] sm:$0xf] %v932
  %938 = vst [vmem:[#allocation2 + $0x68] sm:$0xf] %v933
  %939 = vst.msk [vmem:[#allocation2 + $0x70] sm:$0xf] %vm43, %v931
  %v940 = vld [vmem:[#allocation2] sm:$0xff]
  %v941 = vld [vmem:[#allocation2 + $0x8] sm:$0xff]
  %v942 = vld [vmem:[#allocation2 + $0x10] sm:$0xff]
  %v943 = vld [vmem:[#allocation2 + $0x18] sm:$0xff]
  %v944 = vld [vmem:[#allocation2 + $0x20] sm:$0xff]
  %v945 = vld [vmem:[#allocation2 + $0x28] sm:$0xff]
  %v946 = vld [vmem:[#allocation2 + $0x30] sm:$0xff]
  %v947 = vld [vmem:[#allocation2 + $0x38] sm:$0xff]
  %v948 = vld [vmem:[#allocation2 + $0x40] sm:$0xff]
  %v949 = vld [vmem:[#allocation2 + $0x48] sm:$0xff]
  %v950 = vld [vmem:[#allocation2 + $0x50] sm:$0xff]
  %v951 = vld [vmem:[#allocation2 + $0x58] sm:$0xff]
  %v952 = vld [vmem:[#allocation2 + $0x60] sm:$0xf]
  %v953 = vld [vmem:[#allocation2 + $0x68] sm:$0xf]
  %v954 = vld [vmem:[#allocation2 + $0x70] sm:$0xf]
  %v956 = vsel %vm250, %v952, 0
  %v959 = vsel %vm250, %v953, 0
  %v962 = vsel %vm250, %v954, 0
  %964 = vmatpush.msra.mxu0 0.0
  %965 = vmatpush.msra.mxu0 0.0
  %966 = vmatpush.msra.mxu0 0.0
  %967 = vmatpush.msra.mxu0 0.0
  %968 = vmatpush.msra.mxu0 0.0
  %969 = vmatpush.msra.mxu0 0.0
  %970 = vmatpush.msra.mxu0 0.0
  %971 = vmatpush.msra.mxu0 0.0
  %972 = vmatpush.msra.mxu0 0.0
  %973 = vmatpush.msra.mxu0 0.0
  %974 = vmatpush.msra.mxu0 0.0
  %975 = vmatpush.msra.mxu0 %v956
  %976 = vmatpush.msra.mxu0 %v949
  %977 = vmatpush.msra.mxu0 %v946
  %978 = vmatpush.msra.mxu0 %v943
  %979 = vmatpush.msra.mxu0 %v940
  %980 = vmatmul.f32.gmra.mxu0 %v245
  %v981 = vpop.f32.mrf.mxu0
  %v982 = vadd.f32 %v236, %v981
  %983 = vmatmul.f32.gmra.mxu0 %v248
  %v984 = vpop.f32.mrf.mxu0
  %v985 = vadd.f32 %v241, %v984
  %986 = vdwg.mxu0
  %987 = vmatpush.msra.mxu0 0.0
  %988 = vmatpush.msra.mxu0 0.0
  %989 = vmatpush.msra.mxu0 0.0
  %990 = vmatpush.msra.mxu0 0.0
  %991 = vmatpush.msra.mxu0 0.0
  %992 = vmatpush.msra.mxu0 0.0
  %993 = vmatpush.msra.mxu0 0.0
  %994 = vmatpush.msra.mxu0 0.0
  %995 = vmatpush.msra.mxu0 0.0
  %996 = vmatpush.msra.mxu0 0.0
  %997 = vmatpush.msra.mxu0 0.0
  %998 = vmatpush.msra.mxu0 %v959
  %999 = vmatpush.msra.mxu0 %v950
  %1000 = vmatpush.msra.mxu0 %v947
  %1001 = vmatpush.msra.mxu0 %v944
  %1002 = vmatpush.msra.mxu0 %v941
  %1003 = vmatmul.f32.gmra.mxu0 %v245
  %v1004 = vpop.f32.mrf.mxu0
  %v1005 = vadd.f32 %v236, %v1004
  %1006 = vmatmul.f32.gmra.mxu0 %v248
  %v1007 = vpop.f32.mrf.mxu0
  %v1008 = vadd.f32 %v241, %v1007
  %1009 = vdwg.mxu0
  %1010 = vmatpush.msra.mxu0 0.0
  %1011 = vmatpush.msra.mxu0 0.0
  %1012 = vmatpush.msra.mxu0 0.0
  %1013 = vmatpush.msra.mxu0 0.0
  %1014 = vmatpush.msra.mxu0 0.0
  %1015 = vmatpush.msra.mxu0 0.0
  %1016 = vmatpush.msra.mxu0 0.0
  %1017 = vmatpush.msra.mxu0 0.0
  %1018 = vmatpush.msra.mxu0 0.0
  %1019 = vmatpush.msra.mxu0 0.0
  %1020 = vmatpush.msra.mxu0 0.0
  %1021 = vmatpush.msra.mxu0 %v962
  %1022 = vmatpush.msra.mxu0 %v951
  %1023 = vmatpush.msra.mxu0 %v948
  %1024 = vmatpush.msra.mxu0 %v945
  %1025 = vmatpush.msra.mxu0 %v942
  %1026 = vmatmul.f32.gmra.mxu0 %v245
  %v1027 = vpop.f32.mrf.mxu0
  %v1028 = vadd.f32 %v236, %v1027
  %1029 = vmatmul.f32.gmra.mxu0 %v248
  %v1030 = vpop.f32.mrf.mxu0
  %v1031 = vadd.f32 %v241, %v1030
  %1032 = vdwg.mxu0
  %v1033 = vmax.f32 %v982, 0.0
  %v1034 = vmax.f32 %v1005, 0.0
  %v1035 = vmax.f32 %v1028, 0.0
  %v1036 = vmax.f32 %v985, 0.0
  %v1037 = vmax.f32 %v1008, 0.0
  %v1038 = vmax.f32 %v1031, 0.0
  %v1040 = vsel %vm341, %v1035, 0
  %v1043 = vsel %vm341, %v1038, 0
  %1045 = vmatpush.xpose.msra.mxu0 0.0
  %1046 = vmatpush.xpose.msra.mxu0 0.0
  %1047 = vmatpush.xpose.msra.mxu0 0.0
  %1048 = vmatpush.xpose.msra.mxu0 0.0
  %1049 = vmatpush.xpose.msra.mxu0 0.0
  %1050 = vmatpush.xpose.msra.mxu0 0.0
  %1051 = vmatpush.xpose.msra.mxu0 0.0
  %1052 = vmatpush.xpose.msra.mxu0 0.0
  %1053 = vmatpush.xpose.msra.mxu0 0.0
  %1054 = vmatpush.xpose.msra.mxu0 0.0
  %1055 = vmatpush.xpose.msra.mxu0 0.0
  %1056 = vmatpush.xpose.msra.mxu0 0.0
  %1057 = vmatpush.xpose.msra.mxu0 0.0
  %1058 = vmatpush.xpose.msra.mxu0 0.0
  %1059 = vmatpush.xpose.msra.mxu0 %v1036
  %1060 = vmatpush.xpose.msra.mxu0 %v1033
  %1061 = vmatmul.f32.gmra.mxu0 %v336
  %v1062 = vpop.f32.mrf.mxu0
  %v1063 = vadd.f32 0.0, %v1062
  %1064 = vdwg.mxu0
  %1065 = vmatpush.xpose.msra.mxu0 0.0
  %1066 = vmatpush.xpose.msra.mxu0 0.0
  %1067 = vmatpush.xpose.msra.mxu0 0.0
  %1068 = vmatpush.xpose.msra.mxu0 0.0
  %1069 = vmatpush.xpose.msra.mxu0 0.0
  %1070 = vmatpush.xpose.msra.mxu0 0.0
  %1071 = vmatpush.xpose.msra.mxu0 0.0
  %1072 = vmatpush.xpose.msra.mxu0 0.0
  %1073 = vmatpush.xpose.msra.mxu0 0.0
  %1074 = vmatpush.xpose.msra.mxu0 0.0
  %1075 = vmatpush.xpose.msra.mxu0 0.0
  %1076 = vmatpush.xpose.msra.mxu0 0.0
  %1077 = vmatpush.xpose.msra.mxu0 0.0
  %1078 = vmatpush.xpose.msra.mxu0 0.0
  %1079 = vmatpush.xpose.msra.mxu0 %v1037
  %1080 = vmatpush.xpose.msra.mxu0 %v1034
  %1081 = vmatmul.f32.gmra.mxu0 %v337
  %v1082 = vpop.f32.mrf.mxu0
  %v1083 = vadd.f32 %v1063, %v1082
  %1084 = vdwg.mxu0
  %1085 = vmatpush.xpose.msra.mxu0 0.0
  %1086 = vmatpush.xpose.msra.mxu0 0.0
  %1087 = vmatpush.xpose.msra.mxu0 0.0
  %1088 = vmatpush.xpose.msra.mxu0 0.0
  %1089 = vmatpush.xpose.msra.mxu0 0.0
  %1090 = vmatpush.xpose.msra.mxu0 0.0
  %1091 = vmatpush.xpose.msra.mxu0 0.0
  %1092 = vmatpush.xpose.msra.mxu0 0.0
  %1093 = vmatpush.xpose.msra.mxu0 0.0
  %1094 = vmatpush.xpose.msra.mxu0 0.0
  %1095 = vmatpush.xpose.msra.mxu0 0.0
  %1096 = vmatpush.xpose.msra.mxu0 0.0
  %1097 = vmatpush.xpose.msra.mxu0 0.0
  %1098 = vmatpush.xpose.msra.mxu0 0.0
  %1099 = vmatpush.xpose.msra.mxu0 %v1043
  %1100 = vmatpush.xpose.msra.mxu0 %v1040
  %1101 = vmatmul.f32.gmra.mxu0 %v342
  %v1102 = vpop.f32.mrf.mxu0
  %v1103 = vadd.f32 %v1083, %v1102
  %1104 = vdwg.mxu0
  %1105 = vst.msk [vmem:[#allocation3 + $0x2] sm:$0x1] %vm410, %v1103
  %s1106 = scalar_lea.vmem %s0, 36
  %v1107 = vld [vmem:[%s1106] sm:$0xff]
  %v1108 = vld [vmem:[%s1106 + $0x8] sm:$0xf]
  %1111 = vst [vmem:[#allocation1] ss:$2 sm:$0xff] %v1107
  %s1112 = scalar_lea.vmem [#allocation1], 16
  %1113 = vst [vmem:[%s1112] ss:$2 sm:$0xff] %v1108
  %v1114 = vld.sshfl [vmem:[#allocation1] sm:$0xff pattern:$0x75316420]
  %v1115 = vld.sshfl [vmem:[#allocation1 + $0x8] sm:$0xff pattern:$0x75316420]
  %v1116 = vld.sshfl [vmem:[#allocation1 + $0x10] sm:$0xff pattern:$0x75316420]
  %1120 = vst [vmem:[#allocation2] sm:$0xf] %v1114
  %1121 = vst [vmem:[#allocation2 + $0x8] sm:$0xf] %v1115
  %1122 = vst.msk [vmem:[#allocation2 + $0x10] sm:$0xf] %vm43, %v1116
  %s1123 = scalar_lea.vmem [#allocation1], 1
  %1124 = vst [vmem:[%s1123] ss:$2 sm:$0xff] %v1107
  %s1125 = scalar_lea.vmem [#allocation1], 17
  %1126 = vst [vmem:[%s1125] ss:$2 sm:$0xff] %v1108
  %v1127 = vld.sshfl [vmem:[#allocation1] sm:$0xff pattern:$0x75316420]
  %v1128 = vld.sshfl [vmem:[#allocation1 + $0x8] sm:$0xff pattern:$0x75316420]
  %v1129 = vld.sshfl [vmem:[#allocation1 + $0x10] sm:$0xff pattern:$0x75316420]
  %1130 = vrot.lane.b32.xlu0 %v1127, 127
  %v1131 = vpop.permute.xlu0 %1130
  %1132 = vrot.lane.b32.xlu0 %v1128, 127
  %v1133 = vpop.permute.xlu0 %1132
  %1134 = vrot.lane.b32.xlu0 %v1129, 127
  %v1135 = vpop.permute.xlu0 %1134
  %v1136 = vsel %vm58, %v1131, %v1133
  %v1137 = vsel %vm58, %v1133, %v1135
  %1141 = vst [vmem:[#allocation2] sm:$0xf0] %v1136
  %1142 = vst [vmem:[#allocation2 + $0x8] sm:$0xf0] %v1137
  %1143 = vst.msk [vmem:[#allocation2 + $0x10] sm:$0xf0] %vm66, %v1135
  %1144 = vst [vmem:[#allocation1] ss:$2 sm:$0xff] %v1107
  %s1145 = scalar_lea.vmem [#allocation1], 16
  %1146 = vst [vmem:[%s1145] ss:$2 sm:$0xff] %v1108
  %v1147 = vld.sshfl [vmem:[#allocation1] sm:$0xff pattern:$0x75316420]
  %v1148 = vld.sshfl [vmem:[#allocation1 + $0x8] sm:$0xff pattern:$0x75316420]
  %v1149 = vld.sshfl [vmem:[#allocation1 + $0x10] sm:$0xff pattern:$0x75316420]
  %1150 = vrot.lane.b32.xlu0 %v1147, 126
  %v1151 = vpop.permute.xlu0 %1150
  %1152 = vrot.lane.b32.xlu0 %v1148, 126
  %v1153 = vpop.permute.xlu0 %1152
  %1154 = vrot.lane.b32.xlu0 %v1149, 126
  %v1155 = vpop.permute.xlu0 %1154
  %v1156 = vsel %vm80, %v1151, %v1153
  %v1157 = vsel %vm80, %v1153, %v1155
  %1161 = vst [vmem:[#allocation2 + $0x18] sm:$0xf] %v1156
  %1162 = vst [vmem:[#allocation2 + $0x20] sm:$0xf] %v1157
  %1163 = vst.msk [vmem:[#allocation2 + $0x28] sm:$0xf] %vm43, %v1155
  %s1164 = scalar_lea.vmem [#allocation1], 1
  %1165 = vst [vmem:[%s1164] ss:$2 sm:$0xff] %v1107
  %s1166 = scalar_lea.vmem [#allocation1], 17
  %1167 = vst [vmem:[%s1166] ss:$2 sm:$0xff] %v1108
  %v1168 = vld.sshfl [vmem:[#allocation1] sm:$0xff pattern:$0x75316420]
  %v1169 = vld.sshfl [vmem:[#allocation1 + $0x8] sm:$0xff pattern:$0x75316420]
  %v1170 = vld.sshfl [vmem:[#allocation1 + $0x10] sm:$0xff pattern:$0x75316420]
  %1171 = vrot.lane.b32.xlu0 %v1168, 110
  %v1172 = vpop.permute.xlu0 %1171
  %1173 = vrot.lane.b32.xlu0 %v1169, 110
  %v1174 = vpop.permute.xlu0 %1173
  %1175 = vrot.lane.b32.xlu0 %v1170, 110
  %v1176 = vpop.permute.xlu0 %1175
  %v1177 = vsel %vm102, %v1172, %v1174
  %v1178 = vsel %vm102, %v1174, %v1176
  %1182 = vst [vmem:[#allocation2 + $0x18] sm:$0xf0] %v1177
  %1183 = vst [vmem:[#allocation2 + $0x20] sm:$0xf0] %v1178
  %1184 = vst.msk [vmem:[#allocation2 + $0x28] sm:$0xf0] %vm66, %v1176
  %1185 = vst [vmem:[#allocation1] ss:$2 sm:$0xff] %v1107
  %s1186 = scalar_lea.vmem [#allocation1], 16
  %1187 = vst [vmem:[%s1186] ss:$2 sm:$0xff] %v1108
  %v1188 = vld.sshfl [vmem:[#allocation1] sm:$0xff pattern:$0x75316420]
  %v1189 = vld.sshfl [vmem:[#allocation1 + $0x8] sm:$0xff pattern:$0x75316420]
  %v1190 = vld.sshfl [vmem:[#allocation1 + $0x10] sm:$0xff pattern:$0x75316420]
  %1191 = vrot.lane.b32.xlu0 %v1188, 109
  %v1192 = vpop.permute.xlu0 %1191
  %1193 = vrot.lane.b32.xlu0 %v1189, 109
  %v1194 = vpop.permute.xlu0 %1193
  %1195 = vrot.lane.b32.xlu0 %v1190, 109
  %v1196 = vpop.permute.xlu0 %1195
  %v1197 = vsel %vm123, %v1192, %v1194
  %v1198 = vsel %vm123, %v1194, %v1196
  %1202 = vst [vmem:[#allocation2 + $0x30] sm:$0xf] %v1197
  %1203 = vst [vmem:[#allocation2 + $0x38] sm:$0xf] %v1198
  %1204 = vst.msk [vmem:[#allocation2 + $0x40] sm:$0xf] %vm43, %v1196
  %s1205 = scalar_lea.vmem [#allocation1], 1
  %1206 = vst [vmem:[%s1205] ss:$2 sm:$0xff] %v1107
  %s1207 = scalar_lea.vmem [#allocation1], 17
  %1208 = vst [vmem:[%s1207] ss:$2 sm:$0xff] %v1108
  %v1209 = vld.sshfl [vmem:[#allocation1] sm:$0xff pattern:$0x75316420]
  %v1210 = vld.sshfl [vmem:[#allocation1 + $0x8] sm:$0xff pattern:$0x75316420]
  %v1211 = vld.sshfl [vmem:[#allocation1 + $0x10] sm:$0xff pattern:$0x75316420]
  %1212 = vrot.lane.b32.xlu0 %v1209, 108
  %v1213 = vpop.permute.xlu0 %1212
  %1214 = vrot.lane.b32.xlu0 %v1210, 108
  %v1215 = vpop.permute.xlu0 %1214
  %1216 = vrot.lane.b32.xlu0 %v1211, 108
  %v1217 = vpop.permute.xlu0 %1216
  %v1218 = vsel %vm145, %v1213, %v1215
  %v1219 = vsel %vm145, %v1215, %v1217
  %1223 = vst [vmem:[#allocation2 + $0x30] sm:$0xf0] %v1218
  %1224 = vst [vmem:[#allocation2 + $0x38] sm:$0xf0] %v1219
  %1225 = vst.msk [vmem:[#allocation2 + $0x40] sm:$0xf0] %vm66, %v1217
  %1226 = vst [vmem:[#allocation1] ss:$2 sm:$0xff] %v1107
  %s1227 = scalar_lea.vmem [#allocation1], 16
  %1228 = vst [vmem:[%s1227] ss:$2 sm:$0xff] %v1108
  %v1229 = vld.sshfl [vmem:[#allocation1] sm:$0xff pattern:$0x75316420]
  %v1230 = vld.sshfl [vmem:[#allocation1 + $0x8] sm:$0xff pattern:$0x75316420]
  %v1231 = vld.sshfl [vmem:[#allocation1 + $0x10] sm:$0xff pattern:$0x75316420]
  %1232 = vrot.lane.b32.xlu0 %v1229, 92
  %v1233 = vpop.permute.xlu0 %1232
  %1234 = vrot.lane.b32.xlu0 %v1230, 92
  %v1235 = vpop.permute.xlu0 %1234
  %1236 = vrot.lane.b32.xlu0 %v1231, 92
  %v1237 = vpop.permute.xlu0 %1236
  %v1238 = vsel %vm166, %v1233, %v1235
  %v1239 = vsel %vm166, %v1235, %v1237
  %1243 = vst [vmem:[#allocation2 + $0x48] sm:$0xf] %v1238
  %1244 = vst [vmem:[#allocation2 + $0x50] sm:$0xf] %v1239
  %1245 = vst.msk [vmem:[#allocation2 + $0x58] sm:$0xf] %vm43, %v1237
  %s1246 = scalar_lea.vmem [#allocation1], 1
  %1247 = vst [vmem:[%s1246] ss:$2 sm:$0xff] %v1107
  %s1248 = scalar_lea.vmem [#allocation1], 17
  %1249 = vst [vmem:[%s1248] ss:$2 sm:$0xff] %v1108
  %v1250 = vld.sshfl [vmem:[#allocation1] sm:$0xff pattern:$0x75316420]
  %v1251 = vld.sshfl [vmem:[#allocation1 + $0x8] sm:$0xff pattern:$0x75316420]
  %v1252 = vld.sshfl [vmem:[#allocation1 + $0x10] sm:$0xff pattern:$0x75316420]
  %1253 = vrot.lane.b32.xlu0 %v1250, 91
  %v1254 = vpop.permute.xlu0 %1253
  %1255 = vrot.lane.b32.xlu0 %v1251, 91
  %v1256 = vpop.permute.xlu0 %1255
  %1257 = vrot.lane.b32.xlu0 %v1252, 91
  %v1258 = vpop.permute.xlu0 %1257
  %v1259 = vsel %vm188, %v1254, %v1256
  %v1260 = vsel %vm188, %v1256, %v1258
  %1264 = vst [vmem:[#allocation2 + $0x48] sm:$0xf0] %v1259
  %1265 = vst [vmem:[#allocation2 + $0x50] sm:$0xf0] %v1260
  %1266 = vst.msk [vmem:[#allocation2 + $0x58] sm:$0xf0] %vm66, %v1258
  %1267 = vst [vmem:[#allocation1] ss:$2 sm:$0xff] %v1107
  %s1268 = scalar_lea.vmem [#allocation1], 16
  %1269 = vst [vmem:[%s1268] ss:$2 sm:$0xff] %v1108
  %v1270 = vld.sshfl [vmem:[#allocation1] sm:$0xff pattern:$0x75316420]
  %v1271 = vld.sshfl [vmem:[#allocation1 + $0x8] sm:$0xff pattern:$0x75316420]
  %v1272 = vld.sshfl [vmem:[#allocation1 + $0x10] sm:$0xff pattern:$0x75316420]
  %1273 = vrot.lane.b32.xlu0 %v1270, 90
  %v1274 = vpop.permute.xlu0 %1273
  %1275 = vrot.lane.b32.xlu0 %v1271, 90
  %v1276 = vpop.permute.xlu0 %1275
  %1277 = vrot.lane.b32.xlu0 %v1272, 90
  %v1278 = vpop.permute.xlu0 %1277
  %v1279 = vsel %vm209, %v1274, %v1276
  %v1280 = vsel %vm209, %v1276, %v1278
  %1284 = vst [vmem:[#allocation2 + $0x60] sm:$0xf] %v1279
  %1285 = vst [vmem:[#allocation2 + $0x68] sm:$0xf] %v1280
  %1286 = vst.msk [vmem:[#allocation2 + $0x70] sm:$0xf] %vm43, %v1278
  %v1287 = vld [vmem:[#allocation2] sm:$0xff]
  %v1288 = vld [vmem:[#allocation2 + $0x8] sm:$0xff]
  %v1289 = vld [vmem:[#allocation2 + $0x10] sm:$0xff]
  %v1290 = vld [vmem:[#allocation2 + $0x18] sm:$0xff]
  %v1291 = vld [vmem:[#allocation2 + $0x20] sm:$0xff]
  %v1292 = vld [vmem:[#allocation2 + $0x28] sm:$0xff]
  %v1293 = vld [vmem:[#allocation2 + $0x30] sm:$0xff]
  %v1294 = vld [vmem:[#allocation2 + $0x38] sm:$0xff]
  %v1295 = vld [vmem:[#allocation2 + $0x40] sm:$0xff]
  %v1296 = vld [vmem:[#allocation2 + $0x48] sm:$0xff]
  %v1297 = vld [vmem:[#allocation2 + $0x50] sm:$0xff]
  %v1298 = vld [vmem:[#allocation2 + $0x58] sm:$0xff]
  %v1299 = vld [vmem:[#allocation2 + $0x60] sm:$0xf]
  %v1300 = vld [vmem:[#allocation2 + $0x68] sm:$0xf]
  %v1301 = vld [vmem:[#allocation2 + $0x70] sm:$0xf]
  %v1303 = vsel %vm250, %v1299, 0
  %v1306 = vsel %vm250, %v1300, 0
  %v1309 = vsel %vm250, %v1301, 0
  %1311 = vmatpush.msra.mxu0 0.0
  %1312 = vmatpush.msra.mxu0 0.0
  %1313 = vmatpush.msra.mxu0 0.0
  %1314 = vmatpush.msra.mxu0 0.0
  %1315 = vmatpush.msra.mxu0 0.0
  %1316 = vmatpush.msra.mxu0 0.0
  %1317 = vmatpush.msra.mxu0 0.0
  %1318 = vmatpush.msra.mxu0 0.0
  %1319 = vmatpush.msra.mxu0 0.0
  %1320 = vmatpush.msra.mxu0 0.0
  %1321 = vmatpush.msra.mxu0 0.0
  %1322 = vmatpush.msra.mxu0 %v1303
  %1323 = vmatpush.msra.mxu0 %v1296
  %1324 = vmatpush.msra.mxu0 %v1293
  %1325 = vmatpush.msra.mxu0 %v1290
  %1326 = vmatpush.msra.mxu0 %v1287
  %1327 = vmatmul.f32.gmra.mxu0 %v245
  %v1328 = vpop.f32.mrf.mxu0
  %v1329 = vadd.f32 %v236, %v1328
  %1330 = vmatmul.f32.gmra.mxu0 %v248
  %v1331 = vpop.f32.mrf.mxu0
  %v1332 = vadd.f32 %v241, %v1331
  %1333 = vdwg.mxu0
  %1334 = vmatpush.msra.mxu0 0.0
  %1335 = vmatpush.msra.mxu0 0.0
  %1336 = vmatpush.msra.mxu0 0.0
  %1337 = vmatpush.msra.mxu0 0.0
  %1338 = vmatpush.msra.mxu0 0.0
  %1339 = vmatpush.msra.mxu0 0.0
  %1340 = vmatpush.msra.mxu0 0.0
  %1341 = vmatpush.msra.mxu0 0.0
  %1342 = vmatpush.msra.mxu0 0.0
  %1343 = vmatpush.msra.mxu0 0.0
  %1344 = vmatpush.msra.mxu0 0.0
  %1345 = vmatpush.msra.mxu0 %v1306
  %1346 = vmatpush.msra.mxu0 %v1297
  %1347 = vmatpush.msra.mxu0 %v1294
  %1348 = vmatpush.msra.mxu0 %v1291
  %1349 = vmatpush.msra.mxu0 %v1288
  %1350 = vmatmul.f32.gmra.mxu0 %v245
  %v1351 = vpop.f32.mrf.mxu0
  %v1352 = vadd.f32 %v236, %v1351
  %1353 = vmatmul.f32.gmra.mxu0 %v248
  %v1354 = vpop.f32.mrf.mxu0
  %v1355 = vadd.f32 %v241, %v1354
  %1356 = vdwg.mxu0
  %1357 = vmatpush.msra.mxu0 0.0
  %1358 = vmatpush.msra.mxu0 0.0
  %1359 = vmatpush.msra.mxu0 0.0
  %1360 = vmatpush.msra.mxu0 0.0
  %1361 = vmatpush.msra.mxu0 0.0
  %1362 = vmatpush.msra.mxu0 0.0
  %1363 = vmatpush.msra.mxu0 0.0
  %1364 = vmatpush.msra.mxu0 0.0
  %1365 = vmatpush.msra.mxu0 0.0
  %1366 = vmatpush.msra.mxu0 0.0
  %1367 = vmatpush.msra.mxu0 0.0
  %1368 = vmatpush.msra.mxu0 %v1309
  %1369 = vmatpush.msra.mxu0 %v1298
  %1370 = vmatpush.msra.mxu0 %v1295
  %1371 = vmatpush.msra.mxu0 %v1292
  %1372 = vmatpush.msra.mxu0 %v1289
  %1373 = vmatmul.f32.gmra.mxu0 %v245
  %v1374 = vpop.f32.mrf.mxu0
  %v1375 = vadd.f32 %v236, %v1374
  %1376 = vmatmul.f32.gmra.mxu0 %v248
  %v1377 = vpop.f32.mrf.mxu0
  %v1378 = vadd.f32 %v241, %v1377
  %1379 = vdwg.mxu0
  %v1380 = vmax.f32 %v1329, 0.0
  %v1381 = vmax.f32 %v1352, 0.0
  %v1382 = vmax.f32 %v1375, 0.0
  %v1383 = vmax.f32 %v1332, 0.0
  %v1384 = vmax.f32 %v1355, 0.0
  %v1385 = vmax.f32 %v1378, 0.0
  %v1387 = vsel %vm341, %v1382, 0
  %v1390 = vsel %vm341, %v1385, 0
  %1392 = vmatpush.xpose.msra.mxu0 0.0
  %1393 = vmatpush.xpose.msra.mxu0 0.0
  %1394 = vmatpush.xpose.msra.mxu0 0.0
  %1395 = vmatpush.xpose.msra.mxu0 0.0
  %1396 = vmatpush.xpose.msra.mxu0 0.0
  %1397 = vmatpush.xpose.msra.mxu0 0.0
  %1398 = vmatpush.xpose.msra.mxu0 0.0
  %1399 = vmatpush.xpose.msra.mxu0 0.0
  %1400 = vmatpush.xpose.msra.mxu0 0.0
  %1401 = vmatpush.xpose.msra.mxu0 0.0
  %1402 = vmatpush.xpose.msra.mxu0 0.0
  %1403 = vmatpush.xpose.msra.mxu0 0.0
  %1404 = vmatpush.xpose.msra.mxu0 0.0
  %1405 = vmatpush.xpose.msra.mxu0 0.0
  %1406 = vmatpush.xpose.msra.mxu0 %v1383
  %1407 = vmatpush.xpose.msra.mxu0 %v1380
  %1408 = vmatmul.f32.gmra.mxu0 %v336
  %v1409 = vpop.f32.mrf.mxu0
  %v1410 = vadd.f32 0.0, %v1409
  %1411 = vdwg.mxu0
  %1412 = vmatpush.xpose.msra.mxu0 0.0
  %1413 = vmatpush.xpose.msra.mxu0 0.0
  %1414 = vmatpush.xpose.msra.mxu0 0.0
  %1415 = vmatpush.xpose.msra.mxu0 0.0
  %1416 = vmatpush.xpose.msra.mxu0 0.0
  %1417 = vmatpush.xpose.msra.mxu0 0.0
  %1418 = vmatpush.xpose.msra.mxu0 0.0
  %1419 = vmatpush.xpose.msra.mxu0 0.0
  %1420 = vmatpush.xpose.msra.mxu0 0.0
  %1421 = vmatpush.xpose.msra.mxu0 0.0
  %1422 = vmatpush.xpose.msra.mxu0 0.0
  %1423 = vmatpush.xpose.msra.mxu0 0.0
  %1424 = vmatpush.xpose.msra.mxu0 0.0
  %1425 = vmatpush.xpose.msra.mxu0 0.0
  %1426 = vmatpush.xpose.msra.mxu0 %v1384
  %1427 = vmatpush.xpose.msra.mxu0 %v1381
  %1428 = vmatmul.f32.gmra.mxu0 %v337
  %v1429 = vpop.f32.mrf.mxu0
  %v1430 = vadd.f32 %v1410, %v1429
  %1431 = vdwg.mxu0
  %1432 = vmatpush.xpose.msra.mxu0 0.0
  %1433 = vmatpush.xpose.msra.mxu0 0.0
  %1434 = vmatpush.xpose.msra.mxu0 0.0
  %1435 = vmatpush.xpose.msra.mxu0 0.0
  %1436 = vmatpush.xpose.msra.mxu0 0.0
  %1437 = vmatpush.xpose.msra.mxu0 0.0
  %1438 = vmatpush.xpose.msra.mxu0 0.0
  %1439 = vmatpush.xpose.msra.mxu0 0.0
  %1440 = vmatpush.xpose.msra.mxu0 0.0
  %1441 = vmatpush.xpose.msra.mxu0 0.0
  %1442 = vmatpush.xpose.msra.mxu0 0.0
  %1443 = vmatpush.xpose.msra.mxu0 0.0
  %1444 = vmatpush.xpose.msra.mxu0 0.0
  %1445 = vmatpush.xpose.msra.mxu0 0.0
  %1446 = vmatpush.xpose.msra.mxu0 %v1390
  %1447 = vmatpush.xpose.msra.mxu0 %v1387
  %1448 = vmatmul.f32.gmra.mxu0 %v342
  %v1449 = vpop.f32.mrf.mxu0
  %v1450 = vadd.f32 %v1430, %v1449
  %1451 = vdwg.mxu0
  %1452 = vst.msk [vmem:[#allocation3 + $0x3] sm:$0x1] %vm410, %v1450
  %s1453 = scalar_lea.vmem %s0, 48
  %v1454 = vld [vmem:[%s1453] sm:$0xff]
  %v1455 = vld [vmem:[%s1453 + $0x8] sm:$0xf]
  %1458 = vst [vmem:[#allocation1] ss:$2 sm:$0xff] %v1454
  %s1459 = scalar_lea.vmem [#allocation1], 16
  %1460 = vst [vmem:[%s1459] ss:$2 sm:$0xff] %v1455
  %v1461 = vld.sshfl [vmem:[#allocation1] sm:$0xff pattern:$0x75316420]
  %v1462 = vld.sshfl [vmem:[#allocation1 + $0x8] sm:$0xff pattern:$0x75316420]
  %v1463 = vld.sshfl [vmem:[#allocation1 + $0x10] sm:$0xff pattern:$0x75316420]
  %1467 = vst [vmem:[#allocation2] sm:$0xf] %v1461
  %1468 = vst [vmem:[#allocation2 + $0x8] sm:$0xf] %v1462
  %1469 = vst.msk [vmem:[#allocation2 + $0x10] sm:$0xf] %vm43, %v1463
  %s1470 = scalar_lea.vmem [#allocation1], 1
  %1471 = vst [vmem:[%s1470] ss:$2 sm:$0xff] %v1454
  %s1472 = scalar_lea.vmem [#allocation1], 17
  %1473 = vst [vmem:[%s1472] ss:$2 sm:$0xff] %v1455
  %v1474 = vld.sshfl [vmem:[#allocation1] sm:$0xff pattern:$0x75316420]
  %v1475 = vld.sshfl [vmem:[#allocation1 + $0x8] sm:$0xff pattern:$0x75316420]
  %v1476 = vld.sshfl [vmem:[#allocation1 + $0x10] sm:$0xff pattern:$0x75316420]
  %1477 = vrot.lane.b32.xlu0 %v1474, 127
  %v1478 = vpop.permute.xlu0 %1477
  %1479 = vrot.lane.b32.xlu0 %v1475, 127
  %v1480 = vpop.permute.xlu0 %1479
  %1481 = vrot.lane.b32.xlu0 %v1476, 127
  %v1482 = vpop.permute.xlu0 %1481
  %v1483 = vsel %vm58, %v1478, %v1480
  %v1484 = vsel %vm58, %v1480, %v1482
  %1488 = vst [vmem:[#allocation2] sm:$0xf0] %v1483
  %1489 = vst [vmem:[#allocation2 + $0x8] sm:$0xf0] %v1484
  %1490 = vst.msk [vmem:[#allocation2 + $0x10] sm:$0xf0] %vm66, %v1482
  %1491 = vst [vmem:[#allocation1] ss:$2 sm:$0xff] %v1454
  %s1492 = scalar_lea.vmem [#allocation1], 16
  %1493 = vst [vmem:[%s1492] ss:$2 sm:$0xff] %v1455
  %v1494 = vld.sshfl [vmem:[#allocation1] sm:$0xff pattern:$0x75316420]
  %v1495 = vld.sshfl [vmem:[#allocation1 + $0x8] sm:$0xff pattern:$0x75316420]
  %v1496 = vld.sshfl [vmem:[#allocation1 + $0x10] sm:$0xff pattern:$0x75316420]
  %1497 = vrot.lane.b32.xlu0 %v1494, 126
  %v1498 = vpop.permute.xlu0 %1497
  %1499 = vrot.lane.b32.xlu0 %v1495, 126
  %v1500 = vpop.permute.xlu0 %1499
  %1501 = vrot.lane.b32.xlu0 %v1496, 126
  %v1502 = vpop.permute.xlu0 %1501
  %v1503 = vsel %vm80, %v1498, %v1500
  %v1504 = vsel %vm80, %v1500, %v1502
  %1508 = vst [vmem:[#allocation2 + $0x18] sm:$0xf] %v1503
  %1509 = vst [vmem:[#allocation2 + $0x20] sm:$0xf] %v1504
  %1510 = vst.msk [vmem:[#allocation2 + $0x28] sm:$0xf] %vm43, %v1502
  %s1511 = scalar_lea.vmem [#allocation1], 1
  %1512 = vst [vmem:[%s1511] ss:$2 sm:$0xff] %v1454
  %s1513 = scalar_lea.vmem [#allocation1], 17
  %1514 = vst [vmem:[%s1513] ss:$2 sm:$0xff] %v1455
  %v1515 = vld.sshfl [vmem:[#allocation1] sm:$0xff pattern:$0x75316420]
  %v1516 = vld.sshfl [vmem:[#allocation1 + $0x8] sm:$0xff pattern:$0x75316420]
  %v1517 = vld.sshfl [vmem:[#allocation1 + $0x10] sm:$0xff pattern:$0x75316420]
  %1518 = vrot.lane.b32.xlu0 %v1515, 110
  %v1519 = vpop.permute.xlu0 %1518
  %1520 = vrot.lane.b32.xlu0 %v1516, 110
  %v1521 = vpop.permute.xlu0 %1520
  %1522 = vrot.lane.b32.xlu0 %v1517, 110
  %v1523 = vpop.permute.xlu0 %1522
  %v1524 = vsel %vm102, %v1519, %v1521
  %v1525 = vsel %vm102, %v1521, %v1523
  %1529 = vst [vmem:[#allocation2 + $0x18] sm:$0xf0] %v1524
  %1530 = vst [vmem:[#allocation2 + $0x20] sm:$0xf0] %v1525
  %1531 = vst.msk [vmem:[#allocation2 + $0x28] sm:$0xf0] %vm66, %v1523
  %1532 = vst [vmem:[#allocation1] ss:$2 sm:$0xff] %v1454
  %s1533 = scalar_lea.vmem [#allocation1], 16
  %1534 = vst [vmem:[%s1533] ss:$2 sm:$0xff] %v1455
  %v1535 = vld.sshfl [vmem:[#allocation1] sm:$0xff pattern:$0x75316420]
  %v1536 = vld.sshfl [vmem:[#allocation1 + $0x8] sm:$0xff pattern:$0x75316420]
  %v1537 = vld.sshfl [vmem:[#allocation1 + $0x10] sm:$0xff pattern:$0x75316420]
  %1538 = vrot.lane.b32.xlu0 %v1535, 109
  %v1539 = vpop.permute.xlu0 %1538
  %1540 = vrot.lane.b32.xlu0 %v1536, 109
  %v1541 = vpop.permute.xlu0 %1540
  %1542 = vrot.lane.b32.xlu0 %v1537, 109
  %v1543 = vpop.permute.xlu0 %1542
  %v1544 = vsel %vm123, %v1539, %v1541
  %v1545 = vsel %vm123, %v1541, %v1543
  %1549 = vst [vmem:[#allocation2 + $0x30] sm:$0xf] %v1544
  %1550 = vst [vmem:[#allocation2 + $0x38] sm:$0xf] %v1545
  %1551 = vst.msk [vmem:[#allocation2 + $0x40] sm:$0xf] %vm43, %v1543
  %s1552 = scalar_lea.vmem [#allocation1], 1
  %1553 = vst [vmem:[%s1552] ss:$2 sm:$0xff] %v1454
  %s1554 = scalar_lea.vmem [#allocation1], 17
  %1555 = vst [vmem:[%s1554] ss:$2 sm:$0xff] %v1455
  %v1556 = vld.sshfl [vmem:[#allocation1] sm:$0xff pattern:$0x75316420]
  %v1557 = vld.sshfl [vmem:[#allocation1 + $0x8] sm:$0xff pattern:$0x75316420]
  %v1558 = vld.sshfl [vmem:[#allocation1 + $0x10] sm:$0xff pattern:$0x75316420]
  %1559 = vrot.lane.b32.xlu0 %v1556, 108
  %v1560 = vpop.permute.xlu0 %1559
  %1561 = vrot.lane.b32.xlu0 %v1557, 108
  %v1562 = vpop.permute.xlu0 %1561
  %1563 = vrot.lane.b32.xlu0 %v1558, 108
  %v1564 = vpop.permute.xlu0 %1563
  %v1565 = vsel %vm145, %v1560, %v1562
  %v1566 = vsel %vm145, %v1562, %v1564
  %1570 = vst [vmem:[#allocation2 + $0x30] sm:$0xf0] %v1565
  %1571 = vst [vmem:[#allocation2 + $0x38] sm:$0xf0] %v1566
  %1572 = vst.msk [vmem:[#allocation2 + $0x40] sm:$0xf0] %vm66, %v1564
  %1573 = vst [vmem:[#allocation1] ss:$2 sm:$0xff] %v1454
  %s1574 = scalar_lea.vmem [#allocation1], 16
  %1575 = vst [vmem:[%s1574] ss:$2 sm:$0xff] %v1455
  %v1576 = vld.sshfl [vmem:[#allocation1] sm:$0xff pattern:$0x75316420]
  %v1577 = vld.sshfl [vmem:[#allocation1 + $0x8] sm:$0xff pattern:$0x75316420]
  %v1578 = vld.sshfl [vmem:[#allocation1 + $0x10] sm:$0xff pattern:$0x75316420]
  %1579 = vrot.lane.b32.xlu0 %v1576, 92
  %v1580 = vpop.permute.xlu0 %1579
  %1581 = vrot.lane.b32.xlu0 %v1577, 92
  %v1582 = vpop.permute.xlu0 %1581
  %1583 = vrot.lane.b32.xlu0 %v1578, 92
  %v1584 = vpop.permute.xlu0 %1583
  %v1585 = vsel %vm166, %v1580, %v1582
  %v1586 = vsel %vm166, %v1582, %v1584
  %1590 = vst [vmem:[#allocation2 + $0x48] sm:$0xf] %v1585
  %1591 = vst [vmem:[#allocation2 + $0x50] sm:$0xf] %v1586
  %1592 = vst.msk [vmem:[#allocation2 + $0x58] sm:$0xf] %vm43, %v1584
  %s1593 = scalar_lea.vmem [#allocation1], 1
  %1594 = vst [vmem:[%s1593] ss:$2 sm:$0xff] %v1454
  %s1595 = scalar_lea.vmem [#allocation1], 17
  %1596 = vst [vmem:[%s1595] ss:$2 sm:$0xff] %v1455
  %v1597 = vld.sshfl [vmem:[#allocation1] sm:$0xff pattern:$0x75316420]
  %v1598 = vld.sshfl [vmem:[#allocation1 + $0x8] sm:$0xff pattern:$0x75316420]
  %v1599 = vld.sshfl [vmem:[#allocation1 + $0x10] sm:$0xff pattern:$0x75316420]
  %1600 = vrot.lane.b32.xlu0 %v1597, 91
  %v1601 = vpop.permute.xlu0 %1600
  %1602 = vrot.lane.b32.xlu0 %v1598, 91
  %v1603 = vpop.permute.xlu0 %1602
  %1604 = vrot.lane.b32.xlu0 %v1599, 91
  %v1605 = vpop.permute.xlu0 %1604
  %v1606 = vsel %vm188, %v1601, %v1603
  %v1607 = vsel %vm188, %v1603, %v1605
  %1611 = vst [vmem:[#allocation2 + $0x48] sm:$0xf0] %v1606
  %1612 = vst [vmem:[#allocation2 + $0x50] sm:$0xf0] %v1607
  %1613 = vst.msk [vmem:[#allocation2 + $0x58] sm:$0xf0] %vm66, %v1605
  %1614 = vst [vmem:[#allocation1] ss:$2 sm:$0xff] %v1454
  %s1615 = scalar_lea.vmem [#allocation1], 16
  %1616 = vst [vmem:[%s1615] ss:$2 sm:$0xff] %v1455
  %v1617 = vld.sshfl [vmem:[#allocation1] sm:$0xff pattern:$0x75316420]
  %v1618 = vld.sshfl [vmem:[#allocation1 + $0x8] sm:$0xff pattern:$0x75316420]
  %v1619 = vld.sshfl [vmem:[#allocation1 + $0x10] sm:$0xff pattern:$0x75316420]
  %1620 = vrot.lane.b32.xlu0 %v1617, 90
  %v1621 = vpop.permute.xlu0 %1620
  %1622 = vrot.lane.b32.xlu0 %v1618, 90
  %v1623 = vpop.permute.xlu0 %1622
  %1624 = vrot.lane.b32.xlu0 %v1619, 90
  %v1625 = vpop.permute.xlu0 %1624
  %v1626 = vsel %vm209, %v1621, %v1623
  %v1627 = vsel %vm209, %v1623, %v1625
  %1631 = vst [vmem:[#allocation2 + $0x60] sm:$0xf] %v1626
  %1632 = vst [vmem:[#allocation2 + $0x68] sm:$0xf] %v1627
  %1633 = vst.msk [vmem:[#allocation2 + $0x70] sm:$0xf] %vm43, %v1625
  %v1634 = vld [vmem:[#allocation2] sm:$0xff]
  %v1635 = vld [vmem:[#allocation2 + $0x8] sm:$0xff]
  %v1636 = vld [vmem:[#allocation2 + $0x10] sm:$0xff]
  %v1637 = vld [vmem:[#allocation2 + $0x18] sm:$0xff]
  %v1638 = vld [vmem:[#allocation2 + $0x20] sm:$0xff]
  %v1639 = vld [vmem:[#allocation2 + $0x28] sm:$0xff]
  %v1640 = vld [vmem:[#allocation2 + $0x30] sm:$0xff]
  %v1641 = vld [vmem:[#allocation2 + $0x38] sm:$0xff]
  %v1642 = vld [vmem:[#allocation2 + $0x40] sm:$0xff]
  %v1643 = vld [vmem:[#allocation2 + $0x48] sm:$0xff]
  %v1644 = vld [vmem:[#allocation2 + $0x50] sm:$0xff]
  %v1645 = vld [vmem:[#allocation2 + $0x58] sm:$0xff]
  %v1646 = vld [vmem:[#allocation2 + $0x60] sm:$0xf]
  %v1647 = vld [vmem:[#allocation2 + $0x68] sm:$0xf]
  %v1648 = vld [vmem:[#allocation2 + $0x70] sm:$0xf]
  %v1650 = vsel %vm250, %v1646, 0
  %v1653 = vsel %vm250, %v1647, 0
  %v1656 = vsel %vm250, %v1648, 0
  %1658 = vmatpush.msra.mxu0 0.0
  %1659 = vmatpush.msra.mxu0 0.0
  %1660 = vmatpush.msra.mxu0 0.0
  %1661 = vmatpush.msra.mxu0 0.0
  %1662 = vmatpush.msra.mxu0 0.0
  %1663 = vmatpush.msra.mxu0 0.0
  %1664 = vmatpush.msra.mxu0 0.0
  %1665 = vmatpush.msra.mxu0 0.0
  %1666 = vmatpush.msra.mxu0 0.0
  %1667 = vmatpush.msra.mxu0 0.0
  %1668 = vmatpush.msra.mxu0 0.0
  %1669 = vmatpush.msra.mxu0 %v1650
  %1670 = vmatpush.msra.mxu0 %v1643
  %1671 = vmatpush.msra.mxu0 %v1640
  %1672 = vmatpush.msra.mxu0 %v1637
  %1673 = vmatpush.msra.mxu0 %v1634
  %1674 = vmatmul.f32.gmra.mxu0 %v245
  %v1675 = vpop.f32.mrf.mxu0
  %v1676 = vadd.f32 %v236, %v1675
  %1677 = vmatmul.f32.gmra.mxu0 %v248
  %v1678 = vpop.f32.mrf.mxu0
  %v1679 = vadd.f32 %v241, %v1678
  %1680 = vdwg.mxu0
  %1681 = vmatpush.msra.mxu0 0.0
  %1682 = vmatpush.msra.mxu0 0.0
  %1683 = vmatpush.msra.mxu0 0.0
  %1684 = vmatpush.msra.mxu0 0.0
  %1685 = vmatpush.msra.mxu0 0.0
  %1686 = vmatpush.msra.mxu0 0.0
  %1687 = vmatpush.msra.mxu0 0.0
  %1688 = vmatpush.msra.mxu0 0.0
  %1689 = vmatpush.msra.mxu0 0.0
  %1690 = vmatpush.msra.mxu0 0.0
  %1691 = vmatpush.msra.mxu0 0.0
  %1692 = vmatpush.msra.mxu0 %v1653
  %1693 = vmatpush.msra.mxu0 %v1644
  %1694 = vmatpush.msra.mxu0 %v1641
  %1695 = vmatpush.msra.mxu0 %v1638
  %1696 = vmatpush.msra.mxu0 %v1635
  %1697 = vmatmul.f32.gmra.mxu0 %v245
  %v1698 = vpop.f32.mrf.mxu0
  %v1699 = vadd.f32 %v236, %v1698
  %1700 = vmatmul.f32.gmra.mxu0 %v248
  %v1701 = vpop.f32.mrf.mxu0
  %v1702 = vadd.f32 %v241, %v1701
  %1703 = vdwg.mxu0
  %1704 = vmatpush.msra.mxu0 0.0
  %1705 = vmatpush.msra.mxu0 0.0
  %1706 = vmatpush.msra.mxu0 0.0
  %1707 = vmatpush.msra.mxu0 0.0
  %1708 = vmatpush.msra.mxu0 0.0
  %1709 = vmatpush.msra.mxu0 0.0
  %1710 = vmatpush.msra.mxu0 0.0
  %1711 = vmatpush.msra.mxu0 0.0
  %1712 = vmatpush.msra.mxu0 0.0
  %1713 = vmatpush.msra.mxu0 0.0
  %1714 = vmatpush.msra.mxu0 0.0
  %1715 = vmatpush.msra.mxu0 %v1656
  %1716 = vmatpush.msra.mxu0 %v1645
  %1717 = vmatpush.msra.mxu0 %v1642
  %1718 = vmatpush.msra.mxu0 %v1639
  %1719 = vmatpush.msra.mxu0 %v1636
  %1720 = vmatmul.f32.gmra.mxu0 %v245
  %v1721 = vpop.f32.mrf.mxu0
  %v1722 = vadd.f32 %v236, %v1721
  %1723 = vmatmul.f32.gmra.mxu0 %v248
  %v1724 = vpop.f32.mrf.mxu0
  %v1725 = vadd.f32 %v241, %v1724
  %1726 = vdwg.mxu0
  %v1727 = vmax.f32 %v1676, 0.0
  %v1728 = vmax.f32 %v1699, 0.0
  %v1729 = vmax.f32 %v1722, 0.0
  %v1730 = vmax.f32 %v1679, 0.0
  %v1731 = vmax.f32 %v1702, 0.0
  %v1732 = vmax.f32 %v1725, 0.0
  %v1734 = vsel %vm341, %v1729, 0
  %v1737 = vsel %vm341, %v1732, 0
  %1739 = vmatpush.xpose.msra.mxu0 0.0
  %1740 = vmatpush.xpose.msra.mxu0 0.0
  %1741 = vmatpush.xpose.msra.mxu0 0.0
  %1742 = vmatpush.xpose.msra.mxu0 0.0
  %1743 = vmatpush.xpose.msra.mxu0 0.0
  %1744 = vmatpush.xpose.msra.mxu0 0.0
  %1745 = vmatpush.xpose.msra.mxu0 0.0
  %1746 = vmatpush.xpose.msra.mxu0 0.0
  %1747 = vmatpush.xpose.msra.mxu0 0.0
  %1748 = vmatpush.xpose.msra.mxu0 0.0
  %1749 = vmatpush.xpose.msra.mxu0 0.0
  %1750 = vmatpush.xpose.msra.mxu0 0.0
  %1751 = vmatpush.xpose.msra.mxu0 0.0
  %1752 = vmatpush.xpose.msra.mxu0 0.0
  %1753 = vmatpush.xpose.msra.mxu0 %v1730
  %1754 = vmatpush.xpose.msra.mxu0 %v1727
  %1755 = vmatmul.f32.gmra.mxu0 %v336
  %v1756 = vpop.f32.mrf.mxu0
  %v1757 = vadd.f32 0.0, %v1756
  %1758 = vdwg.mxu0
  %1759 = vmatpush.xpose.msra.mxu0 0.0
  %1760 = vmatpush.xpose.msra.mxu0 0.0
  %1761 = vmatpush.xpose.msra.mxu0 0.0
  %1762 = vmatpush.xpose.msra.mxu0 0.0
  %1763 = vmatpush.xpose.msra.mxu0 0.0
  %1764 = vmatpush.xpose.msra.mxu0 0.0
  %1765 = vmatpush.xpose.msra.mxu0 0.0
  %1766 = vmatpush.xpose.msra.mxu0 0.0
  %1767 = vmatpush.xpose.msra.mxu0 0.0
  %1768 = vmatpush.xpose.msra.mxu0 0.0
  %1769 = vmatpush.xpose.msra.mxu0 0.0
  %1770 = vmatpush.xpose.msra.mxu0 0.0
  %1771 = vmatpush.xpose.msra.mxu0 0.0
  %1772 = vmatpush.xpose.msra.mxu0 0.0
  %1773 = vmatpush.xpose.msra.mxu0 %v1731
  %1774 = vmatpush.xpose.msra.mxu0 %v1728
  %1775 = vmatmul.f32.gmra.mxu0 %v337
  %v1776 = vpop.f32.mrf.mxu0
  %v1777 = vadd.f32 %v1757, %v1776
  %1778 = vdwg.mxu0
  %1779 = vmatpush.xpose.msra.mxu0 0.0
  %1780 = vmatpush.xpose.msra.mxu0 0.0
  %1781 = vmatpush.xpose.msra.mxu0 0.0
  %1782 = vmatpush.xpose.msra.mxu0 0.0
  %1783 = vmatpush.xpose.msra.mxu0 0.0
  %1784 = vmatpush.xpose.msra.mxu0 0.0
  %1785 = vmatpush.xpose.msra.mxu0 0.0
  %1786 = vmatpush.xpose.msra.mxu0 0.0
  %1787 = vmatpush.xpose.msra.mxu0 0.0
  %1788 = vmatpush.xpose.msra.mxu0 0.0
  %1789 = vmatpush.xpose.msra.mxu0 0.0
  %1790 = vmatpush.xpose.msra.mxu0 0.0
  %1791 = vmatpush.xpose.msra.mxu0 0.0
  %1792 = vmatpush.xpose.msra.mxu0 0.0
  %1793 = vmatpush.xpose.msra.mxu0 %v1737
  %1794 = vmatpush.xpose.msra.mxu0 %v1734
  %1795 = vmatmul.f32.gmra.mxu0 %v342
  %v1796 = vpop.f32.mrf.mxu0
  %v1797 = vadd.f32 %v1777, %v1796
  %1798 = vdwg.mxu0
  %1799 = vst.msk [vmem:[#allocation3 + $0x4] sm:$0x1] %vm410, %v1797
  %s1800 = scalar_lea.vmem %s0, 60
  %v1801 = vld [vmem:[%s1800] sm:$0xff]
  %v1802 = vld [vmem:[%s1800 + $0x8] sm:$0xf]
  %1805 = vst [vmem:[#allocation1] ss:$2 sm:$0xff] %v1801
  %s1806 = scalar_lea.vmem [#allocation1], 16
  %1807 = vst [vmem:[%s1806] ss:$2 sm:$0xff] %v1802
  %v1808 = vld.sshfl [vmem:[#allocation1] sm:$0xff pattern:$0x75316420]
  %v1809 = vld.sshfl [vmem:[#allocation1 + $0x8] sm:$0xff pattern:$0x75316420]
  %v1810 = vld.sshfl [vmem:[#allocation1 + $0x10] sm:$0xff pattern:$0x75316420]
  %1814 = vst [vmem:[#allocation2] sm:$0xf] %v1808
  %1815 = vst [vmem:[#allocation2 + $0x8] sm:$0xf] %v1809
  %1816 = vst.msk [vmem:[#allocation2 + $0x10] sm:$0xf] %vm43, %v1810
  %s1817 = scalar_lea.vmem [#allocation1], 1
  %1818 = vst [vmem:[%s1817] ss:$2 sm:$0xff] %v1801
  %s1819 = scalar_lea.vmem [#allocation1], 17
  %1820 = vst [vmem:[%s1819] ss:$2 sm:$0xff] %v1802
  %v1821 = vld.sshfl [vmem:[#allocation1] sm:$0xff pattern:$0x75316420]
  %v1822 = vld.sshfl [vmem:[#allocation1 + $0x8] sm:$0xff pattern:$0x75316420]
  %v1823 = vld.sshfl [vmem:[#allocation1 + $0x10] sm:$0xff pattern:$0x75316420]
  %1824 = vrot.lane.b32.xlu0 %v1821, 127
  %v1825 = vpop.permute.xlu0 %1824
  %1826 = vrot.lane.b32.xlu0 %v1822, 127
  %v1827 = vpop.permute.xlu0 %1826
  %1828 = vrot.lane.b32.xlu0 %v1823, 127
  %v1829 = vpop.permute.xlu0 %1828
  %v1830 = vsel %vm58, %v1825, %v1827
  %v1831 = vsel %vm58, %v1827, %v1829
  %1835 = vst [vmem:[#allocation2] sm:$0xf0] %v1830
  %1836 = vst [vmem:[#allocation2 + $0x8] sm:$0xf0] %v1831
  %1837 = vst.msk [vmem:[#allocation2 + $0x10] sm:$0xf0] %vm66, %v1829
  %1838 = vst [vmem:[#allocation1] ss:$2 sm:$0xff] %v1801
  %s1839 = scalar_lea.vmem [#allocation1], 16
  %1840 = vst [vmem:[%s1839] ss:$2 sm:$0xff] %v1802
  %v1841 = vld.sshfl [vmem:[#allocation1] sm:$0xff pattern:$0x75316420]
  %v1842 = vld.sshfl [vmem:[#allocation1 + $0x8] sm:$0xff pattern:$0x75316420]
  %v1843 = vld.sshfl [vmem:[#allocation1 + $0x10] sm:$0xff pattern:$0x75316420]
  %1844 = vrot.lane.b32.xlu0 %v1841, 126
  %v1845 = vpop.permute.xlu0 %1844
  %1846 = vrot.lane.b32.xlu0 %v1842, 126
  %v1847 = vpop.permute.xlu0 %1846
  %1848 = vrot.lane.b32.xlu0 %v1843, 126
  %v1849 = vpop.permute.xlu0 %1848
  %v1850 = vsel %vm80, %v1845, %v1847
  %v1851 = vsel %vm80, %v1847, %v1849
  %1855 = vst [vmem:[#allocation2 + $0x18] sm:$0xf] %v1850
  %1856 = vst [vmem:[#allocation2 + $0x20] sm:$0xf] %v1851
  %1857 = vst.msk [vmem:[#allocation2 + $0x28] sm:$0xf] %vm43, %v1849
  %s1858 = scalar_lea.vmem [#allocation1], 1
  %1859 = vst [vmem:[%s1858] ss:$2 sm:$0xff] %v1801
  %s1860 = scalar_lea.vmem [#allocation1], 17
  %1861 = vst [vmem:[%s1860] ss:$2 sm:$0xff] %v1802
  %v1862 = vld.sshfl [vmem:[#allocation1] sm:$0xff pattern:$0x75316420]
  %v1863 = vld.sshfl [vmem:[#allocation1 + $0x8] sm:$0xff pattern:$0x75316420]
  %v1864 = vld.sshfl [vmem:[#allocation1 + $0x10] sm:$0xff pattern:$0x75316420]
  %1865 = vrot.lane.b32.xlu0 %v1862, 110
  %v1866 = vpop.permute.xlu0 %1865
  %1867 = vrot.lane.b32.xlu0 %v1863, 110
  %v1868 = vpop.permute.xlu0 %1867
  %1869 = vrot.lane.b32.xlu0 %v1864, 110
  %v1870 = vpop.permute.xlu0 %1869
  %v1871 = vsel %vm102, %v1866, %v1868
  %v1872 = vsel %vm102, %v1868, %v1870
  %1876 = vst [vmem:[#allocation2 + $0x18] sm:$0xf0] %v1871
  %1877 = vst [vmem:[#allocation2 + $0x20] sm:$0xf0] %v1872
  %1878 = vst.msk [vmem:[#allocation2 + $0x28] sm:$0xf0] %vm66, %v1870
  %1879 = vst [vmem:[#allocation1] ss:$2 sm:$0xff] %v1801
  %s1880 = scalar_lea.vmem [#allocation1], 16
  %1881 = vst [vmem:[%s1880] ss:$2 sm:$0xff] %v1802
  %v1882 = vld.sshfl [vmem:[#allocation1] sm:$0xff pattern:$0x75316420]
  %v1883 = vld.sshfl [vmem:[#allocation1 + $0x8] sm:$0xff pattern:$0x75316420]
  %v1884 = vld.sshfl [vmem:[#allocation1 + $0x10] sm:$0xff pattern:$0x75316420]
  %1885 = vrot.lane.b32.xlu0 %v1882, 109
  %v1886 = vpop.permute.xlu0 %1885
  %1887 = vrot.lane.b32.xlu0 %v1883, 109
  %v1888 = vpop.permute.xlu0 %1887
  %1889 = vrot.lane.b32.xlu0 %v1884, 109
  %v1890 = vpop.permute.xlu0 %1889
  %v1891 = vsel %vm123, %v1886, %v1888
  %v1892 = vsel %vm123, %v1888, %v1890
  %1896 = vst [vmem:[#allocation2 + $0x30] sm:$0xf] %v1891
  %1897 = vst [vmem:[#allocation2 + $0x38] sm:$0xf] %v1892
  %1898 = vst.msk [vmem:[#allocation2 + $0x40] sm:$0xf] %vm43, %v1890
  %s1899 = scalar_lea.vmem [#allocation1], 1
  %1900 = vst [vmem:[%s1899] ss:$2 sm:$0xff] %v1801
  %s1901 = scalar_lea.vmem [#allocation1], 17
  %1902 = vst [vmem:[%s1901] ss:$2 sm:$0xff] %v1802
  %v1903 = vld.sshfl [vmem:[#allocation1] sm:$0xff pattern:$0x75316420]
  %v1904 = vld.sshfl [vmem:[#allocation1 + $0x8] sm:$0xff pattern:$0x75316420]
  %v1905 = vld.sshfl [vmem:[#allocation1 + $0x10] sm:$0xff pattern:$0x75316420]
  %1906 = vrot.lane.b32.xlu0 %v1903, 108
  %v1907 = vpop.permute.xlu0 %1906
  %1908 = vrot.lane.b32.xlu0 %v1904, 108
  %v1909 = vpop.permute.xlu0 %1908
  %1910 = vrot.lane.b32.xlu0 %v1905, 108
  %v1911 = vpop.permute.xlu0 %1910
  %v1912 = vsel %vm145, %v1907, %v1909
  %v1913 = vsel %vm145, %v1909, %v1911
  %1917 = vst [vmem:[#allocation2 + $0x30] sm:$0xf0] %v1912
  %1918 = vst [vmem:[#allocation2 + $0x38] sm:$0xf0] %v1913
  %1919 = vst.msk [vmem:[#allocation2 + $0x40] sm:$0xf0] %vm66, %v1911
  %1920 = vst [vmem:[#allocation1] ss:$2 sm:$0xff] %v1801
  %s1921 = scalar_lea.vmem [#allocation1], 16
  %1922 = vst [vmem:[%s1921] ss:$2 sm:$0xff] %v1802
  %v1923 = vld.sshfl [vmem:[#allocation1] sm:$0xff pattern:$0x75316420]
  %v1924 = vld.sshfl [vmem:[#allocation1 + $0x8] sm:$0xff pattern:$0x75316420]
  %v1925 = vld.sshfl [vmem:[#allocation1 + $0x10] sm:$0xff pattern:$0x75316420]
  %1926 = vrot.lane.b32.xlu0 %v1923, 92
  %v1927 = vpop.permute.xlu0 %1926
  %1928 = vrot.lane.b32.xlu0 %v1924, 92
  %v1929 = vpop.permute.xlu0 %1928
  %1930 = vrot.lane.b32.xlu0 %v1925, 92
  %v1931 = vpop.permute.xlu0 %1930
  %v1932 = vsel %vm166, %v1927, %v1929
  %v1933 = vsel %vm166, %v1929, %v1931
  %1937 = vst [vmem:[#allocation2 + $0x48] sm:$0xf] %v1932
  %1938 = vst [vmem:[#allocation2 + $0x50] sm:$0xf] %v1933
  %1939 = vst.msk [vmem:[#allocation2 + $0x58] sm:$0xf] %vm43, %v1931
  %s1940 = scalar_lea.vmem [#allocation1], 1
  %1941 = vst [vmem:[%s1940] ss:$2 sm:$0xff] %v1801
  %s1942 = scalar_lea.vmem [#allocation1], 17
  %1943 = vst [vmem:[%s1942] ss:$2 sm:$0xff] %v1802
  %v1944 = vld.sshfl [vmem:[#allocation1] sm:$0xff pattern:$0x75316420]
  %v1945 = vld.sshfl [vmem:[#allocation1 + $0x8] sm:$0xff pattern:$0x75316420]
  %v1946 = vld.sshfl [vmem:[#allocation1 + $0x10] sm:$0xff pattern:$0x75316420]
  %1947 = vrot.lane.b32.xlu0 %v1944, 91
  %v1948 = vpop.permute.xlu0 %1947
  %1949 = vrot.lane.b32.xlu0 %v1945, 91
  %v1950 = vpop.permute.xlu0 %1949
  %1951 = vrot.lane.b32.xlu0 %v1946, 91
  %v1952 = vpop.permute.xlu0 %1951
  %v1953 = vsel %vm188, %v1948, %v1950
  %v1954 = vsel %vm188, %v1950, %v1952
  %1958 = vst [vmem:[#allocation2 + $0x48] sm:$0xf0] %v1953
  %1959 = vst [vmem:[#allocation2 + $0x50] sm:$0xf0] %v1954
  %1960 = vst.msk [vmem:[#allocation2 + $0x58] sm:$0xf0] %vm66, %v1952
  %1961 = vst [vmem:[#allocation1] ss:$2 sm:$0xff] %v1801
  %s1962 = scalar_lea.vmem [#allocation1], 16
  %1963 = vst [vmem:[%s1962] ss:$2 sm:$0xff] %v1802
  %v1964 = vld.sshfl [vmem:[#allocation1] sm:$0xff pattern:$0x75316420]
  %v1965 = vld.sshfl [vmem:[#allocation1 + $0x8] sm:$0xff pattern:$0x75316420]
  %v1966 = vld.sshfl [vmem:[#allocation1 + $0x10] sm:$0xff pattern:$0x75316420]
  %1967 = vrot.lane.b32.xlu0 %v1964, 90
  %v1968 = vpop.permute.xlu0 %1967
  %1969 = vrot.lane.b32.xlu0 %v1965, 90
  %v1970 = vpop.permute.xlu0 %1969
  %1971 = vrot.lane.b32.xlu0 %v1966, 90
  %v1972 = vpop.permute.xlu0 %1971
  %v1973 = vsel %vm209, %v1968, %v1970
  %v1974 = vsel %vm209, %v1970, %v1972
  %1978 = vst [vmem:[#allocation2 + $0x60] sm:$0xf] %v1973
  %1979 = vst [vmem:[#allocation2 + $0x68] sm:$0xf] %v1974
  %1980 = vst.msk [vmem:[#allocation2 + $0x70] sm:$0xf] %vm43, %v1972
  %v1981 = vld [vmem:[#allocation2] sm:$0xff]
  %v1982 = vld [vmem:[#allocation2 + $0x8] sm:$0xff]
  %v1983 = vld [vmem:[#allocation2 + $0x10] sm:$0xff]
  %v1984 = vld [vmem:[#allocation2 + $0x18] sm:$0xff]
  %v1985 = vld [vmem:[#allocation2 + $0x20] sm:$0xff]
  %v1986 = vld [vmem:[#allocation2 + $0x28] sm:$0xff]
  %v1987 = vld [vmem:[#allocation2 + $0x30] sm:$0xff]
  %v1988 = vld [vmem:[#allocation2 + $0x38] sm:$0xff]
  %v1989 = vld [vmem:[#allocation2 + $0x40] sm:$0xff]
  %v1990 = vld [vmem:[#allocation2 + $0x48] sm:$0xff]
  %v1991 = vld [vmem:[#allocation2 + $0x50] sm:$0xff]
  %v1992 = vld [vmem:[#allocation2 + $0x58] sm:$0xff]
  %v1993 = vld [vmem:[#allocation2 + $0x60] sm:$0xf]
  %v1994 = vld [vmem:[#allocation2 + $0x68] sm:$0xf]
  %v1995 = vld [vmem:[#allocation2 + $0x70] sm:$0xf]
  %v1997 = vsel %vm250, %v1993, 0
  %v2000 = vsel %vm250, %v1994, 0
  %v2003 = vsel %vm250, %v1995, 0
  %2005 = vmatpush.msra.mxu0 0.0
  %2006 = vmatpush.msra.mxu0 0.0
  %2007 = vmatpush.msra.mxu0 0.0
  %2008 = vmatpush.msra.mxu0 0.0
  %2009 = vmatpush.msra.mxu0 0.0
  %2010 = vmatpush.msra.mxu0 0.0
  %2011 = vmatpush.msra.mxu0 0.0
  %2012 = vmatpush.msra.mxu0 0.0
  %2013 = vmatpush.msra.mxu0 0.0
  %2014 = vmatpush.msra.mxu0 0.0
  %2015 = vmatpush.msra.mxu0 0.0
  %2016 = vmatpush.msra.mxu0 %v1997
  %2017 = vmatpush.msra.mxu0 %v1990
  %2018 = vmatpush.msra.mxu0 %v1987
  %2019 = vmatpush.msra.mxu0 %v1984
  %2020 = vmatpush.msra.mxu0 %v1981
  %2021 = vmatmul.f32.gmra.mxu0 %v245
  %v2022 = vpop.f32.mrf.mxu0
  %v2023 = vadd.f32 %v236, %v2022
  %2024 = vmatmul.f32.gmra.mxu0 %v248
  %v2025 = vpop.f32.mrf.mxu0
  %v2026 = vadd.f32 %v241, %v2025
  %2027 = vdwg.mxu0
  %2028 = vmatpush.msra.mxu0 0.0
  %2029 = vmatpush.msra.mxu0 0.0
  %2030 = vmatpush.msra.mxu0 0.0
  %2031 = vmatpush.msra.mxu0 0.0
  %2032 = vmatpush.msra.mxu0 0.0
  %2033 = vmatpush.msra.mxu0 0.0
  %2034 = vmatpush.msra.mxu0 0.0
  %2035 = vmatpush.msra.mxu0 0.0
  %2036 = vmatpush.msra.mxu0 0.0
  %2037 = vmatpush.msra.mxu0 0.0
  %2038 = vmatpush.msra.mxu0 0.0
  %2039 = vmatpush.msra.mxu0 %v2000
  %2040 = vmatpush.msra.mxu0 %v1991
  %2041 = vmatpush.msra.mxu0 %v1988
  %2042 = vmatpush.msra.mxu0 %v1985
  %2043 = vmatpush.msra.mxu0 %v1982
  %2044 = vmatmul.f32.gmra.mxu0 %v245
  %v2045 = vpop.f32.mrf.mxu0
  %v2046 = vadd.f32 %v236, %v2045
  %2047 = vmatmul.f32.gmra.mxu0 %v248
  %v2048 = vpop.f32.mrf.mxu0
  %v2049 = vadd.f32 %v241, %v2048
  %2050 = vdwg.mxu0
  %2051 = vmatpush.msra.mxu0 0.0
  %2052 = vmatpush.msra.mxu0 0.0
  %2053 = vmatpush.msra.mxu0 0.0
  %2054 = vmatpush.msra.mxu0 0.0
  %2055 = vmatpush.msra.mxu0 0.0
  %2056 = vmatpush.msra.mxu0 0.0
  %2057 = vmatpush.msra.mxu0 0.0
  %2058 = vmatpush.msra.mxu0 0.0
  %2059 = vmatpush.msra.mxu0 0.0
  %2060 = vmatpush.msra.mxu0 0.0
  %2061 = vmatpush.msra.mxu0 0.0
  %2062 = vmatpush.msra.mxu0 %v2003
  %2063 = vmatpush.msra.mxu0 %v1992
  %2064 = vmatpush.msra.mxu0 %v1989
  %2065 = vmatpush.msra.mxu0 %v1986
  %2066 = vmatpush.msra.mxu0 %v1983
  %2067 = vmatmul.f32.gmra.mxu0 %v245
  %v2068 = vpop.f32.mrf.mxu0
  %v2069 = vadd.f32 %v236, %v2068
  %2070 = vmatmul.f32.gmra.mxu0 %v248
  %v2071 = vpop.f32.mrf.mxu0
  %v2072 = vadd.f32 %v241, %v2071
  %2073 = vdwg.mxu0
  %v2074 = vmax.f32 %v2023, 0.0
  %v2075 = vmax.f32 %v2046, 0.0
  %v2076 = vmax.f32 %v2069, 0.0
  %v2077 = vmax.f32 %v2026, 0.0
  %v2078 = vmax.f32 %v2049, 0.0
  %v2079 = vmax.f32 %v2072, 0.0
  %v2081 = vsel %vm341, %v2076, 0
  %v2084 = vsel %vm341, %v2079, 0
  %2086 = vmatpush.xpose.msra.mxu0 0.0
  %2087 = vmatpush.xpose.msra.mxu0 0.0
  %2088 = vmatpush.xpose.msra.mxu0 0.0
  %2089 = vmatpush.xpose.msra.mxu0 0.0
  %2090 = vmatpush.xpose.msra.mxu0 0.0
  %2091 = vmatpush.xpose.msra.mxu0 0.0
  %2092 = vmatpush.xpose.msra.mxu0 0.0
  %2093 = vmatpush.xpose.msra.mxu0 0.0
  %2094 = vmatpush.xpose.msra.mxu0 0.0
  %2095 = vmatpush.xpose.msra.mxu0 0.0
  %2096 = vmatpush.xpose.msra.mxu0 0.0
  %2097 = vmatpush.xpose.msra.mxu0 0.0
  %2098 = vmatpush.xpose.msra.mxu0 0.0
  %2099 = vmatpush.xpose.msra.mxu0 0.0
  %2100 = vmatpush.xpose.msra.mxu0 %v2077
  %2101 = vmatpush.xpose.msra.mxu0 %v2074
  %2102 = vmatmul.f32.gmra.mxu0 %v336
  %v2103 = vpop.f32.mrf.mxu0
  %v2104 = vadd.f32 0.0, %v2103
  %2105 = vdwg.mxu0
  %2106 = vmatpush.xpose.msra.mxu0 0.0
  %2107 = vmatpush.xpose.msra.mxu0 0.0
  %2108 = vmatpush.xpose.msra.mxu0 0.0
  %2109 = vmatpush.xpose.msra.mxu0 0.0
  %2110 = vmatpush.xpose.msra.mxu0 0.0
  %2111 = vmatpush.xpose.msra.mxu0 0.0
  %2112 = vmatpush.xpose.msra.mxu0 0.0
  %2113 = vmatpush.xpose.msra.mxu0 0.0
  %2114 = vmatpush.xpose.msra.mxu0 0.0
  %2115 = vmatpush.xpose.msra.mxu0 0.0
  %2116 = vmatpush.xpose.msra.mxu0 0.0
  %2117 = vmatpush.xpose.msra.mxu0 0.0
  %2118 = vmatpush.xpose.msra.mxu0 0.0
  %2119 = vmatpush.xpose.msra.mxu0 0.0
  %2120 = vmatpush.xpose.msra.mxu0 %v2078
  %2121 = vmatpush.xpose.msra.mxu0 %v2075
  %2122 = vmatmul.f32.gmra.mxu0 %v337
  %v2123 = vpop.f32.mrf.mxu0
  %v2124 = vadd.f32 %v2104, %v2123
  %2125 = vdwg.mxu0
  %2126 = vmatpush.xpose.msra.mxu0 0.0
  %2127 = vmatpush.xpose.msra.mxu0 0.0
  %2128 = vmatpush.xpose.msra.mxu0 0.0
  %2129 = vmatpush.xpose.msra.mxu0 0.0
  %2130 = vmatpush.xpose.msra.mxu0 0.0
  %2131 = vmatpush.xpose.msra.mxu0 0.0
  %2132 = vmatpush.xpose.msra.mxu0 0.0
  %2133 = vmatpush.xpose.msra.mxu0 0.0
  %2134 = vmatpush.xpose.msra.mxu0 0.0
  %2135 = vmatpush.xpose.msra.mxu0 0.0
  %2136 = vmatpush.xpose.msra.mxu0 0.0
  %2137 = vmatpush.xpose.msra.mxu0 0.0
  %2138 = vmatpush.xpose.msra.mxu0 0.0
  %2139 = vmatpush.xpose.msra.mxu0 0.0
  %2140 = vmatpush.xpose.msra.mxu0 %v2084
  %2141 = vmatpush.xpose.msra.mxu0 %v2081
  %2142 = vmatmul.f32.gmra.mxu0 %v342
  %v2143 = vpop.f32.mrf.mxu0
  %v2144 = vadd.f32 %v2124, %v2143
  %2145 = vdwg.mxu0
  %2146 = vst.msk [vmem:[#allocation3 + $0x5] sm:$0x1] %vm410, %v2144
  %s2147 = scalar_lea.vmem %s0, 72
  %v2148 = vld [vmem:[%s2147] sm:$0xff]
  %v2149 = vld [vmem:[%s2147 + $0x8] sm:$0xf]
  %2152 = vst [vmem:[#allocation1] ss:$2 sm:$0xff] %v2148
  %s2153 = scalar_lea.vmem [#allocation1], 16
  %2154 = vst [vmem:[%s2153] ss:$2 sm:$0xff] %v2149
  %v2155 = vld.sshfl [vmem:[#allocation1] sm:$0xff pattern:$0x75316420]
  %v2156 = vld.sshfl [vmem:[#allocation1 + $0x8] sm:$0xff pattern:$0x75316420]
  %v2157 = vld.sshfl [vmem:[#allocation1 + $0x10] sm:$0xff pattern:$0x75316420]
  %2161 = vst [vmem:[#allocation2] sm:$0xf] %v2155
  %2162 = vst [vmem:[#allocation2 + $0x8] sm:$0xf] %v2156
  %2163 = vst.msk [vmem:[#allocation2 + $0x10] sm:$0xf] %vm43, %v2157
  %s2164 = scalar_lea.vmem [#allocation1], 1
  %2165 = vst [vmem:[%s2164] ss:$2 sm:$0xff] %v2148
  %s2166 = scalar_lea.vmem [#allocation1], 17
  %2167 = vst [vmem:[%s2166] ss:$2 sm:$0xff] %v2149
  %v2168 = vld.sshfl [vmem:[#allocation1] sm:$0xff pattern:$0x75316420]
  %v2169 = vld.sshfl [vmem:[#allocation1 + $0x8] sm:$0xff pattern:$0x75316420]
  %v2170 = vld.sshfl [vmem:[#allocation1 + $0x10] sm:$0xff pattern:$0x75316420]
  %2171 = vrot.lane.b32.xlu0 %v2168, 127
  %v2172 = vpop.permute.xlu0 %2171
  %2173 = vrot.lane.b32.xlu0 %v2169, 127
  %v2174 = vpop.permute.xlu0 %2173
  %2175 = vrot.lane.b32.xlu0 %v2170, 127
  %v2176 = vpop.permute.xlu0 %2175
  %v2177 = vsel %vm58, %v2172, %v2174
  %v2178 = vsel %vm58, %v2174, %v2176
  %2182 = vst [vmem:[#allocation2] sm:$0xf0] %v2177
  %2183 = vst [vmem:[#allocation2 + $0x8] sm:$0xf0] %v2178
  %2184 = vst.msk [vmem:[#allocation2 + $0x10] sm:$0xf0] %vm66, %v2176
  %2185 = vst [vmem:[#allocation1] ss:$2 sm:$0xff] %v2148
  %s2186 = scalar_lea.vmem [#allocation1], 16
  %2187 = vst [vmem:[%s2186] ss:$2 sm:$0xff] %v2149
  %v2188 = vld.sshfl [vmem:[#allocation1] sm:$0xff pattern:$0x75316420]
  %v2189 = vld.sshfl [vmem:[#allocation1 + $0x8] sm:$0xff pattern:$0x75316420]
  %v2190 = vld.sshfl [vmem:[#allocation1 + $0x10] sm:$0xff pattern:$0x75316420]
  %2191 = vrot.lane.b32.xlu0 %v2188, 126
  %v2192 = vpop.permute.xlu0 %2191
  %2193 = vrot.lane.b32.xlu0 %v2189, 126
  %v2194 = vpop.permute.xlu0 %2193
  %2195 = vrot.lane.b32.xlu0 %v2190, 126
  %v2196 = vpop.permute.xlu0 %2195
  %v2197 = vsel %vm80, %v2192, %v2194
  %v2198 = vsel %vm80, %v2194, %v2196
  %2202 = vst [vmem:[#allocation2 + $0x18] sm:$0xf] %v2197
  %2203 = vst [vmem:[#allocation2 + $0x20] sm:$0xf] %v2198
  %2204 = vst.msk [vmem:[#allocation2 + $0x28] sm:$0xf] %vm43, %v2196
  %s2205 = scalar_lea.vmem [#allocation1], 1
  %2206 = vst [vmem:[%s2205] ss:$2 sm:$0xff] %v2148
  %s2207 = scalar_lea.vmem [#allocation1], 17
  %2208 = vst [vmem:[%s2207] ss:$2 sm:$0xff] %v2149
  %v2209 = vld.sshfl [vmem:[#allocation1] sm:$0xff pattern:$0x75316420]
  %v2210 = vld.sshfl [vmem:[#allocation1 + $0x8] sm:$0xff pattern:$0x75316420]
  %v2211 = vld.sshfl [vmem:[#allocation1 + $0x10] sm:$0xff pattern:$0x75316420]
  %2212 = vrot.lane.b32.xlu0 %v2209, 110
  %v2213 = vpop.permute.xlu0 %2212
  %2214 = vrot.lane.b32.xlu0 %v2210, 110
  %v2215 = vpop.permute.xlu0 %2214
  %2216 = vrot.lane.b32.xlu0 %v2211, 110
  %v2217 = vpop.permute.xlu0 %2216
  %v2218 = vsel %vm102, %v2213, %v2215
  %v2219 = vsel %vm102, %v2215, %v2217
  %2223 = vst [vmem:[#allocation2 + $0x18] sm:$0xf0] %v2218
  %2224 = vst [vmem:[#allocation2 + $0x20] sm:$0xf0] %v2219
  %2225 = vst.msk [vmem:[#allocation2 + $0x28] sm:$0xf0] %vm66, %v2217
  %2226 = vst [vmem:[#allocation1] ss:$2 sm:$0xff] %v2148
  %s2227 = scalar_lea.vmem [#allocation1], 16
  %2228 = vst [vmem:[%s2227] ss:$2 sm:$0xff] %v2149
  %v2229 = vld.sshfl [vmem:[#allocation1] sm:$0xff pattern:$0x75316420]
  %v2230 = vld.sshfl [vmem:[#allocation1 + $0x8] sm:$0xff pattern:$0x75316420]
  %v2231 = vld.sshfl [vmem:[#allocation1 + $0x10] sm:$0xff pattern:$0x75316420]
  %2232 = vrot.lane.b32.xlu0 %v2229, 109
  %v2233 = vpop.permute.xlu0 %2232
  %2234 = vrot.lane.b32.xlu0 %v2230, 109
  %v2235 = vpop.permute.xlu0 %2234
  %2236 = vrot.lane.b32.xlu0 %v2231, 109
  %v2237 = vpop.permute.xlu0 %2236
  %v2238 = vsel %vm123, %v2233, %v2235
  %v2239 = vsel %vm123, %v2235, %v2237
  %2243 = vst [vmem:[#allocation2 + $0x30] sm:$0xf] %v2238
  %2244 = vst [vmem:[#allocation2 + $0x38] sm:$0xf] %v2239
  %2245 = vst.msk [vmem:[#allocation2 + $0x40] sm:$0xf] %vm43, %v2237
  %s2246 = scalar_lea.vmem [#allocation1], 1
  %2247 = vst [vmem:[%s2246] ss:$2 sm:$0xff] %v2148
  %s2248 = scalar_lea.vmem [#allocation1], 17
  %2249 = vst [vmem:[%s2248] ss:$2 sm:$0xff] %v2149
  %v2250 = vld.sshfl [vmem:[#allocation1] sm:$0xff pattern:$0x75316420]
  %v2251 = vld.sshfl [vmem:[#allocation1 + $0x8] sm:$0xff pattern:$0x75316420]
  %v2252 = vld.sshfl [vmem:[#allocation1 + $0x10] sm:$0xff pattern:$0x75316420]
  %2253 = vrot.lane.b32.xlu0 %v2250, 108
  %v2254 = vpop.permute.xlu0 %2253
  %2255 = vrot.lane.b32.xlu0 %v2251, 108
  %v2256 = vpop.permute.xlu0 %2255
  %2257 = vrot.lane.b32.xlu0 %v2252, 108
  %v2258 = vpop.permute.xlu0 %2257
  %v2259 = vsel %vm145, %v2254, %v2256
  %v2260 = vsel %vm145, %v2256, %v2258
  %2264 = vst [vmem:[#allocation2 + $0x30] sm:$0xf0] %v2259
  %2265 = vst [vmem:[#allocation2 + $0x38] sm:$0xf0] %v2260
  %2266 = vst.msk [vmem:[#allocation2 + $0x40] sm:$0xf0] %vm66, %v2258
  %2267 = vst [vmem:[#allocation1] ss:$2 sm:$0xff] %v2148
  %s2268 = scalar_lea.vmem [#allocation1], 16
  %2269 = vst [vmem:[%s2268] ss:$2 sm:$0xff] %v2149
  %v2270 = vld.sshfl [vmem:[#allocation1] sm:$0xff pattern:$0x75316420]
  %v2271 = vld.sshfl [vmem:[#allocation1 + $0x8] sm:$0xff pattern:$0x75316420]
  %v2272 = vld.sshfl [vmem:[#allocation1 + $0x10] sm:$0xff pattern:$0x75316420]
  %2273 = vrot.lane.b32.xlu0 %v2270, 92
  %v2274 = vpop.permute.xlu0 %2273
  %2275 = vrot.lane.b32.xlu0 %v2271, 92
  %v2276 = vpop.permute.xlu0 %2275
  %2277 = vrot.lane.b32.xlu0 %v2272, 92
  %v2278 = vpop.permute.xlu0 %2277
  %v2279 = vsel %vm166, %v2274, %v2276
  %v2280 = vsel %vm166, %v2276, %v2278
  %2284 = vst [vmem:[#allocation2 + $0x48] sm:$0xf] %v2279
  %2285 = vst [vmem:[#allocation2 + $0x50] sm:$0xf] %v2280
  %2286 = vst.msk [vmem:[#allocation2 + $0x58] sm:$0xf] %vm43, %v2278
  %s2287 = scalar_lea.vmem [#allocation1], 1
  %2288 = vst [vmem:[%s2287] ss:$2 sm:$0xff] %v2148
  %s2289 = scalar_lea.vmem [#allocation1], 17
  %2290 = vst [vmem:[%s2289] ss:$2 sm:$0xff] %v2149
  %v2291 = vld.sshfl [vmem:[#allocation1] sm:$0xff pattern:$0x75316420]
  %v2292 = vld.sshfl [vmem:[#allocation1 + $0x8] sm:$0xff pattern:$0x75316420]
  %v2293 = vld.sshfl [vmem:[#allocation1 + $0x10] sm:$0xff pattern:$0x75316420]
  %2294 = vrot.lane.b32.xlu0 %v2291, 91
  %v2295 = vpop.permute.xlu0 %2294
  %2296 = vrot.lane.b32.xlu0 %v2292, 91
  %v2297 = vpop.permute.xlu0 %2296
  %2298 = vrot.lane.b32.xlu0 %v2293, 91
  %v2299 = vpop.permute.xlu0 %2298
  %v2300 = vsel %vm188, %v2295, %v2297
  %v2301 = vsel %vm188, %v2297, %v2299
  %2305 = vst [vmem:[#allocation2 + $0x48] sm:$0xf0] %v2300
  %2306 = vst [vmem:[#allocation2 + $0x50] sm:$0xf0] %v2301
  %2307 = vst.msk [vmem:[#allocation2 + $0x58] sm:$0xf0] %vm66, %v2299
  %2308 = vst [vmem:[#allocation1] ss:$2 sm:$0xff] %v2148
  %s2309 = scalar_lea.vmem [#allocation1], 16
  %2310 = vst [vmem:[%s2309] ss:$2 sm:$0xff] %v2149
  %v2311 = vld.sshfl [vmem:[#allocation1] sm:$0xff pattern:$0x75316420]
  %v2312 = vld.sshfl [vmem:[#allocation1 + $0x8] sm:$0xff pattern:$0x75316420]
  %v2313 = vld.sshfl [vmem:[#allocation1 + $0x10] sm:$0xff pattern:$0x75316420]
  %2314 = vrot.lane.b32.xlu0 %v2311, 90
  %v2315 = vpop.permute.xlu0 %2314
  %2316 = vrot.lane.b32.xlu0 %v2312, 90
  %v2317 = vpop.permute.xlu0 %2316
  %2318 = vrot.lane.b32.xlu0 %v2313, 90
  %v2319 = vpop.permute.xlu0 %2318
  %v2320 = vsel %vm209, %v2315, %v2317
  %v2321 = vsel %vm209, %v2317, %v2319
  %2325 = vst [vmem:[#allocation2 + $0x60] sm:$0xf] %v2320
  %2326 = vst [vmem:[#allocation2 + $0x68] sm:$0xf] %v2321
  %2327 = vst.msk [vmem:[#allocation2 + $0x70] sm:$0xf] %vm43, %v2319
  %v2328 = vld [vmem:[#allocation2] sm:$0xff]
  %v2329 = vld [vmem:[#allocation2 + $0x8] sm:$0xff]
  %v2330 = vld [vmem:[#allocation2 + $0x10] sm:$0xff]
  %v2331 = vld [vmem:[#allocation2 + $0x18] sm:$0xff]
  %v2332 = vld [vmem:[#allocation2 + $0x20] sm:$0xff]
  %v2333 = vld [vmem:[#allocation2 + $0x28] sm:$0xff]
  %v2334 = vld [vmem:[#allocation2 + $0x30] sm:$0xff]
  %v2335 = vld [vmem:[#allocation2 + $0x38] sm:$0xff]
  %v2336 = vld [vmem:[#allocation2 + $0x40] sm:$0xff]
  %v2337 = vld [vmem:[#allocation2 + $0x48] sm:$0xff]
  %v2338 = vld [vmem:[#allocation2 + $0x50] sm:$0xff]
  %v2339 = vld [vmem:[#allocation2 + $0x58] sm:$0xff]
  %v2340 = vld [vmem:[#allocation2 + $0x60] sm:$0xf]
  %v2341 = vld [vmem:[#allocation2 + $0x68] sm:$0xf]
  %v2342 = vld [vmem:[#allocation2 + $0x70] sm:$0xf]
  %v2344 = vsel %vm250, %v2340, 0
  %v2347 = vsel %vm250, %v2341, 0
  %v2350 = vsel %vm250, %v2342, 0
  %2352 = vmatpush.msra.mxu0 0.0
  %2353 = vmatpush.msra.mxu0 0.0
  %2354 = vmatpush.msra.mxu0 0.0
  %2355 = vmatpush.msra.mxu0 0.0
  %2356 = vmatpush.msra.mxu0 0.0
  %2357 = vmatpush.msra.mxu0 0.0
  %2358 = vmatpush.msra.mxu0 0.0
  %2359 = vmatpush.msra.mxu0 0.0
  %2360 = vmatpush.msra.mxu0 0.0
  %2361 = vmatpush.msra.mxu0 0.0
  %2362 = vmatpush.msra.mxu0 0.0
  %2363 = vmatpush.msra.mxu0 %v2344
  %2364 = vmatpush.msra.mxu0 %v2337
  %2365 = vmatpush.msra.mxu0 %v2334
  %2366 = vmatpush.msra.mxu0 %v2331
  %2367 = vmatpush.msra.mxu0 %v2328
  %2368 = vmatmul.f32.gmra.mxu0 %v245
  %v2369 = vpop.f32.mrf.mxu0
  %v2370 = vadd.f32 %v236, %v2369
  %2371 = vmatmul.f32.gmra.mxu0 %v248
  %v2372 = vpop.f32.mrf.mxu0
  %v2373 = vadd.f32 %v241, %v2372
  %2374 = vdwg.mxu0
  %2375 = vmatpush.msra.mxu0 0.0
  %2376 = vmatpush.msra.mxu0 0.0
  %2377 = vmatpush.msra.mxu0 0.0
  %2378 = vmatpush.msra.mxu0 0.0
  %2379 = vmatpush.msra.mxu0 0.0
  %2380 = vmatpush.msra.mxu0 0.0
  %2381 = vmatpush.msra.mxu0 0.0
  %2382 = vmatpush.msra.mxu0 0.0
  %2383 = vmatpush.msra.mxu0 0.0
  %2384 = vmatpush.msra.mxu0 0.0
  %2385 = vmatpush.msra.mxu0 0.0
  %2386 = vmatpush.msra.mxu0 %v2347
  %2387 = vmatpush.msra.mxu0 %v2338
  %2388 = vmatpush.msra.mxu0 %v2335
  %2389 = vmatpush.msra.mxu0 %v2332
  %2390 = vmatpush.msra.mxu0 %v2329
  %2391 = vmatmul.f32.gmra.mxu0 %v245
  %v2392 = vpop.f32.mrf.mxu0
  %v2393 = vadd.f32 %v236, %v2392
  %2394 = vmatmul.f32.gmra.mxu0 %v248
  %v2395 = vpop.f32.mrf.mxu0
  %v2396 = vadd.f32 %v241, %v2395
  %2397 = vdwg.mxu0
  %2398 = vmatpush.msra.mxu0 0.0
  %2399 = vmatpush.msra.mxu0 0.0
  %2400 = vmatpush.msra.mxu0 0.0
  %2401 = vmatpush.msra.mxu0 0.0
  %2402 = vmatpush.msra.mxu0 0.0
  %2403 = vmatpush.msra.mxu0 0.0
  %2404 = vmatpush.msra.mxu0 0.0
  %2405 = vmatpush.msra.mxu0 0.0
  %2406 = vmatpush.msra.mxu0 0.0
  %2407 = vmatpush.msra.mxu0 0.0
  %2408 = vmatpush.msra.mxu0 0.0
  %2409 = vmatpush.msra.mxu0 %v2350
  %2410 = vmatpush.msra.mxu0 %v2339
  %2411 = vmatpush.msra.mxu0 %v2336
  %2412 = vmatpush.msra.mxu0 %v2333
  %2413 = vmatpush.msra.mxu0 %v2330
  %2414 = vmatmul.f32.gmra.mxu0 %v245
  %v2415 = vpop.f32.mrf.mxu0
  %v2416 = vadd.f32 %v236, %v2415
  %2417 = vmatmul.f32.gmra.mxu0 %v248
  %v2418 = vpop.f32.mrf.mxu0
  %v2419 = vadd.f32 %v241, %v2418
  %2420 = vdwg.mxu0
  %v2421 = vmax.f32 %v2370, 0.0
  %v2422 = vmax.f32 %v2393, 0.0
  %v2423 = vmax.f32 %v2416, 0.0
  %v2424 = vmax.f32 %v2373, 0.0
  %v2425 = vmax.f32 %v2396, 0.0
  %v2426 = vmax.f32 %v2419, 0.0
  %v2428 = vsel %vm341, %v2423, 0
  %v2431 = vsel %vm341, %v2426, 0
  %2433 = vmatpush.xpose.msra.mxu0 0.0
  %2434 = vmatpush.xpose.msra.mxu0 0.0
  %2435 = vmatpush.xpose.msra.mxu0 0.0
  %2436 = vmatpush.xpose.msra.mxu0 0.0
  %2437 = vmatpush.xpose.msra.mxu0 0.0
  %2438 = vmatpush.xpose.msra.mxu0 0.0
  %2439 = vmatpush.xpose.msra.mxu0 0.0
  %2440 = vmatpush.xpose.msra.mxu0 0.0
  %2441 = vmatpush.xpose.msra.mxu0 0.0
  %2442 = vmatpush.xpose.msra.mxu0 0.0
  %2443 = vmatpush.xpose.msra.mxu0 0.0
  %2444 = vmatpush.xpose.msra.mxu0 0.0
  %2445 = vmatpush.xpose.msra.mxu0 0.0
  %2446 = vmatpush.xpose.msra.mxu0 0.0
  %2447 = vmatpush.xpose.msra.mxu0 %v2424
  %2448 = vmatpush.xpose.msra.mxu0 %v2421
  %2449 = vmatmul.f32.gmra.mxu0 %v336
  %v2450 = vpop.f32.mrf.mxu0
  %v2451 = vadd.f32 0.0, %v2450
  %2452 = vdwg.mxu0
  %2453 = vmatpush.xpose.msra.mxu0 0.0
  %2454 = vmatpush.xpose.msra.mxu0 0.0
  %2455 = vmatpush.xpose.msra.mxu0 0.0
  %2456 = vmatpush.xpose.msra.mxu0 0.0
  %2457 = vmatpush.xpose.msra.mxu0 0.0
  %2458 = vmatpush.xpose.msra.mxu0 0.0
  %2459 = vmatpush.xpose.msra.mxu0 0.0
  %2460 = vmatpush.xpose.msra.mxu0 0.0
  %2461 = vmatpush.xpose.msra.mxu0 0.0
  %2462 = vmatpush.xpose.msra.mxu0 0.0
  %2463 = vmatpush.xpose.msra.mxu0 0.0
  %2464 = vmatpush.xpose.msra.mxu0 0.0
  %2465 = vmatpush.xpose.msra.mxu0 0.0
  %2466 = vmatpush.xpose.msra.mxu0 0.0
  %2467 = vmatpush.xpose.msra.mxu0 %v2425
  %2468 = vmatpush.xpose.msra.mxu0 %v2422
  %2469 = vmatmul.f32.gmra.mxu0 %v337
  %v2470 = vpop.f32.mrf.mxu0
  %v2471 = vadd.f32 %v2451, %v2470
  %2472 = vdwg.mxu0
  %2473 = vmatpush.xpose.msra.mxu0 0.0
  %2474 = vmatpush.xpose.msra.mxu0 0.0
  %2475 = vmatpush.xpose.msra.mxu0 0.0
  %2476 = vmatpush.xpose.msra.mxu0 0.0
  %2477 = vmatpush.xpose.msra.mxu0 0.0
  %2478 = vmatpush.xpose.msra.mxu0 0.0
  %2479 = vmatpush.xpose.msra.mxu0 0.0
  %2480 = vmatpush.xpose.msra.mxu0 0.0
  %2481 = vmatpush.xpose.msra.mxu0 0.0
  %2482 = vmatpush.xpose.msra.mxu0 0.0
  %2483 = vmatpush.xpose.msra.mxu0 0.0
  %2484 = vmatpush.xpose.msra.mxu0 0.0
  %2485 = vmatpush.xpose.msra.mxu0 0.0
  %2486 = vmatpush.xpose.msra.mxu0 0.0
  %2487 = vmatpush.xpose.msra.mxu0 %v2431
  %2488 = vmatpush.xpose.msra.mxu0 %v2428
  %2489 = vmatmul.f32.gmra.mxu0 %v342
  %v2490 = vpop.f32.mrf.mxu0
  %v2491 = vadd.f32 %v2471, %v2490
  %2492 = vdwg.mxu0
  %2493 = vst.msk [vmem:[#allocation3 + $0x6] sm:$0x1] %vm410, %v2491
  %s2494 = scalar_lea.vmem %s0, 84
  %v2495 = vld [vmem:[%s2494] sm:$0xff]
  %v2496 = vld [vmem:[%s2494 + $0x8] sm:$0xf]
  %2499 = vst [vmem:[#allocation1] ss:$2 sm:$0xff] %v2495
  %s2500 = scalar_lea.vmem [#allocation1], 16
  %2501 = vst [vmem:[%s2500] ss:$2 sm:$0xff] %v2496
  %v2502 = vld.sshfl [vmem:[#allocation1] sm:$0xff pattern:$0x75316420]
  %v2503 = vld.sshfl [vmem:[#allocation1 + $0x8] sm:$0xff pattern:$0x75316420]
  %v2504 = vld.sshfl [vmem:[#allocation1 + $0x10] sm:$0xff pattern:$0x75316420]
  %2508 = vst [vmem:[#allocation2] sm:$0xf] %v2502
  %2509 = vst [vmem:[#allocation2 + $0x8] sm:$0xf] %v2503
  %2510 = vst.msk [vmem:[#allocation2 + $0x10] sm:$0xf] %vm43, %v2504
  %s2511 = scalar_lea.vmem [#allocation1], 1
  %2512 = vst [vmem:[%s2511] ss:$2 sm:$0xff] %v2495
  %s2513 = scalar_lea.vmem [#allocation1], 17
  %2514 = vst [vmem:[%s2513] ss:$2 sm:$0xff] %v2496
  %v2515 = vld.sshfl [vmem:[#allocation1] sm:$0xff pattern:$0x75316420]
  %v2516 = vld.sshfl [vmem:[#allocation1 + $0x8] sm:$0xff pattern:$0x75316420]
  %v2517 = vld.sshfl [vmem:[#allocation1 + $0x10] sm:$0xff pattern:$0x75316420]
  %2518 = vrot.lane.b32.xlu0 %v2515, 127
  %v2519 = vpop.permute.xlu0 %2518
  %2520 = vrot.lane.b32.xlu0 %v2516, 127
  %v2521 = vpop.permute.xlu0 %2520
  %2522 = vrot.lane.b32.xlu0 %v2517, 127
  %v2523 = vpop.permute.xlu0 %2522
  %v2524 = vsel %vm58, %v2519, %v2521
  %v2525 = vsel %vm58, %v2521, %v2523
  %2529 = vst [vmem:[#allocation2] sm:$0xf0] %v2524
  %2530 = vst [vmem:[#allocation2 + $0x8] sm:$0xf0] %v2525
  %2531 = vst.msk [vmem:[#allocation2 + $0x10] sm:$0xf0] %vm66, %v2523
  %2532 = vst [vmem:[#allocation1] ss:$2 sm:$0xff] %v2495
  %s2533 = scalar_lea.vmem [#allocation1], 16
  %2534 = vst [vmem:[%s2533] ss:$2 sm:$0xff] %v2496
  %v2535 = vld.sshfl [vmem:[#allocation1] sm:$0xff pattern:$0x75316420]
  %v2536 = vld.sshfl [vmem:[#allocation1 + $0x8] sm:$0xff pattern:$0x75316420]
  %v2537 = vld.sshfl [vmem:[#allocation1 + $0x10] sm:$0xff pattern:$0x75316420]
  %2538 = vrot.lane.b32.xlu0 %v2535, 126
  %v2539 = vpop.permute.xlu0 %2538
  %2540 = vrot.lane.b32.xlu0 %v2536, 126
  %v2541 = vpop.permute.xlu0 %2540
  %2542 = vrot.lane.b32.xlu0 %v2537, 126
  %v2543 = vpop.permute.xlu0 %2542
  %v2544 = vsel %vm80, %v2539, %v2541
  %v2545 = vsel %vm80, %v2541, %v2543
  %2549 = vst [vmem:[#allocation2 + $0x18] sm:$0xf] %v2544
  %2550 = vst [vmem:[#allocation2 + $0x20] sm:$0xf] %v2545
  %2551 = vst.msk [vmem:[#allocation2 + $0x28] sm:$0xf] %vm43, %v2543
  %s2552 = scalar_lea.vmem [#allocation1], 1
  %2553 = vst [vmem:[%s2552] ss:$2 sm:$0xff] %v2495
  %s2554 = scalar_lea.vmem [#allocation1], 17
  %2555 = vst [vmem:[%s2554] ss:$2 sm:$0xff] %v2496
  %v2556 = vld.sshfl [vmem:[#allocation1] sm:$0xff pattern:$0x75316420]
  %v2557 = vld.sshfl [vmem:[#allocation1 + $0x8] sm:$0xff pattern:$0x75316420]
  %v2558 = vld.sshfl [vmem:[#allocation1 + $0x10] sm:$0xff pattern:$0x75316420]
  %2559 = vrot.lane.b32.xlu0 %v2556, 110
  %v2560 = vpop.permute.xlu0 %2559
  %2561 = vrot.lane.b32.xlu0 %v2557, 110
  %v2562 = vpop.permute.xlu0 %2561
  %2563 = vrot.lane.b32.xlu0 %v2558, 110
  %v2564 = vpop.permute.xlu0 %2563
  %v2565 = vsel %vm102, %v2560, %v2562
  %v2566 = vsel %vm102, %v2562, %v2564
  %2570 = vst [vmem:[#allocation2 + $0x18] sm:$0xf0] %v2565
  %2571 = vst [vmem:[#allocation2 + $0x20] sm:$0xf0] %v2566
  %2572 = vst.msk [vmem:[#allocation2 + $0x28] sm:$0xf0] %vm66, %v2564
  %2573 = vst [vmem:[#allocation1] ss:$2 sm:$0xff] %v2495
  %s2574 = scalar_lea.vmem [#allocation1], 16
  %2575 = vst [vmem:[%s2574] ss:$2 sm:$0xff] %v2496
  %v2576 = vld.sshfl [vmem:[#allocation1] sm:$0xff pattern:$0x75316420]
  %v2577 = vld.sshfl [vmem:[#allocation1 + $0x8] sm:$0xff pattern:$0x75316420]
  %v2578 = vld.sshfl [vmem:[#allocation1 + $0x10] sm:$0xff pattern:$0x75316420]
  %2579 = vrot.lane.b32.xlu0 %v2576, 109
  %v2580 = vpop.permute.xlu0 %2579
  %2581 = vrot.lane.b32.xlu0 %v2577, 109
  %v2582 = vpop.permute.xlu0 %2581
  %2583 = vrot.lane.b32.xlu0 %v2578, 109
  %v2584 = vpop.permute.xlu0 %2583
  %v2585 = vsel %vm123, %v2580, %v2582
  %v2586 = vsel %vm123, %v2582, %v2584
  %2590 = vst [vmem:[#allocation2 + $0x30] sm:$0xf] %v2585
  %2591 = vst [vmem:[#allocation2 + $0x38] sm:$0xf] %v2586
  %2592 = vst.msk [vmem:[#allocation2 + $0x40] sm:$0xf] %vm43, %v2584
  %s2593 = scalar_lea.vmem [#allocation1], 1
  %2594 = vst [vmem:[%s2593] ss:$2 sm:$0xff] %v2495
  %s2595 = scalar_lea.vmem [#allocation1], 17
  %2596 = vst [vmem:[%s2595] ss:$2 sm:$0xff] %v2496
  %v2597 = vld.sshfl [vmem:[#allocation1] sm:$0xff pattern:$0x75316420]
  %v2598 = vld.sshfl [vmem:[#allocation1 + $0x8] sm:$0xff pattern:$0x75316420]
  %v2599 = vld.sshfl [vmem:[#allocation1 + $0x10] sm:$0xff pattern:$0x75316420]
  %2600 = vrot.lane.b32.xlu0 %v2597, 108
  %v2601 = vpop.permute.xlu0 %2600
  %2602 = vrot.lane.b32.xlu0 %v2598, 108
  %v2603 = vpop.permute.xlu0 %2602
  %2604 = vrot.lane.b32.xlu0 %v2599, 108
  %v2605 = vpop.permute.xlu0 %2604
  %v2606 = vsel %vm145, %v2601, %v2603
  %v2607 = vsel %vm145, %v2603, %v2605
  %2611 = vst [vmem:[#allocation2 + $0x30] sm:$0xf0] %v2606
  %2612 = vst [vmem:[#allocation2 + $0x38] sm:$0xf0] %v2607
  %2613 = vst.msk [vmem:[#allocation2 + $0x40] sm:$0xf0] %vm66, %v2605
  %2614 = vst [vmem:[#allocation1] ss:$2 sm:$0xff] %v2495
  %s2615 = scalar_lea.vmem [#allocation1], 16
  %2616 = vst [vmem:[%s2615] ss:$2 sm:$0xff] %v2496
  %v2617 = vld.sshfl [vmem:[#allocation1] sm:$0xff pattern:$0x75316420]
  %v2618 = vld.sshfl [vmem:[#allocation1 + $0x8] sm:$0xff pattern:$0x75316420]
  %v2619 = vld.sshfl [vmem:[#allocation1 + $0x10] sm:$0xff pattern:$0x75316420]
  %2620 = vrot.lane.b32.xlu0 %v2617, 92
  %v2621 = vpop.permute.xlu0 %2620
  %2622 = vrot.lane.b32.xlu0 %v2618, 92
  %v2623 = vpop.permute.xlu0 %2622
  %2624 = vrot.lane.b32.xlu0 %v2619, 92
  %v2625 = vpop.permute.xlu0 %2624
  %v2626 = vsel %vm166, %v2621, %v2623
  %v2627 = vsel %vm166, %v2623, %v2625
  %2631 = vst [vmem:[#allocation2 + $0x48] sm:$0xf] %v2626
  %2632 = vst [vmem:[#allocation2 + $0x50] sm:$0xf] %v2627
  %2633 = vst.msk [vmem:[#allocation2 + $0x58] sm:$0xf] %vm43, %v2625
  %s2634 = scalar_lea.vmem [#allocation1], 1
  %2635 = vst [vmem:[%s2634] ss:$2 sm:$0xff] %v2495
  %s2636 = scalar_lea.vmem [#allocation1], 17
  %2637 = vst [vmem:[%s2636] ss:$2 sm:$0xff] %v2496
  %v2638 = vld.sshfl [vmem:[#allocation1] sm:$0xff pattern:$0x75316420]
  %v2639 = vld.sshfl [vmem:[#allocation1 + $0x8] sm:$0xff pattern:$0x75316420]
  %v2640 = vld.sshfl [vmem:[#allocation1 + $0x10] sm:$0xff pattern:$0x75316420]
  %2641 = vrot.lane.b32.xlu0 %v2638, 91
  %v2642 = vpop.permute.xlu0 %2641
  %2643 = vrot.lane.b32.xlu0 %v2639, 91
  %v2644 = vpop.permute.xlu0 %2643
  %2645 = vrot.lane.b32.xlu0 %v2640, 91
  %v2646 = vpop.permute.xlu0 %2645
  %v2647 = vsel %vm188, %v2642, %v2644
  %v2648 = vsel %vm188, %v2644, %v2646
  %2652 = vst [vmem:[#allocation2 + $0x48] sm:$0xf0] %v2647
  %2653 = vst [vmem:[#allocation2 + $0x50] sm:$0xf0] %v2648
  %2654 = vst.msk [vmem:[#allocation2 + $0x58] sm:$0xf0] %vm66, %v2646
  %2655 = vst [vmem:[#allocation1] ss:$2 sm:$0xff] %v2495
  %s2656 = scalar_lea.vmem [#allocation1], 16
  %2657 = vst [vmem:[%s2656] ss:$2 sm:$0xff] %v2496
  %v2658 = vld.sshfl [vmem:[#allocation1] sm:$0xff pattern:$0x75316420]
  %v2659 = vld.sshfl [vmem:[#allocation1 + $0x8] sm:$0xff pattern:$0x75316420]
  %v2660 = vld.sshfl [vmem:[#allocation1 + $0x10] sm:$0xff pattern:$0x75316420]
  %2661 = vrot.lane.b32.xlu0 %v2658, 90
  %v2662 = vpop.permute.xlu0 %2661
  %2663 = vrot.lane.b32.xlu0 %v2659, 90
  %v2664 = vpop.permute.xlu0 %2663
  %2665 = vrot.lane.b32.xlu0 %v2660, 90
  %v2666 = vpop.permute.xlu0 %2665
  %v2667 = vsel %vm209, %v2662, %v2664
  %v2668 = vsel %vm209, %v2664, %v2666
  %2672 = vst [vmem:[#allocation2 + $0x60] sm:$0xf] %v2667
  %2673 = vst [vmem:[#allocation2 + $0x68] sm:$0xf] %v2668
  %2674 = vst.msk [vmem:[#allocation2 + $0x70] sm:$0xf] %vm43, %v2666
  %v2675 = vld [vmem:[#allocation2] sm:$0xff]
  %v2676 = vld [vmem:[#allocation2 + $0x8] sm:$0xff]
  %v2677 = vld [vmem:[#allocation2 + $0x10] sm:$0xff]
  %v2678 = vld [vmem:[#allocation2 + $0x18] sm:$0xff]
  %v2679 = vld [vmem:[#allocation2 + $0x20] sm:$0xff]
  %v2680 = vld [vmem:[#allocation2 + $0x28] sm:$0xff]
  %v2681 = vld [vmem:[#allocation2 + $0x30] sm:$0xff]
  %v2682 = vld [vmem:[#allocation2 + $0x38] sm:$0xff]
  %v2683 = vld [vmem:[#allocation2 + $0x40] sm:$0xff]
  %v2684 = vld [vmem:[#allocation2 + $0x48] sm:$0xff]
  %v2685 = vld [vmem:[#allocation2 + $0x50] sm:$0xff]
  %v2686 = vld [vmem:[#allocation2 + $0x58] sm:$0xff]
  %v2687 = vld [vmem:[#allocation2 + $0x60] sm:$0xf]
  %v2688 = vld [vmem:[#allocation2 + $0x68] sm:$0xf]
  %v2689 = vld [vmem:[#allocation2 + $0x70] sm:$0xf]
  %v2691 = vsel %vm250, %v2687, 0
  %v2694 = vsel %vm250, %v2688, 0
  %v2697 = vsel %vm250, %v2689, 0
  %2699 = vmatpush.msra.mxu0 0.0
  %2700 = vmatpush.msra.mxu0 0.0
  %2701 = vmatpush.msra.mxu0 0.0
  %2702 = vmatpush.msra.mxu0 0.0
  %2703 = vmatpush.msra.mxu0 0.0
  %2704 = vmatpush.msra.mxu0 0.0
  %2705 = vmatpush.msra.mxu0 0.0
  %2706 = vmatpush.msra.mxu0 0.0
  %2707 = vmatpush.msra.mxu0 0.0
  %2708 = vmatpush.msra.mxu0 0.0
  %2709 = vmatpush.msra.mxu0 0.0
  %2710 = vmatpush.msra.mxu0 %v2691
  %2711 = vmatpush.msra.mxu0 %v2684
  %2712 = vmatpush.msra.mxu0 %v2681
  %2713 = vmatpush.msra.mxu0 %v2678
  %2714 = vmatpush.msra.mxu0 %v2675
  %2715 = vmatmul.f32.gmra.mxu0 %v245
  %v2716 = vpop.f32.mrf.mxu0
  %v2717 = vadd.f32 %v236, %v2716
  %2718 = vmatmul.f32.gmra.mxu0 %v248
  %v2719 = vpop.f32.mrf.mxu0
  %v2720 = vadd.f32 %v241, %v2719
  %2721 = vdwg.mxu0
  %2722 = vmatpush.msra.mxu0 0.0
  %2723 = vmatpush.msra.mxu0 0.0
  %2724 = vmatpush.msra.mxu0 0.0
  %2725 = vmatpush.msra.mxu0 0.0
  %2726 = vmatpush.msra.mxu0 0.0
  %2727 = vmatpush.msra.mxu0 0.0
  %2728 = vmatpush.msra.mxu0 0.0
  %2729 = vmatpush.msra.mxu0 0.0
  %2730 = vmatpush.msra.mxu0 0.0
  %2731 = vmatpush.msra.mxu0 0.0
  %2732 = vmatpush.msra.mxu0 0.0
  %2733 = vmatpush.msra.mxu0 %v2694
  %2734 = vmatpush.msra.mxu0 %v2685
  %2735 = vmatpush.msra.mxu0 %v2682
  %2736 = vmatpush.msra.mxu0 %v2679
  %2737 = vmatpush.msra.mxu0 %v2676
  %2738 = vmatmul.f32.gmra.mxu0 %v245
  %v2739 = vpop.f32.mrf.mxu0
  %v2740 = vadd.f32 %v236, %v2739
  %2741 = vmatmul.f32.gmra.mxu0 %v248
  %v2742 = vpop.f32.mrf.mxu0
  %v2743 = vadd.f32 %v241, %v2742
  %2744 = vdwg.mxu0
  %2745 = vmatpush.msra.mxu0 0.0
  %2746 = vmatpush.msra.mxu0 0.0
  %2747 = vmatpush.msra.mxu0 0.0
  %2748 = vmatpush.msra.mxu0 0.0
  %2749 = vmatpush.msra.mxu0 0.0
  %2750 = vmatpush.msra.mxu0 0.0
  %2751 = vmatpush.msra.mxu0 0.0
  %2752 = vmatpush.msra.mxu0 0.0
  %2753 = vmatpush.msra.mxu0 0.0
  %2754 = vmatpush.msra.mxu0 0.0
  %2755 = vmatpush.msra.mxu0 0.0
  %2756 = vmatpush.msra.mxu0 %v2697
  %2757 = vmatpush.msra.mxu0 %v2686
  %2758 = vmatpush.msra.mxu0 %v2683
  %2759 = vmatpush.msra.mxu0 %v2680
  %2760 = vmatpush.msra.mxu0 %v2677
  %2761 = vmatmul.f32.gmra.mxu0 %v245
  %v2762 = vpop.f32.mrf.mxu0
  %v2763 = vadd.f32 %v236, %v2762
  %2764 = vmatmul.f32.gmra.mxu0 %v248
  %v2765 = vpop.f32.mrf.mxu0
  %v2766 = vadd.f32 %v241, %v2765
  %2767 = vdwg.mxu0
  %v2768 = vmax.f32 %v2717, 0.0
  %v2769 = vmax.f32 %v2740, 0.0
  %v2770 = vmax.f32 %v2763, 0.0
  %v2771 = vmax.f32 %v2720, 0.0
  %v2772 = vmax.f32 %v2743, 0.0
  %v2773 = vmax.f32 %v2766, 0.0
  %v2775 = vsel %vm341, %v2770, 0
  %v2778 = vsel %vm341, %v2773, 0
  %2780 = vmatpush.xpose.msra.mxu0 0.0
  %2781 = vmatpush.xpose.msra.mxu0 0.0
  %2782 = vmatpush.xpose.msra.mxu0 0.0
  %2783 = vmatpush.xpose.msra.mxu0 0.0
  %2784 = vmatpush.xpose.msra.mxu0 0.0
  %2785 = vmatpush.xpose.msra.mxu0 0.0
  %2786 = vmatpush.xpose.msra.mxu0 0.0
  %2787 = vmatpush.xpose.msra.mxu0 0.0
  %2788 = vmatpush.xpose.msra.mxu0 0.0
  %2789 = vmatpush.xpose.msra.mxu0 0.0
  %2790 = vmatpush.xpose.msra.mxu0 0.0
  %2791 = vmatpush.xpose.msra.mxu0 0.0
  %2792 = vmatpush.xpose.msra.mxu0 0.0
  %2793 = vmatpush.xpose.msra.mxu0 0.0
  %2794 = vmatpush.xpose.msra.mxu0 %v2771
  %2795 = vmatpush.xpose.msra.mxu0 %v2768
  %2796 = vmatmul.f32.gmra.mxu0 %v336
  %v2797 = vpop.f32.mrf.mxu0
  %v2798 = vadd.f32 0.0, %v2797
  %2799 = vdwg.mxu0
  %2800 = vmatpush.xpose.msra.mxu0 0.0
  %2801 = vmatpush.xpose.msra.mxu0 0.0
  %2802 = vmatpush.xpose.msra.mxu0 0.0
  %2803 = vmatpush.xpose.msra.mxu0 0.0
  %2804 = vmatpush.xpose.msra.mxu0 0.0
  %2805 = vmatpush.xpose.msra.mxu0 0.0
  %2806 = vmatpush.xpose.msra.mxu0 0.0
  %2807 = vmatpush.xpose.msra.mxu0 0.0
  %2808 = vmatpush.xpose.msra.mxu0 0.0
  %2809 = vmatpush.xpose.msra.mxu0 0.0
  %2810 = vmatpush.xpose.msra.mxu0 0.0
  %2811 = vmatpush.xpose.msra.mxu0 0.0
  %2812 = vmatpush.xpose.msra.mxu0 0.0
  %2813 = vmatpush.xpose.msra.mxu0 0.0
  %2814 = vmatpush.xpose.msra.mxu0 %v2772
  %2815 = vmatpush.xpose.msra.mxu0 %v2769
  %2816 = vmatmul.f32.gmra.mxu0 %v337
  %v2817 = vpop.f32.mrf.mxu0
  %v2818 = vadd.f32 %v2798, %v2817
  %2819 = vdwg.mxu0
  %2820 = vmatpush.xpose.msra.mxu0 0.0
  %2821 = vmatpush.xpose.msra.mxu0 0.0
  %2822 = vmatpush.xpose.msra.mxu0 0.0
  %2823 = vmatpush.xpose.msra.mxu0 0.0
  %2824 = vmatpush.xpose.msra.mxu0 0.0
  %2825 = vmatpush.xpose.msra.mxu0 0.0
  %2826 = vmatpush.xpose.msra.mxu0 0.0
  %2827 = vmatpush.xpose.msra.mxu0 0.0
  %2828 = vmatpush.xpose.msra.mxu0 0.0
  %2829 = vmatpush.xpose.msra.mxu0 0.0
  %2830 = vmatpush.xpose.msra.mxu0 0.0
  %2831 = vmatpush.xpose.msra.mxu0 0.0
  %2832 = vmatpush.xpose.msra.mxu0 0.0
  %2833 = vmatpush.xpose.msra.mxu0 0.0
  %2834 = vmatpush.xpose.msra.mxu0 %v2778
  %2835 = vmatpush.xpose.msra.mxu0 %v2775
  %2836 = vmatmul.f32.gmra.mxu0 %v342
  %v2837 = vpop.f32.mrf.mxu0
  %v2838 = vadd.f32 %v2818, %v2837
  %2839 = vdwg.mxu0
  %2840 = vst.msk [vmem:[#allocation3 + $0x7] sm:$0x1] %vm410, %v2838
  %v2841 = vld [vmem:[#allocation3] sm:$0xff]
  %v2842 = vld [vmem:[%s4] sm:$0xff]
  %v2843 = vld [vmem:[%s4 + $0x8] sm:$0xff]
  %v2844 = vld [vmem:[%s5] sm:$0x1]
  %v2846 = vperm.slane %v2844, 0
  %vm2848 = vcmask 130048
  %v2850 = vsel %vm2848, %v2841, 0
  %2852 = vmatpush.msra.mxu0 0.0
  %2853 = vmatpush.msra.mxu0 0.0
  %2854 = vmatpush.msra.mxu0 0.0
  %2855 = vmatpush.msra.mxu0 0.0
  %2856 = vmatpush.msra.mxu0 0.0
  %2857 = vmatpush.msra.mxu0 0.0
  %2858 = vmatpush.msra.mxu0 0.0
  %2859 = vmatpush.msra.mxu0 0.0
  %2860 = vmatpush.msra.mxu0 0.0
  %2861 = vmatpush.msra.mxu0 0.0
  %2862 = vmatpush.msra.mxu0 0.0
  %2863 = vmatpush.msra.mxu0 0.0
  %2864 = vmatpush.msra.mxu0 0.0
  %2865 = vmatpush.msra.mxu0 0.0
  %2866 = vmatpush.msra.mxu0 %v2843
  %2867 = vmatpush.msra.mxu0 %v2842
  %2868 = vmatmul.f32.gmra.mxu0 %v2850
  %v2869 = vpop.f32.mrf.mxu0
  %v2870 = vadd.f32 %v2846, %v2869
  %2871 = vdwg.mxu0
  %2872 = vst [vmem:[%s6] sm:$0xff] %v2870
  // Predicated region
  $region26: #{backbone_forward.1} parent=0 // pred_check
    _
  $region27: #{backbone_forward.1} parent=0 // pred_check_branch
    %2874 = sbr.rel (0) target = $region29
  $region28: #{backbone_forward.1} parent=0 // pred_region
    _
  $region29: #{backbone_forward.1} parent=0 // pred_fallthru
    _
  // Predicated region
  $region30: #{backbone_forward.1} parent=0 // pred_check
    _
  $region31: #{backbone_forward.1} parent=0 // pred_check_branch
    %2876 = sbr.rel (0) target = $region33
  $region32: #{backbone_forward.1} parent=0 // pred_region
    _
  $region33: #{backbone_forward.1} parent=0 // pred_fallthru
    _

</llo_original>
